<compile_context>
chip_gen: v6e
topology: v6e:2x2x1
jax: 0.10.0
libtpu: 0.0.40
codegen_flags: <defaults>
</compile_context>

<pallas_src>
import math
import jax
import jax.numpy as jnp
from jax.experimental import pallas as pl
from jax.experimental.pallas import tpu as pltpu

# ----------------------------- model dims (small, synthetic) ----------------
B, S, H = 2, 8, 32          # batch, sequence, hidden
NUM_HEADS = 4
HEAD_DIM = H // NUM_HEADS
INTER = 64                  # FFN intermediate size
VOCAB = 50
MAX_POS = 32
PAD_ID = 1                  # RoBERTa padding_idx
NUM_LAYERS = 2
NUM_TASKS = 2               # len(model_list)
NUM_LABELS = 3
LN_EPS = 1e-5


def _vmem_spec():
    # Everything is tiny -> keep every operand fully resident in VMEM.
    return pl.BlockSpec(memory_space=pltpu.MemorySpace.VMEM)


def _layernorm(x, g, b):
    mu = jnp.mean(x, axis=-1, keepdims=True)
    var = jnp.mean((x - mu) ** 2, axis=-1, keepdims=True)
    return (x - mu) * jax.lax.rsqrt(var + LN_EPS) * g + b


# ----------------------------- single fused forward kernel ------------------
def _fused_forward_kernel(emb_ref, mask_ref, eg_ref, eb_ref,
                          wqkv_ref, bqkv_ref, wo_ref, bo_ref,
                          l1g_ref, l1b_ref, w1_ref, b1_ref,
                          w2_ref, b2_ref, l2g_ref, l2b_ref,
                          wd_ref, bd_ref, wp_ref, bp_ref,
                          out_ref):
    # Embedding LayerNorm.
    x = _layernorm(emb_ref[...], eg_ref[...], eb_ref[...])      # (B, S, H)
    add_mask = mask_ref[...]                                    # (NH*B, 1, S)

    # Encoder layers (Python loop -> unrolled at trace time; weights stacked
    # with a leading NUM_LAYERS dim, indexed statically).
    for l in range(NUM_LAYERS):
        # --- fused Q/K/V projection (1/sqrt(head_dim) folded into Wq/bq) ---
        qkv = jnp.einsum('bsh,hd->bsd', x, wqkv_ref[l],
                         preferred_element_type=jnp.float32) + bqkv_ref[l]

        # Split into per-(head, batch) Q/K/V of shape (NUM_HEADS*B, S, HD);
        # batch index n = h * B + b (matches add_mask layout).
        def split(off):
            return jnp.concatenate(
                [qkv[:, :, off + h * HEAD_DIM: off + (h + 1) * HEAD_DIM]
                 for h in range(NUM_HEADS)], axis=0)
        qh, kh, vh = split(0), split(H), split(2 * H)

        s = jnp.einsum('bqd,bkd->bqk', qh, kh,
                       preferred_element_type=jnp.float32) + add_mask
        m = jnp.max(s, axis=-1, keepdims=True)
        p = jnp.exp(s - m)
        p = p * pl.reciprocal(jnp.sum(p, axis=-1, keepdims=True), approx=True)
        ctx = jnp.einsum('bqk,bkd->bqd', p, vh,
                         preferred_element_type=jnp.float32)    # (NH*B, S, HD)

        # Merge heads back onto the lane axis -> (B, S, H), standard layout,
        # then a single (H, H) output projection.
        ctx_m = jnp.concatenate(
            [ctx[h * B:(h + 1) * B] for h in range(NUM_HEADS)], axis=-1)
        attn = jnp.einsum('bsh,hd->bsd', ctx_m, wo_ref[l],
                          preferred_element_type=jnp.float32) + bo_ref[l]

        # Post-LN (BERT/RoBERTa style): LN(residual + sublayer)
        h1 = _layernorm(x + attn, l1g_ref[l], l1b_ref[l])

        ff = jnp.einsum('bsh,hi->bsi', h1, w1_ref[l],
                        preferred_element_type=jnp.float32) + b1_ref[l]
        # TODO(synk): HF RoBERTa uses exact erf-GELU; tanh-approx GELU used
        # here for guaranteed Mosaic lowering (difference < 1e-3).
        ff = jax.nn.gelu(ff, approximate=True)
        ff = jnp.einsum('bsi,ih->bsh', ff, w2_ref[l],
                        preferred_element_type=jnp.float32) + b2_ref[l]

        x = _layernorm(h1 + ff, l2g_ref[l], l2b_ref[l])

    # --- all classification heads, batched over tasks ---------------------
    cls = x[:, 0, :]                                            # (B, H)
    cls_t = jnp.broadcast_to(cls[None], (NUM_TASKS, B, H))
    hdn = jnp.tanh(jnp.einsum('tbh,thd->tbd', cls_t, wd_ref[...],
                              preferred_element_type=jnp.float32)
                   + bd_ref[...])
    out_ref[...] = (jnp.einsum('tbd,tdl->tbl', hdn, wp_ref[...],
                               preferred_element_type=jnp.float32)
                    + bp_ref[...])


# ----------------------------- deterministic parameter init -----------------
def init_params(key):
    def nrm(k, shape):
        return (0.02 * jax.random.normal(k, shape)).astype(jnp.float32)

    keys = iter(jax.random.split(key, 64))
    params = {
        'word_emb': nrm(next(keys), (VOCAB, H)),
        'pos_emb': nrm(next(keys), (MAX_POS, H)),
        'type_emb': nrm(next(keys), (1, H)),
        'emb_ln_g': jnp.ones((1, H), jnp.float32),
        'emb_ln_b': jnp.zeros((1, H), jnp.float32),
        'layers': [],
        'heads': [],
    }
    for _ in range(NUM_LAYERS):
        params['layers'].append({
            'wq': nrm(next(keys), (H, H)), 'bq': jnp.zeros((1, H), jnp.float32),
            'wk': nrm(next(keys), (H, H)), 'bk': jnp.zeros((1, H), jnp.float32),
            'wv': nrm(next(keys), (H, H)), 'bv': jnp.zeros((1, H), jnp.float32),
            'wo': nrm(next(keys), (H, H)), 'bo': jnp.zeros((1, H), jnp.float32),
            'ln1_g': jnp.ones((1, H), jnp.float32),
            'ln1_b': jnp.zeros((1, H), jnp.float32),
            'w1': nrm(next(keys), (H, INTER)),
            'b1': jnp.zeros((1, INTER), jnp.float32),
            'w2': nrm(next(keys), (INTER, H)),
            'b2': jnp.zeros((1, H), jnp.float32),
            'ln2_g': jnp.ones((1, H), jnp.float32),
            'ln2_b': jnp.zeros((1, H), jnp.float32),
        })
    for _ in range(NUM_TASKS):
        params['heads'].append({
            'wd': nrm(next(keys), (H, H)),
            'bd': jnp.zeros((1, H), jnp.float32),
            'wp': nrm(next(keys), (H, NUM_LABELS)),
            'bp': jnp.zeros((1, NUM_LABELS), jnp.float32),
        })
    return params


# ----------------------------- weight stacking / folding --------------------
def _prepare_stacked_params(params):
    """Stack per-layer / per-task weights, fold the attention scale into Wq/bq,
    and fuse Wq/Wk/Wv into one (H, 3H) projection per layer."""
    scale = 1.0 / math.sqrt(HEAD_DIM)
    layers = params['layers']

    def stack(fn):
        return jnp.stack([fn(lp) for lp in layers], axis=0)

    wqkv = stack(lambda lp: jnp.concatenate(
        [lp['wq'] * scale, lp['wk'], lp['wv']], axis=-1))        # (L, H, 3H)
    bqkv = stack(lambda lp: jnp.concatenate(
        [lp['bq'] * scale, lp['bk'], lp['bv']], axis=-1))        # (L, 1, 3H)

    layer_args = (
        wqkv, bqkv,
        stack(lambda lp: lp['wo']), stack(lambda lp: lp['bo']),
        stack(lambda lp: lp['ln1_g']), stack(lambda lp: lp['ln1_b']),
        stack(lambda lp: lp['w1']), stack(lambda lp: lp['b1']),
        stack(lambda lp: lp['w2']), stack(lambda lp: lp['b2']),
        stack(lambda lp: lp['ln2_g']), stack(lambda lp: lp['ln2_b']),
    )
    heads = params['heads']
    head_args = (jnp.stack([hp['wd'] for hp in heads], axis=0),
                 jnp.stack([hp['bd'] for hp in heads], axis=0),
                 jnp.stack([hp['wp'] for hp in heads], axis=0),
                 jnp.stack([hp['bp'] for hp in heads], axis=0))
    return layer_args + head_args


# ----------------------------- forward (single_task == False path) ----------
def roberta_merged_forward(params, input_ids, attention_mask):
    # Embedding gathers stay in the XLA wrapper (data-dependent gather).
    tok_mask = (input_ids != PAD_ID).astype(jnp.int32)
    # RoBERTa position ids: cumsum over non-pad tokens, offset by padding_idx.
    position_ids = jnp.cumsum(tok_mask, axis=1) * tok_mask + PAD_ID
    emb = (params['word_emb'][input_ids]
           + params['pos_emb'][position_ids]
           + params['type_emb'][0][None, None, :])              # token_type = 0

    # Additive attention mask built once, already expanded to the
    # (NUM_HEADS*B, 1, S) batch layout used inside the kernel.
    am = attention_mask.astype(jnp.float32)
    add_mask = (1.0 - am) * -1e9                                # (B, S)
    add_mask = jnp.broadcast_to(
        add_mask[None, :, None, :], (NUM_HEADS, B, 1, S)
    ).reshape(NUM_HEADS * B, 1, S)

    stacked = _prepare_stacked_params(params)
    args = (emb, add_mask, params['emb_ln_g'], params['emb_ln_b']) + stacked

    logits = pl.pallas_call(
        _fused_forward_kernel,
        out_shape=jax.ShapeDtypeStruct((NUM_TASKS, B, NUM_LABELS), jnp.float32),
        in_specs=[_vmem_spec()] * len(args),
        out_specs=_vmem_spec(),
    )(*args)
    # Same interface as the PyTorch module: a list of per-task logits.
    return [logits[t] for t in range(NUM_TASKS)]


if __name__ == "__main__":
    key = jax.random.PRNGKey(0)
    pkey, ikey = jax.random.split(key)
    params = init_params(pkey)

    input_ids = jax.random.randint(ikey, (B, S), 2, VOCAB, dtype=jnp.int32)
    attention_mask = jnp.ones((B, S), jnp.int32).at[1, -2:].set(0)
    input_ids = jnp.where(attention_mask == 1, input_ids, PAD_ID)

    fwd = jax.jit(roberta_merged_forward)
    outs = fwd(params, input_ids, attention_mask)
    outs = jax.block_until_ready(outs)

    assert len(outs) == NUM_TASKS
    assert all(o.shape == (B, NUM_LABELS) for o in outs)
    assert all(bool(jnp.all(jnp.isfinite(o))) for o in outs)
    print("KERNEL_OK")
</pallas_src>

<mosaic_0001>
module attributes {stable_mosaic.version = 11 : i64} {
  func.func @_fused_forward_kernel(%arg0: memref<2x8x32xf32, #tpu.memory_space<vmem>>, %arg1: memref<8x1x8xf32, #tpu.memory_space<vmem>>, %arg2: memref<1x32xf32, #tpu.memory_space<vmem>>, %arg3: memref<1x32xf32, #tpu.memory_space<vmem>>, %arg4: memref<2x32x96xf32, #tpu.memory_space<vmem>>, %arg5: memref<2x1x96xf32, #tpu.memory_space<vmem>>, %arg6: memref<2x32x32xf32, #tpu.memory_space<vmem>>, %arg7: memref<2x1x32xf32, #tpu.memory_space<vmem>>, %arg8: memref<2x1x32xf32, #tpu.memory_space<vmem>>, %arg9: memref<2x1x32xf32, #tpu.memory_space<vmem>>, %arg10: memref<2x32x64xf32, #tpu.memory_space<vmem>>, %arg11: memref<2x1x64xf32, #tpu.memory_space<vmem>>, %arg12: memref<2x64x32xf32, #tpu.memory_space<vmem>>, %arg13: memref<2x1x32xf32, #tpu.memory_space<vmem>>, %arg14: memref<2x1x32xf32, #tpu.memory_space<vmem>>, %arg15: memref<2x1x32xf32, #tpu.memory_space<vmem>>, %arg16: memref<2x32x32xf32, #tpu.memory_space<vmem>>, %arg17: memref<2x1x32xf32, #tpu.memory_space<vmem>>, %arg18: memref<2x32x3xf32, #tpu.memory_space<vmem>>, %arg19: memref<2x1x3xf32, #tpu.memory_space<vmem>>, %arg20: memref<2x2x3xf32, #tpu.memory_space<vmem>>) attributes {dimension_semantics = [], scalar_prefetch = 0 : i64, scratch_operands = 0 : i64, tpu.core_type = #tpu.core_type<tc>} {
    %c0 = arith.constant 0 : index
    %c0_0 = arith.constant 0 : index
    %c0_1 = arith.constant 0 : index
    %0 = vector.load %arg0[%c0, %c0_0, %c0_1] : memref<2x8x32xf32, #tpu.memory_space<vmem>>, vector<2x8x32xf32>
    %c0_2 = arith.constant 0 : index
    %c0_3 = arith.constant 0 : index
    %1 = vector.load %arg2[%c0_2, %c0_3] : memref<1x32xf32, #tpu.memory_space<vmem>>, vector<1x32xf32>
    %c0_4 = arith.constant 0 : index
    %c0_5 = arith.constant 0 : index
    %2 = vector.load %arg3[%c0_4, %c0_5] : memref<1x32xf32, #tpu.memory_space<vmem>>, vector<1x32xf32>
    %cst = arith.constant dense<0.000000e+00> : vector<2x8xf32>
    %3 = vector.multi_reduction <add>, %0, %cst [2] : vector<2x8x32xf32> to vector<2x8xf32>
    %4 = vector.shape_cast %3 : vector<2x8xf32> to vector<2x8x1xf32>
    %cst_6 = arith.constant 3.200000e+01 : f32
    %5 = vector.broadcast %cst_6 : f32 to vector<2x8x1xf32>
    %6 = arith.divf %4, %5 : vector<2x8x1xf32>
    %7 = vector.broadcast %6 : vector<2x8x1xf32> to vector<2x8x32xf32>
    %8 = arith.subf %0, %7 : vector<2x8x32xf32>
    %9 = arith.mulf %8, %8 : vector<2x8x32xf32>
    %cst_7 = arith.constant dense<0.000000e+00> : vector<2x8xf32>
    %10 = vector.multi_reduction <add>, %9, %cst_7 [2] : vector<2x8x32xf32> to vector<2x8xf32>
    %11 = vector.shape_cast %10 : vector<2x8xf32> to vector<2x8x1xf32>
    %cst_8 = arith.constant 3.200000e+01 : f32
    %12 = vector.broadcast %cst_8 : f32 to vector<2x8x1xf32>
    %13 = arith.divf %11, %12 : vector<2x8x1xf32>
    %14 = vector.broadcast %6 : vector<2x8x1xf32> to vector<2x8x32xf32>
    %15 = arith.subf %0, %14 : vector<2x8x32xf32>
    %cst_9 = arith.constant 9.99999974E-6 : f32
    %16 = vector.broadcast %cst_9 : f32 to vector<2x8x1xf32>
    %17 = arith.addf %13, %16 : vector<2x8x1xf32>
    %18 = math.rsqrt %17 : vector<2x8x1xf32>
    %19 = vector.broadcast %18 : vector<2x8x1xf32> to vector<2x8x32xf32>
    %20 = arith.mulf %15, %19 : vector<2x8x32xf32>
    %21 = vector.shape_cast %1 : vector<1x32xf32> to vector<1x1x32xf32>
    %22 = vector.broadcast %21 : vector<1x1x32xf32> to vector<2x8x32xf32>
    %23 = arith.mulf %20, %22 : vector<2x8x32xf32>
    %24 = vector.shape_cast %2 : vector<1x32xf32> to vector<1x1x32xf32>
    %25 = vector.broadcast %24 : vector<1x1x32xf32> to vector<2x8x32xf32>
    %26 = arith.addf %23, %25 : vector<2x8x32xf32>
    %c0_10 = arith.constant 0 : index
    %c0_11 = arith.constant 0 : index
    %c0_12 = arith.constant 0 : index
    %27 = vector.load %arg1[%c0_10, %c0_11, %c0_12] : memref<8x1x8xf32, #tpu.memory_space<vmem>>, vector<8x1x8xf32>
    %c0_13 = arith.constant 0 : index
    %c0_14 = arith.constant 0 : index
    %c0_15 = arith.constant 0 : index
    %28 = vector.load %arg4[%c0_13, %c0_14, %c0_15] : memref<2x32x96xf32, #tpu.memory_space<vmem>>, vector<1x32x96xf32>
    %29 = vector.shape_cast %28 : vector<1x32x96xf32> to vector<32x96xf32>
    "tpu.trace_start"() <{level = 10 : i32, message = "bsh,hd->bsd"}> : () -> ()
    %cst_16 = arith.constant dense<0.000000e+00> : vector<2x8x96xf32>
    %30 = tpu.matmul %26, %29, %cst_16 {dimension_numbers = #tpu.dot_dimension_numbers<[2], [0], [0, 1], [1], [0, 0, 0, 1, 1, 1], [], []>} : vector<2x8x32xf32>, vector<32x96xf32>, vector<2x8x96xf32> -> vector<2x8x96xf32>
    "tpu.trace_stop"() : () -> ()
    %c0_17 = arith.constant 0 : index
    %c0_18 = arith.constant 0 : index
    %c0_19 = arith.constant 0 : index
    %31 = vector.load %arg5[%c0_17, %c0_18, %c0_19] : memref<2x1x96xf32, #tpu.memory_space<vmem>>, vector<1x1x96xf32>
    %32 = vector.shape_cast %31 : vector<1x1x96xf32> to vector<1x96xf32>
    %33 = vector.shape_cast %32 : vector<1x96xf32> to vector<1x1x96xf32>
    %34 = vector.broadcast %33 : vector<1x1x96xf32> to vector<2x8x96xf32>
    %35 = arith.addf %30, %34 : vector<2x8x96xf32>
    %36 = vector.extract_strided_slice %35 {offsets = [0, 0, 0], sizes = [2, 8, 8], strides = [1, 1, 1]} : vector<2x8x96xf32> to vector<2x8x8xf32>
    %37 = vector.extract_strided_slice %35 {offsets = [0, 0, 8], sizes = [2, 8, 8], strides = [1, 1, 1]} : vector<2x8x96xf32> to vector<2x8x8xf32>
    %38 = vector.extract_strided_slice %35 {offsets = [0, 0, 16], sizes = [2, 8, 8], strides = [1, 1, 1]} : vector<2x8x96xf32> to vector<2x8x8xf32>
    %39 = vector.extract_strided_slice %35 {offsets = [0, 0, 24], sizes = [2, 8, 8], strides = [1, 1, 1]} : vector<2x8x96xf32> to vector<2x8x8xf32>
    %40 = tpu.concatenate %36, %37, %38, %39 in 0 : vector<2x8x8xf32>, vector<2x8x8xf32>, vector<2x8x8xf32>, vector<2x8x8xf32> -> vector<8x8x8xf32>
    %41 = vector.extract_strided_slice %35 {offsets = [0, 0, 32], sizes = [2, 8, 8], strides = [1, 1, 1]} : vector<2x8x96xf32> to vector<2x8x8xf32>
    %42 = vector.extract_strided_slice %35 {offsets = [0, 0, 40], sizes = [2, 8, 8], strides = [1, 1, 1]} : vector<2x8x96xf32> to vector<2x8x8xf32>
    %43 = vector.extract_strided_slice %35 {offsets = [0, 0, 48], sizes = [2, 8, 8], strides = [1, 1, 1]} : vector<2x8x96xf32> to vector<2x8x8xf32>
    %44 = vector.extract_strided_slice %35 {offsets = [0, 0, 56], sizes = [2, 8, 8], strides = [1, 1, 1]} : vector<2x8x96xf32> to vector<2x8x8xf32>
    %45 = tpu.concatenate %41, %42, %43, %44 in 0 : vector<2x8x8xf32>, vector<2x8x8xf32>, vector<2x8x8xf32>, vector<2x8x8xf32> -> vector<8x8x8xf32>
    %46 = vector.extract_strided_slice %35 {offsets = [0, 0, 64], sizes = [2, 8, 8], strides = [1, 1, 1]} : vector<2x8x96xf32> to vector<2x8x8xf32>
    %47 = vector.extract_strided_slice %35 {offsets = [0, 0, 72], sizes = [2, 8, 8], strides = [1, 1, 1]} : vector<2x8x96xf32> to vector<2x8x8xf32>
    %48 = vector.extract_strided_slice %35 {offsets = [0, 0, 80], sizes = [2, 8, 8], strides = [1, 1, 1]} : vector<2x8x96xf32> to vector<2x8x8xf32>
    %49 = vector.extract_strided_slice %35 {offsets = [0, 0, 88], sizes = [2, 8, 8], strides = [1, 1, 1]} : vector<2x8x96xf32> to vector<2x8x8xf32>
    %50 = tpu.concatenate %46, %47, %48, %49 in 0 : vector<2x8x8xf32>, vector<2x8x8xf32>, vector<2x8x8xf32>, vector<2x8x8xf32> -> vector<8x8x8xf32>
    "tpu.trace_start"() <{level = 10 : i32, message = "bqd,bkd->bqk"}> : () -> ()
    %cst_20 = arith.constant dense<0.000000e+00> : vector<8x8x8xf32>
    %51 = tpu.matmul %40, %45, %cst_20 {dimension_numbers = #tpu.dot_dimension_numbers<[2], [2], [1], [1], [0, 0, 0, 1, 1, 1], [0], [0]>} : vector<8x8x8xf32>, vector<8x8x8xf32>, vector<8x8x8xf32> -> vector<8x8x8xf32>
    "tpu.trace_stop"() : () -> ()
    %52 = vector.broadcast %27 : vector<8x1x8xf32> to vector<8x8x8xf32>
    %53 = arith.addf %51, %52 : vector<8x8x8xf32>
    %cst_21 = arith.constant dense<0xFF800000> : vector<8x8xf32>
    %54 = vector.multi_reduction <maximumf>, %53, %cst_21 [2] : vector<8x8x8xf32> to vector<8x8xf32>
    %55 = vector.shape_cast %54 : vector<8x8xf32> to vector<8x8x1xf32>
    %56 = vector.broadcast %55 : vector<8x8x1xf32> to vector<8x8x8xf32>
    %57 = arith.subf %53, %56 : vector<8x8x8xf32>
    %58 = math.exp %57 : vector<8x8x8xf32>
    %cst_22 = arith.constant dense<0.000000e+00> : vector<8x8xf32>
    %59 = vector.multi_reduction <add>, %58, %cst_22 [2] : vector<8x8x8xf32> to vector<8x8xf32>
    %60 = vector.shape_cast %59 : vector<8x8xf32> to vector<8x8x1xf32>
    %61 = tpu.reciprocal %60 {approx = true} : vector<8x8x1xf32> -> vector<8x8x1xf32>
    %62 = vector.broadcast %61 : vector<8x8x1xf32> to vector<8x8x8xf32>
    %63 = arith.mulf %58, %62 : vector<8x8x8xf32>
    "tpu.trace_start"() <{level = 10 : i32, message = "bqk,bkd->bqd"}> : () -> ()
    %cst_23 = arith.constant dense<0.000000e+00> : vector<8x8x8xf32>
    %64 = tpu.matmul %63, %50, %cst_23 {dimension_numbers = #tpu.dot_dimension_numbers<[2], [1], [1], [2], [0, 0, 0, 1, 1, 2], [0], [0]>} : vector<8x8x8xf32>, vector<8x8x8xf32>, vector<8x8x8xf32> -> vector<8x8x8xf32>
    "tpu.trace_stop"() : () -> ()
    %65 = vector.extract_strided_slice %64 {offsets = [0, 0, 0], sizes = [2, 8, 8], strides = [1, 1, 1]} : vector<8x8x8xf32> to vector<2x8x8xf32>
    %66 = vector.extract_strided_slice %64 {offsets = [2, 0, 0], sizes = [2, 8, 8], strides = [1, 1, 1]} : vector<8x8x8xf32> to vector<2x8x8xf32>
    %67 = vector.extract_strided_slice %64 {offsets = [4, 0, 0], sizes = [2, 8, 8], strides = [1, 1, 1]} : vector<8x8x8xf32> to vector<2x8x8xf32>
    %68 = vector.extract_strided_slice %64 {offsets = [6, 0, 0], sizes = [2, 8, 8], strides = [1, 1, 1]} : vector<8x8x8xf32> to vector<2x8x8xf32>
    %69 = tpu.concatenate %65, %66, %67, %68 in 2 : vector<2x8x8xf32>, vector<2x8x8xf32>, vector<2x8x8xf32>, vector<2x8x8xf32> -> vector<2x8x32xf32>
    %c0_24 = arith.constant 0 : index
    %c0_25 = arith.constant 0 : index
    %c0_26 = arith.constant 0 : index
    %70 = vector.load %arg6[%c0_24, %c0_25, %c0_26] : memref<2x32x32xf32, #tpu.memory_space<vmem>>, vector<1x32x32xf32>
    %71 = vector.shape_cast %70 : vector<1x32x32xf32> to vector<32x32xf32>
    "tpu.trace_start"() <{level = 10 : i32, message = "bsh,hd->bsd"}> : () -> ()
    %cst_27 = arith.constant dense<0.000000e+00> : vector<2x8x32xf32>
    %72 = tpu.matmul %69, %71, %cst_27 {dimension_numbers = #tpu.dot_dimension_numbers<[2], [0], [0, 1], [1], [0, 0, 0, 1, 1, 1], [], []>} : vector<2x8x32xf32>, vector<32x32xf32>, vector<2x8x32xf32> -> vector<2x8x32xf32>
    "tpu.trace_stop"() : () -> ()
    %c0_28 = arith.constant 0 : index
    %c0_29 = arith.constant 0 : index
    %c0_30 = arith.constant 0 : index
    %73 = vector.load %arg7[%c0_28, %c0_29, %c0_30] : memref<2x1x32xf32, #tpu.memory_space<vmem>>, vector<1x1x32xf32>
    %74 = vector.shape_cast %73 : vector<1x1x32xf32> to vector<1x32xf32>
    %75 = vector.shape_cast %74 : vector<1x32xf32> to vector<1x1x32xf32>
    %76 = vector.broadcast %75 : vector<1x1x32xf32> to vector<2x8x32xf32>
    %77 = arith.addf %72, %76 : vector<2x8x32xf32>
    %78 = arith.addf %26, %77 : vector<2x8x32xf32>
    %c0_31 = arith.constant 0 : index
    %c0_32 = arith.constant 0 : index
    %c0_33 = arith.constant 0 : index
    %79 = vector.load %arg8[%c0_31, %c0_32, %c0_33] : memref<2x1x32xf32, #tpu.memory_space<vmem>>, vector<1x1x32xf32>
    %80 = vector.shape_cast %79 : vector<1x1x32xf32> to vector<1x32xf32>
    %c0_34 = arith.constant 0 : index
    %c0_35 = arith.constant 0 : index
    %c0_36 = arith.constant 0 : index
    %81 = vector.load %arg9[%c0_34, %c0_35, %c0_36] : memref<2x1x32xf32, #tpu.memory_space<vmem>>, vector<1x1x32xf32>
    %82 = vector.shape_cast %81 : vector<1x1x32xf32> to vector<1x32xf32>
    %cst_37 = arith.constant dense<0.000000e+00> : vector<2x8xf32>
    %83 = vector.multi_reduction <add>, %78, %cst_37 [2] : vector<2x8x32xf32> to vector<2x8xf32>
    %84 = vector.shape_cast %83 : vector<2x8xf32> to vector<2x8x1xf32>
    %cst_38 = arith.constant 3.200000e+01 : f32
    %85 = vector.broadcast %cst_38 : f32 to vector<2x8x1xf32>
    %86 = arith.divf %84, %85 : vector<2x8x1xf32>
    %87 = vector.broadcast %86 : vector<2x8x1xf32> to vector<2x8x32xf32>
    %88 = arith.subf %78, %87 : vector<2x8x32xf32>
    %89 = arith.mulf %88, %88 : vector<2x8x32xf32>
    %cst_39 = arith.constant dense<0.000000e+00> : vector<2x8xf32>
    %90 = vector.multi_reduction <add>, %89, %cst_39 [2] : vector<2x8x32xf32> to vector<2x8xf32>
    %91 = vector.shape_cast %90 : vector<2x8xf32> to vector<2x8x1xf32>
    %cst_40 = arith.constant 3.200000e+01 : f32
    %92 = vector.broadcast %cst_40 : f32 to vector<2x8x1xf32>
    %93 = arith.divf %91, %92 : vector<2x8x1xf32>
    %94 = vector.broadcast %86 : vector<2x8x1xf32> to vector<2x8x32xf32>
    %95 = arith.subf %78, %94 : vector<2x8x32xf32>
    %cst_41 = arith.constant 9.99999974E-6 : f32
    %96 = vector.broadcast %cst_41 : f32 to vector<2x8x1xf32>
    %97 = arith.addf %93, %96 : vector<2x8x1xf32>
    %98 = math.rsqrt %97 : vector<2x8x1xf32>
    %99 = vector.broadcast %98 : vector<2x8x1xf32> to vector<2x8x32xf32>
    %100 = arith.mulf %95, %99 : vector<2x8x32xf32>
    %101 = vector.shape_cast %80 : vector<1x32xf32> to vector<1x1x32xf32>
    %102 = vector.broadcast %101 : vector<1x1x32xf32> to vector<2x8x32xf32>
    %103 = arith.mulf %100, %102 : vector<2x8x32xf32>
    %104 = vector.shape_cast %82 : vector<1x32xf32> to vector<1x1x32xf32>
    %105 = vector.broadcast %104 : vector<1x1x32xf32> to vector<2x8x32xf32>
    %106 = arith.addf %103, %105 : vector<2x8x32xf32>
    %c0_42 = arith.constant 0 : index
    %c0_43 = arith.constant 0 : index
    %c0_44 = arith.constant 0 : index
    %107 = vector.load %arg10[%c0_42, %c0_43, %c0_44] : memref<2x32x64xf32, #tpu.memory_space<vmem>>, vector<1x32x64xf32>
    %108 = vector.shape_cast %107 : vector<1x32x64xf32> to vector<32x64xf32>
    "tpu.trace_start"() <{level = 10 : i32, message = "bsh,hi->bsi"}> : () -> ()
    %cst_45 = arith.constant dense<0.000000e+00> : vector<2x8x64xf32>
    %109 = tpu.matmul %106, %108, %cst_45 {dimension_numbers = #tpu.dot_dimension_numbers<[2], [0], [0, 1], [1], [0, 0, 0, 1, 1, 1], [], []>} : vector<2x8x32xf32>, vector<32x64xf32>, vector<2x8x64xf32> -> vector<2x8x64xf32>
    "tpu.trace_stop"() : () -> ()
    %c0_46 = arith.constant 0 : index
    %c0_47 = arith.constant 0 : index
    %c0_48 = arith.constant 0 : index
    %110 = vector.load %arg11[%c0_46, %c0_47, %c0_48] : memref<2x1x64xf32, #tpu.memory_space<vmem>>, vector<1x1x64xf32>
    %111 = vector.shape_cast %110 : vector<1x1x64xf32> to vector<1x64xf32>
    %112 = vector.shape_cast %111 : vector<1x64xf32> to vector<1x1x64xf32>
    %113 = vector.broadcast %112 : vector<1x1x64xf32> to vector<2x8x64xf32>
    %114 = arith.addf %109, %113 : vector<2x8x64xf32>
    %115 = arith.mulf %114, %114 : vector<2x8x64xf32>
    %116 = arith.mulf %114, %115 : vector<2x8x64xf32>
    %cst_49 = arith.constant 4.471500e-02 : f32
    %117 = vector.broadcast %cst_49 : f32 to vector<2x8x64xf32>
    %118 = arith.mulf %117, %116 : vector<2x8x64xf32>
    %119 = arith.addf %114, %118 : vector<2x8x64xf32>
    %cst_50 = arith.constant 0.797884583 : f32
    %120 = vector.broadcast %cst_50 : f32 to vector<2x8x64xf32>
    %121 = arith.mulf %120, %119 : vector<2x8x64xf32>
    %122 = math.tanh %121 : vector<2x8x64xf32>
    %cst_51 = arith.constant 1.000000e+00 : f32
    %123 = vector.broadcast %cst_51 : f32 to vector<2x8x64xf32>
    %124 = arith.addf %123, %122 : vector<2x8x64xf32>
    %cst_52 = arith.constant 5.000000e-01 : f32
    %125 = vector.broadcast %cst_52 : f32 to vector<2x8x64xf32>
    %126 = arith.mulf %125, %124 : vector<2x8x64xf32>
    %127 = arith.mulf %114, %126 : vector<2x8x64xf32>
    %c0_53 = arith.constant 0 : index
    %c0_54 = arith.constant 0 : index
    %c0_55 = arith.constant 0 : index
    %128 = vector.load %arg12[%c0_53, %c0_54, %c0_55] : memref<2x64x32xf32, #tpu.memory_space<vmem>>, vector<1x64x32xf32>
    %129 = vector.shape_cast %128 : vector<1x64x32xf32> to vector<64x32xf32>
    "tpu.trace_start"() <{level = 10 : i32, message = "bsi,ih->bsh"}> : () -> ()
    %cst_56 = arith.constant dense<0.000000e+00> : vector<2x8x32xf32>
    %130 = tpu.matmul %127, %129, %cst_56 {dimension_numbers = #tpu.dot_dimension_numbers<[2], [0], [0, 1], [1], [0, 0, 0, 1, 1, 1], [], []>} : vector<2x8x64xf32>, vector<64x32xf32>, vector<2x8x32xf32> -> vector<2x8x32xf32>
    "tpu.trace_stop"() : () -> ()
    %c0_57 = arith.constant 0 : index
    %c0_58 = arith.constant 0 : index
    %c0_59 = arith.constant 0 : index
    %131 = vector.load %arg13[%c0_57, %c0_58, %c0_59] : memref<2x1x32xf32, #tpu.memory_space<vmem>>, vector<1x1x32xf32>
    %132 = vector.shape_cast %131 : vector<1x1x32xf32> to vector<1x32xf32>
    %133 = vector.shape_cast %132 : vector<1x32xf32> to vector<1x1x32xf32>
    %134 = vector.broadcast %133 : vector<1x1x32xf32> to vector<2x8x32xf32>
    %135 = arith.addf %130, %134 : vector<2x8x32xf32>
    %136 = arith.addf %106, %135 : vector<2x8x32xf32>
    %c0_60 = arith.constant 0 : index
    %c0_61 = arith.constant 0 : index
    %c0_62 = arith.constant 0 : index
    %137 = vector.load %arg14[%c0_60, %c0_61, %c0_62] : memref<2x1x32xf32, #tpu.memory_space<vmem>>, vector<1x1x32xf32>
    %138 = vector.shape_cast %137 : vector<1x1x32xf32> to vector<1x32xf32>
    %c0_63 = arith.constant 0 : index
    %c0_64 = arith.constant 0 : index
    %c0_65 = arith.constant 0 : index
    %139 = vector.load %arg15[%c0_63, %c0_64, %c0_65] : memref<2x1x32xf32, #tpu.memory_space<vmem>>, vector<1x1x32xf32>
    %140 = vector.shape_cast %139 : vector<1x1x32xf32> to vector<1x32xf32>
    %cst_66 = arith.constant dense<0.000000e+00> : vector<2x8xf32>
    %141 = vector.multi_reduction <add>, %136, %cst_66 [2] : vector<2x8x32xf32> to vector<2x8xf32>
    %142 = vector.shape_cast %141 : vector<2x8xf32> to vector<2x8x1xf32>
    %cst_67 = arith.constant 3.200000e+01 : f32
    %143 = vector.broadcast %cst_67 : f32 to vector<2x8x1xf32>
    %144 = arith.divf %142, %143 : vector<2x8x1xf32>
    %145 = vector.broadcast %144 : vector<2x8x1xf32> to vector<2x8x32xf32>
    %146 = arith.subf %136, %145 : vector<2x8x32xf32>
    %147 = arith.mulf %146, %146 : vector<2x8x32xf32>
    %cst_68 = arith.constant dense<0.000000e+00> : vector<2x8xf32>
    %148 = vector.multi_reduction <add>, %147, %cst_68 [2] : vector<2x8x32xf32> to vector<2x8xf32>
    %149 = vector.shape_cast %148 : vector<2x8xf32> to vector<2x8x1xf32>
    %cst_69 = arith.constant 3.200000e+01 : f32
    %150 = vector.broadcast %cst_69 : f32 to vector<2x8x1xf32>
    %151 = arith.divf %149, %150 : vector<2x8x1xf32>
    %152 = vector.broadcast %144 : vector<2x8x1xf32> to vector<2x8x32xf32>
    %153 = arith.subf %136, %152 : vector<2x8x32xf32>
    %cst_70 = arith.constant 9.99999974E-6 : f32
    %154 = vector.broadcast %cst_70 : f32 to vector<2x8x1xf32>
    %155 = arith.addf %151, %154 : vector<2x8x1xf32>
    %156 = math.rsqrt %155 : vector<2x8x1xf32>
    %157 = vector.broadcast %156 : vector<2x8x1xf32> to vector<2x8x32xf32>
    %158 = arith.mulf %153, %157 : vector<2x8x32xf32>
    %159 = vector.shape_cast %138 : vector<1x32xf32> to vector<1x1x32xf32>
    %160 = vector.broadcast %159 : vector<1x1x32xf32> to vector<2x8x32xf32>
    %161 = arith.mulf %158, %160 : vector<2x8x32xf32>
    %162 = vector.shape_cast %140 : vector<1x32xf32> to vector<1x1x32xf32>
    %163 = vector.broadcast %162 : vector<1x1x32xf32> to vector<2x8x32xf32>
    %164 = arith.addf %161, %163 : vector<2x8x32xf32>
    %c1 = arith.constant 1 : index
    %c0_71 = arith.constant 0 : index
    %c0_72 = arith.constant 0 : index
    %165 = vector.load %arg4[%c1, %c0_71, %c0_72] : memref<2x32x96xf32, #tpu.memory_space<vmem>>, vector<1x32x96xf32>
    %166 = vector.shape_cast %165 : vector<1x32x96xf32> to vector<32x96xf32>
    "tpu.trace_start"() <{level = 10 : i32, message = "bsh,hd->bsd"}> : () -> ()
    %cst_73 = arith.constant dense<0.000000e+00> : vector<2x8x96xf32>
    %167 = tpu.matmul %164, %166, %cst_73 {dimension_numbers = #tpu.dot_dimension_numbers<[2], [0], [0, 1], [1], [0, 0, 0, 1, 1, 1], [], []>} : vector<2x8x32xf32>, vector<32x96xf32>, vector<2x8x96xf32> -> vector<2x8x96xf32>
    "tpu.trace_stop"() : () -> ()
    %c1_74 = arith.constant 1 : index
    %c0_75 = arith.constant 0 : index
    %c0_76 = arith.constant 0 : index
    %168 = vector.load %arg5[%c1_74, %c0_75, %c0_76] : memref<2x1x96xf32, #tpu.memory_space<vmem>>, vector<1x1x96xf32>
    %169 = vector.shape_cast %168 : vector<1x1x96xf32> to vector<1x96xf32>
    %170 = vector.shape_cast %169 : vector<1x96xf32> to vector<1x1x96xf32>
    %171 = vector.broadcast %170 : vector<1x1x96xf32> to vector<2x8x96xf32>
    %172 = arith.addf %167, %171 : vector<2x8x96xf32>
    %173 = vector.extract_strided_slice %172 {offsets = [0, 0, 0], sizes = [2, 8, 8], strides = [1, 1, 1]} : vector<2x8x96xf32> to vector<2x8x8xf32>
    %174 = vector.extract_strided_slice %172 {offsets = [0, 0, 8], sizes = [2, 8, 8], strides = [1, 1, 1]} : vector<2x8x96xf32> to vector<2x8x8xf32>
    %175 = vector.extract_strided_slice %172 {offsets = [0, 0, 16], sizes = [2, 8, 8], strides = [1, 1, 1]} : vector<2x8x96xf32> to vector<2x8x8xf32>
    %176 = vector.extract_strided_slice %172 {offsets = [0, 0, 24], sizes = [2, 8, 8], strides = [1, 1, 1]} : vector<2x8x96xf32> to vector<2x8x8xf32>
    %177 = tpu.concatenate %173, %174, %175, %176 in 0 : vector<2x8x8xf32>, vector<2x8x8xf32>, vector<2x8x8xf32>, vector<2x8x8xf32> -> vector<8x8x8xf32>
    %178 = vector.extract_strided_slice %172 {offsets = [0, 0, 32], sizes = [2, 8, 8], strides = [1, 1, 1]} : vector<2x8x96xf32> to vector<2x8x8xf32>
    %179 = vector.extract_strided_slice %172 {offsets = [0, 0, 40], sizes = [2, 8, 8], strides = [1, 1, 1]} : vector<2x8x96xf32> to vector<2x8x8xf32>
    %180 = vector.extract_strided_slice %172 {offsets = [0, 0, 48], sizes = [2, 8, 8], strides = [1, 1, 1]} : vector<2x8x96xf32> to vector<2x8x8xf32>
    %181 = vector.extract_strided_slice %172 {offsets = [0, 0, 56], sizes = [2, 8, 8], strides = [1, 1, 1]} : vector<2x8x96xf32> to vector<2x8x8xf32>
    %182 = tpu.concatenate %178, %179, %180, %181 in 0 : vector<2x8x8xf32>, vector<2x8x8xf32>, vector<2x8x8xf32>, vector<2x8x8xf32> -> vector<8x8x8xf32>
    %183 = vector.extract_strided_slice %172 {offsets = [0, 0, 64], sizes = [2, 8, 8], strides = [1, 1, 1]} : vector<2x8x96xf32> to vector<2x8x8xf32>
    %184 = vector.extract_strided_slice %172 {offsets = [0, 0, 72], sizes = [2, 8, 8], strides = [1, 1, 1]} : vector<2x8x96xf32> to vector<2x8x8xf32>
    %185 = vector.extract_strided_slice %172 {offsets = [0, 0, 80], sizes = [2, 8, 8], strides = [1, 1, 1]} : vector<2x8x96xf32> to vector<2x8x8xf32>
    %186 = vector.extract_strided_slice %172 {offsets = [0, 0, 88], sizes = [2, 8, 8], strides = [1, 1, 1]} : vector<2x8x96xf32> to vector<2x8x8xf32>
    %187 = tpu.concatenate %183, %184, %185, %186 in 0 : vector<2x8x8xf32>, vector<2x8x8xf32>, vector<2x8x8xf32>, vector<2x8x8xf32> -> vector<8x8x8xf32>
    "tpu.trace_start"() <{level = 10 : i32, message = "bqd,bkd->bqk"}> : () -> ()
    %cst_77 = arith.constant dense<0.000000e+00> : vector<8x8x8xf32>
    %188 = tpu.matmul %177, %182, %cst_77 {dimension_numbers = #tpu.dot_dimension_numbers<[2], [2], [1], [1], [0, 0, 0, 1, 1, 1], [0], [0]>} : vector<8x8x8xf32>, vector<8x8x8xf32>, vector<8x8x8xf32> -> vector<8x8x8xf32>
    "tpu.trace_stop"() : () -> ()
    %189 = vector.broadcast %27 : vector<8x1x8xf32> to vector<8x8x8xf32>
    %190 = arith.addf %188, %189 : vector<8x8x8xf32>
    %cst_78 = arith.constant dense<0xFF800000> : vector<8x8xf32>
    %191 = vector.multi_reduction <maximumf>, %190, %cst_78 [2] : vector<8x8x8xf32> to vector<8x8xf32>
    %192 = vector.shape_cast %191 : vector<8x8xf32> to vector<8x8x1xf32>
    %193 = vector.broadcast %192 : vector<8x8x1xf32> to vector<8x8x8xf32>
    %194 = arith.subf %190, %193 : vector<8x8x8xf32>
    %195 = math.exp %194 : vector<8x8x8xf32>
    %cst_79 = arith.constant dense<0.000000e+00> : vector<8x8xf32>
    %196 = vector.multi_reduction <add>, %195, %cst_79 [2] : vector<8x8x8xf32> to vector<8x8xf32>
    %197 = vector.shape_cast %196 : vector<8x8xf32> to vector<8x8x1xf32>
    %198 = tpu.reciprocal %197 {approx = true} : vector<8x8x1xf32> -> vector<8x8x1xf32>
    %199 = vector.broadcast %198 : vector<8x8x1xf32> to vector<8x8x8xf32>
    %200 = arith.mulf %195, %199 : vector<8x8x8xf32>
    "tpu.trace_start"() <{level = 10 : i32, message = "bqk,bkd->bqd"}> : () -> ()
    %cst_80 = arith.constant dense<0.000000e+00> : vector<8x8x8xf32>
    %201 = tpu.matmul %200, %187, %cst_80 {dimension_numbers = #tpu.dot_dimension_numbers<[2], [1], [1], [2], [0, 0, 0, 1, 1, 2], [0], [0]>} : vector<8x8x8xf32>, vector<8x8x8xf32>, vector<8x8x8xf32> -> vector<8x8x8xf32>
    "tpu.trace_stop"() : () -> ()
    %202 = vector.extract_strided_slice %201 {offsets = [0, 0, 0], sizes = [2, 8, 8], strides = [1, 1, 1]} : vector<8x8x8xf32> to vector<2x8x8xf32>
    %203 = vector.extract_strided_slice %201 {offsets = [2, 0, 0], sizes = [2, 8, 8], strides = [1, 1, 1]} : vector<8x8x8xf32> to vector<2x8x8xf32>
    %204 = vector.extract_strided_slice %201 {offsets = [4, 0, 0], sizes = [2, 8, 8], strides = [1, 1, 1]} : vector<8x8x8xf32> to vector<2x8x8xf32>
    %205 = vector.extract_strided_slice %201 {offsets = [6, 0, 0], sizes = [2, 8, 8], strides = [1, 1, 1]} : vector<8x8x8xf32> to vector<2x8x8xf32>
    %206 = tpu.concatenate %202, %203, %204, %205 in 2 : vector<2x8x8xf32>, vector<2x8x8xf32>, vector<2x8x8xf32>, vector<2x8x8xf32> -> vector<2x8x32xf32>
    %c1_81 = arith.constant 1 : index
    %c0_82 = arith.constant 0 : index
    %c0_83 = arith.constant 0 : index
    %207 = vector.load %arg6[%c1_81, %c0_82, %c0_83] : memref<2x32x32xf32, #tpu.memory_space<vmem>>, vector<1x32x32xf32>
    %208 = vector.shape_cast %207 : vector<1x32x32xf32> to vector<32x32xf32>
    "tpu.trace_start"() <{level = 10 : i32, message = "bsh,hd->bsd"}> : () -> ()
    %cst_84 = arith.constant dense<0.000000e+00> : vector<2x8x32xf32>
    %209 = tpu.matmul %206, %208, %cst_84 {dimension_numbers = #tpu.dot_dimension_numbers<[2], [0], [0, 1], [1], [0, 0, 0, 1, 1, 1], [], []>} : vector<2x8x32xf32>, vector<32x32xf32>, vector<2x8x32xf32> -> vector<2x8x32xf32>
    "tpu.trace_stop"() : () -> ()
    %c1_85 = arith.constant 1 : index
    %c0_86 = arith.constant 0 : index
    %c0_87 = arith.constant 0 : index
    %210 = vector.load %arg7[%c1_85, %c0_86, %c0_87] : memref<2x1x32xf32, #tpu.memory_space<vmem>>, vector<1x1x32xf32>
    %211 = vector.shape_cast %210 : vector<1x1x32xf32> to vector<1x32xf32>
    %212 = vector.shape_cast %211 : vector<1x32xf32> to vector<1x1x32xf32>
    %213 = vector.broadcast %212 : vector<1x1x32xf32> to vector<2x8x32xf32>
    %214 = arith.addf %209, %213 : vector<2x8x32xf32>
    %215 = arith.addf %164, %214 : vector<2x8x32xf32>
    %c1_88 = arith.constant 1 : index
    %c0_89 = arith.constant 0 : index
    %c0_90 = arith.constant 0 : index
    %216 = vector.load %arg8[%c1_88, %c0_89, %c0_90] : memref<2x1x32xf32, #tpu.memory_space<vmem>>, vector<1x1x32xf32>
    %217 = vector.shape_cast %216 : vector<1x1x32xf32> to vector<1x32xf32>
    %c1_91 = arith.constant 1 : index
    %c0_92 = arith.constant 0 : index
    %c0_93 = arith.constant 0 : index
    %218 = vector.load %arg9[%c1_91, %c0_92, %c0_93] : memref<2x1x32xf32, #tpu.memory_space<vmem>>, vector<1x1x32xf32>
    %219 = vector.shape_cast %218 : vector<1x1x32xf32> to vector<1x32xf32>
    %cst_94 = arith.constant dense<0.000000e+00> : vector<2x8xf32>
    %220 = vector.multi_reduction <add>, %215, %cst_94 [2] : vector<2x8x32xf32> to vector<2x8xf32>
    %221 = vector.shape_cast %220 : vector<2x8xf32> to vector<2x8x1xf32>
    %cst_95 = arith.constant 3.200000e+01 : f32
    %222 = vector.broadcast %cst_95 : f32 to vector<2x8x1xf32>
    %223 = arith.divf %221, %222 : vector<2x8x1xf32>
    %224 = vector.broadcast %223 : vector<2x8x1xf32> to vector<2x8x32xf32>
    %225 = arith.subf %215, %224 : vector<2x8x32xf32>
    %226 = arith.mulf %225, %225 : vector<2x8x32xf32>
    %cst_96 = arith.constant dense<0.000000e+00> : vector<2x8xf32>
    %227 = vector.multi_reduction <add>, %226, %cst_96 [2] : vector<2x8x32xf32> to vector<2x8xf32>
    %228 = vector.shape_cast %227 : vector<2x8xf32> to vector<2x8x1xf32>
    %cst_97 = arith.constant 3.200000e+01 : f32
    %229 = vector.broadcast %cst_97 : f32 to vector<2x8x1xf32>
    %230 = arith.divf %228, %229 : vector<2x8x1xf32>
    %231 = vector.broadcast %223 : vector<2x8x1xf32> to vector<2x8x32xf32>
    %232 = arith.subf %215, %231 : vector<2x8x32xf32>
    %cst_98 = arith.constant 9.99999974E-6 : f32
    %233 = vector.broadcast %cst_98 : f32 to vector<2x8x1xf32>
    %234 = arith.addf %230, %233 : vector<2x8x1xf32>
    %235 = math.rsqrt %234 : vector<2x8x1xf32>
    %236 = vector.broadcast %235 : vector<2x8x1xf32> to vector<2x8x32xf32>
    %237 = arith.mulf %232, %236 : vector<2x8x32xf32>
    %238 = vector.shape_cast %217 : vector<1x32xf32> to vector<1x1x32xf32>
    %239 = vector.broadcast %238 : vector<1x1x32xf32> to vector<2x8x32xf32>
    %240 = arith.mulf %237, %239 : vector<2x8x32xf32>
    %241 = vector.shape_cast %219 : vector<1x32xf32> to vector<1x1x32xf32>
    %242 = vector.broadcast %241 : vector<1x1x32xf32> to vector<2x8x32xf32>
    %243 = arith.addf %240, %242 : vector<2x8x32xf32>
    %c1_99 = arith.constant 1 : index
    %c0_100 = arith.constant 0 : index
    %c0_101 = arith.constant 0 : index
    %244 = vector.load %arg10[%c1_99, %c0_100, %c0_101] : memref<2x32x64xf32, #tpu.memory_space<vmem>>, vector<1x32x64xf32>
    %245 = vector.shape_cast %244 : vector<1x32x64xf32> to vector<32x64xf32>
    "tpu.trace_start"() <{level = 10 : i32, message = "bsh,hi->bsi"}> : () -> ()
    %cst_102 = arith.constant dense<0.000000e+00> : vector<2x8x64xf32>
    %246 = tpu.matmul %243, %245, %cst_102 {dimension_numbers = #tpu.dot_dimension_numbers<[2], [0], [0, 1], [1], [0, 0, 0, 1, 1, 1], [], []>} : vector<2x8x32xf32>, vector<32x64xf32>, vector<2x8x64xf32> -> vector<2x8x64xf32>
    "tpu.trace_stop"() : () -> ()
    %c1_103 = arith.constant 1 : index
    %c0_104 = arith.constant 0 : index
    %c0_105 = arith.constant 0 : index
    %247 = vector.load %arg11[%c1_103, %c0_104, %c0_105] : memref<2x1x64xf32, #tpu.memory_space<vmem>>, vector<1x1x64xf32>
    %248 = vector.shape_cast %247 : vector<1x1x64xf32> to vector<1x64xf32>
    %249 = vector.shape_cast %248 : vector<1x64xf32> to vector<1x1x64xf32>
    %250 = vector.broadcast %249 : vector<1x1x64xf32> to vector<2x8x64xf32>
    %251 = arith.addf %246, %250 : vector<2x8x64xf32>
    %252 = arith.mulf %251, %251 : vector<2x8x64xf32>
    %253 = arith.mulf %251, %252 : vector<2x8x64xf32>
    %cst_106 = arith.constant 4.471500e-02 : f32
    %254 = vector.broadcast %cst_106 : f32 to vector<2x8x64xf32>
    %255 = arith.mulf %254, %253 : vector<2x8x64xf32>
    %256 = arith.addf %251, %255 : vector<2x8x64xf32>
    %cst_107 = arith.constant 0.797884583 : f32
    %257 = vector.broadcast %cst_107 : f32 to vector<2x8x64xf32>
    %258 = arith.mulf %257, %256 : vector<2x8x64xf32>
    %259 = math.tanh %258 : vector<2x8x64xf32>
    %cst_108 = arith.constant 1.000000e+00 : f32
    %260 = vector.broadcast %cst_108 : f32 to vector<2x8x64xf32>
    %261 = arith.addf %260, %259 : vector<2x8x64xf32>
    %cst_109 = arith.constant 5.000000e-01 : f32
    %262 = vector.broadcast %cst_109 : f32 to vector<2x8x64xf32>
    %263 = arith.mulf %262, %261 : vector<2x8x64xf32>
    %264 = arith.mulf %251, %263 : vector<2x8x64xf32>
    %c1_110 = arith.constant 1 : index
    %c0_111 = arith.constant 0 : index
    %c0_112 = arith.constant 0 : index
    %265 = vector.load %arg12[%c1_110, %c0_111, %c0_112] : memref<2x64x32xf32, #tpu.memory_space<vmem>>, vector<1x64x32xf32>
    %266 = vector.shape_cast %265 : vector<1x64x32xf32> to vector<64x32xf32>
    "tpu.trace_start"() <{level = 10 : i32, message = "bsi,ih->bsh"}> : () -> ()
    %cst_113 = arith.constant dense<0.000000e+00> : vector<2x8x32xf32>
    %267 = tpu.matmul %264, %266, %cst_113 {dimension_numbers = #tpu.dot_dimension_numbers<[2], [0], [0, 1], [1], [0, 0, 0, 1, 1, 1], [], []>} : vector<2x8x64xf32>, vector<64x32xf32>, vector<2x8x32xf32> -> vector<2x8x32xf32>
    "tpu.trace_stop"() : () -> ()
    %c1_114 = arith.constant 1 : index
    %c0_115 = arith.constant 0 : index
    %c0_116 = arith.constant 0 : index
    %268 = vector.load %arg13[%c1_114, %c0_115, %c0_116] : memref<2x1x32xf32, #tpu.memory_space<vmem>>, vector<1x1x32xf32>
    %269 = vector.shape_cast %268 : vector<1x1x32xf32> to vector<1x32xf32>
    %270 = vector.shape_cast %269 : vector<1x32xf32> to vector<1x1x32xf32>
    %271 = vector.broadcast %270 : vector<1x1x32xf32> to vector<2x8x32xf32>
    %272 = arith.addf %267, %271 : vector<2x8x32xf32>
    %273 = arith.addf %243, %272 : vector<2x8x32xf32>
    %c1_117 = arith.constant 1 : index
    %c0_118 = arith.constant 0 : index
    %c0_119 = arith.constant 0 : index
    %274 = vector.load %arg14[%c1_117, %c0_118, %c0_119] : memref<2x1x32xf32, #tpu.memory_space<vmem>>, vector<1x1x32xf32>
    %275 = vector.shape_cast %274 : vector<1x1x32xf32> to vector<1x32xf32>
    %c1_120 = arith.constant 1 : index
    %c0_121 = arith.constant 0 : index
    %c0_122 = arith.constant 0 : index
    %276 = vector.load %arg15[%c1_120, %c0_121, %c0_122] : memref<2x1x32xf32, #tpu.memory_space<vmem>>, vector<1x1x32xf32>
    %277 = vector.shape_cast %276 : vector<1x1x32xf32> to vector<1x32xf32>
    %cst_123 = arith.constant dense<0.000000e+00> : vector<2x8xf32>
    %278 = vector.multi_reduction <add>, %273, %cst_123 [2] : vector<2x8x32xf32> to vector<2x8xf32>
    %279 = vector.shape_cast %278 : vector<2x8xf32> to vector<2x8x1xf32>
    %cst_124 = arith.constant 3.200000e+01 : f32
    %280 = vector.broadcast %cst_124 : f32 to vector<2x8x1xf32>
    %281 = arith.divf %279, %280 : vector<2x8x1xf32>
    %282 = vector.broadcast %281 : vector<2x8x1xf32> to vector<2x8x32xf32>
    %283 = arith.subf %273, %282 : vector<2x8x32xf32>
    %284 = arith.mulf %283, %283 : vector<2x8x32xf32>
    %cst_125 = arith.constant dense<0.000000e+00> : vector<2x8xf32>
    %285 = vector.multi_reduction <add>, %284, %cst_125 [2] : vector<2x8x32xf32> to vector<2x8xf32>
    %286 = vector.shape_cast %285 : vector<2x8xf32> to vector<2x8x1xf32>
    %cst_126 = arith.constant 3.200000e+01 : f32
    %287 = vector.broadcast %cst_126 : f32 to vector<2x8x1xf32>
    %288 = arith.divf %286, %287 : vector<2x8x1xf32>
    %289 = vector.broadcast %281 : vector<2x8x1xf32> to vector<2x8x32xf32>
    %290 = arith.subf %273, %289 : vector<2x8x32xf32>
    %cst_127 = arith.constant 9.99999974E-6 : f32
    %291 = vector.broadcast %cst_127 : f32 to vector<2x8x1xf32>
    %292 = arith.addf %288, %291 : vector<2x8x1xf32>
    %293 = math.rsqrt %292 : vector<2x8x1xf32>
    %294 = vector.broadcast %293 : vector<2x8x1xf32> to vector<2x8x32xf32>
    %295 = arith.mulf %290, %294 : vector<2x8x32xf32>
    %296 = vector.shape_cast %275 : vector<1x32xf32> to vector<1x1x32xf32>
    %297 = vector.broadcast %296 : vector<1x1x32xf32> to vector<2x8x32xf32>
    %298 = arith.mulf %295, %297 : vector<2x8x32xf32>
    %299 = vector.shape_cast %277 : vector<1x32xf32> to vector<1x1x32xf32>
    %300 = vector.broadcast %299 : vector<1x1x32xf32> to vector<2x8x32xf32>
    %301 = arith.addf %298, %300 : vector<2x8x32xf32>
    %302 = vector.extract_strided_slice %301 {offsets = [0, 0, 0], sizes = [2, 1, 32], strides = [1, 1, 1]} : vector<2x8x32xf32> to vector<2x1x32xf32>
    %303 = vector.shape_cast %302 : vector<2x1x32xf32> to vector<2x32xf32>
    %304 = vector.shape_cast %303 : vector<2x32xf32> to vector<1x2x32xf32>
    %305 = vector.shape_cast %304 : vector<1x2x32xf32> to vector<1x2x32xf32>
    %306 = vector.broadcast %305 : vector<1x2x32xf32> to vector<2x2x32xf32>
    %c0_128 = arith.constant 0 : index
    %c0_129 = arith.constant 0 : index
    %c0_130 = arith.constant 0 : index
    %307 = vector.load %arg16[%c0_128, %c0_129, %c0_130] : memref<2x32x32xf32, #tpu.memory_space<vmem>>, vector<2x32x32xf32>
    "tpu.trace_start"() <{level = 10 : i32, message = "tbh,thd->tbd"}> : () -> ()
    %cst_131 = arith.constant dense<0.000000e+00> : vector<2x2x32xf32>
    %308 = tpu.matmul %306, %307, %cst_131 {dimension_numbers = #tpu.dot_dimension_numbers<[2], [1], [1], [2], [0, 0, 0, 1, 1, 2], [0], [0]>} : vector<2x2x32xf32>, vector<2x32x32xf32>, vector<2x2x32xf32> -> vector<2x2x32xf32>
    "tpu.trace_stop"() : () -> ()
    %c0_132 = arith.constant 0 : index
    %c0_133 = arith.constant 0 : index
    %c0_134 = arith.constant 0 : index
    %309 = vector.load %arg17[%c0_132, %c0_133, %c0_134] : memref<2x1x32xf32, #tpu.memory_space<vmem>>, vector<2x1x32xf32>
    %310 = vector.broadcast %309 : vector<2x1x32xf32> to vector<2x2x32xf32>
    %311 = arith.addf %308, %310 : vector<2x2x32xf32>
    %312 = math.tanh %311 : vector<2x2x32xf32>
    %c0_135 = arith.constant 0 : index
    %c0_136 = arith.constant 0 : index
    %c0_137 = arith.constant 0 : index
    %313 = vector.load %arg18[%c0_135, %c0_136, %c0_137] : memref<2x32x3xf32, #tpu.memory_space<vmem>>, vector<2x32x3xf32>
    "tpu.trace_start"() <{level = 10 : i32, message = "tbd,tdl->tbl"}> : () -> ()
    %cst_138 = arith.constant dense<0.000000e+00> : vector<2x2x3xf32>
    %314 = tpu.matmul %312, %313, %cst_138 {dimension_numbers = #tpu.dot_dimension_numbers<[2], [1], [1], [2], [0, 0, 0, 1, 1, 2], [0], [0]>} : vector<2x2x32xf32>, vector<2x32x3xf32>, vector<2x2x3xf32> -> vector<2x2x3xf32>
    "tpu.trace_stop"() : () -> ()
    %c0_139 = arith.constant 0 : index
    %c0_140 = arith.constant 0 : index
    %c0_141 = arith.constant 0 : index
    %315 = vector.load %arg19[%c0_139, %c0_140, %c0_141] : memref<2x1x3xf32, #tpu.memory_space<vmem>>, vector<2x1x3xf32>
    %316 = vector.broadcast %315 : vector<2x1x3xf32> to vector<2x2x3xf32>
    %317 = arith.addf %314, %316 : vector<2x2x3xf32>
    %c0_142 = arith.constant 0 : index
    %c0_143 = arith.constant 0 : index
    %c0_144 = arith.constant 0 : index
    %318 = vector.load %arg20[%c0_142, %c0_143, %c0_144] : memref<2x2x3xf32, #tpu.memory_space<vmem>>, vector<2x2x3xf32>
    tpu.vector_store %arg20[%c0_142, %c0_143, %c0_144], %317 {strides = array<i32>} : memref<2x2x3xf32, #tpu.memory_space<vmem>>, vector<2x2x3xf32>,
    return
  }
}

</mosaic_0001>

<llo_original>
// kernel: roberta_merged_forward.1
$region0: #{roberta_merged_forward.1}
  #allocation0 [shape = 'u32[]', space=smem, size = 0x4, offset = 0x4, fixed_abs, tag = 'smem constant byte address 0x4 - core index']
  #allocation1 [shape = 'u32[144,128]{1,0:T(1,128)}', space=vmem, size = 0x12000, scoped, tag = 'internal scratch']
  %s0 = inlined_call_operand.vmem [shape: f32[2,8,32], index: 0, kind: input, shape index: {}]
  %s1 = inlined_call_operand.vmem [shape: f32[8,1,8], index: 1, kind: input, shape index: {}]
  %s2 = inlined_call_operand.vmem [shape: f32[1,32], index: 2, kind: input, shape index: {}]
  %s3 = inlined_call_operand.vmem [shape: f32[1,32], index: 3, kind: input, shape index: {}]
  %s4 = inlined_call_operand.vmem [shape: f32[2,32,96], index: 4, kind: input, shape index: {}]
  %s5 = inlined_call_operand.vmem [shape: f32[2,1,96], index: 5, kind: input, shape index: {}]
  %s6 = inlined_call_operand.vmem [shape: f32[2,32,32], index: 6, kind: input, shape index: {}]
  %s7 = inlined_call_operand.vmem [shape: f32[2,1,32], index: 7, kind: input, shape index: {}]
  %s8 = inlined_call_operand.vmem [shape: f32[2,1,32], index: 8, kind: input, shape index: {}]
  %s9 = inlined_call_operand.vmem [shape: f32[2,1,32], index: 9, kind: input, shape index: {}]
  %s10 = inlined_call_operand.vmem [shape: f32[2,32,64], index: 10, kind: input, shape index: {}]
  %s11 = inlined_call_operand.vmem [shape: f32[2,1,64], index: 11, kind: input, shape index: {}]
  %s12 = inlined_call_operand.vmem [shape: f32[2,64,32], index: 12, kind: input, shape index: {}]
  %s13 = inlined_call_operand.vmem [shape: f32[2,1,32], index: 13, kind: input, shape index: {}]
  %s14 = inlined_call_operand.vmem [shape: f32[2,1,32], index: 14, kind: input, shape index: {}]
  %s15 = inlined_call_operand.vmem [shape: f32[2,1,32], index: 15, kind: input, shape index: {}]
  %s16 = inlined_call_operand.vmem [shape: f32[2,32,32], index: 16, kind: input, shape index: {}]
  %s17 = inlined_call_operand.vmem [shape: f32[2,1,32], index: 17, kind: input, shape index: {}]
  %s18 = inlined_call_operand.vmem [shape: f32[2,32,3], index: 18, kind: input, shape index: {}]
  %s19 = inlined_call_operand.vmem [shape: f32[2,1,3], index: 19, kind: input, shape index: {}]
  %s20 = inlined_call_operand.vmem [shape: f32[2,2,3], index: 20, kind: output, shape index: {}]
  %s21 = sld [smem:[#allocation0]]
  $region90: #{roberta_merged_forward.1} parent=0
    _
  %s23 = ssub.s32 1, %s21
  %s24 = scalar_select 0, %s23, %s21
  // Predicated region
  $region2: #{roberta_merged_forward.1} parent=0 // pred_check
    _
  $region3: #{roberta_merged_forward.1} parent=0 // pred_check_branch
    %26 = sbr.rel (0) target = $region5
  $region4: #{roberta_merged_forward.1} parent=0 // pred_region
    _
  $region5: #{roberta_merged_forward.1} parent=0 // pred_fallthru
    _
  // Predicated region
  $region6: #{roberta_merged_forward.1} parent=0 // pred_check
    _
  $region7: #{roberta_merged_forward.1} parent=0 // pred_check_branch
    %28 = sbr.rel (0) target = $region9
  $region8: #{roberta_merged_forward.1} parent=0 // pred_region
    _
  $region9: #{roberta_merged_forward.1} parent=0 // pred_fallthru
    _
  // Predicated region
  $region10: #{roberta_merged_forward.1} parent=0 // pred_check
    _
  $region11: #{roberta_merged_forward.1} parent=0 // pred_check_branch
    %30 = sbr.rel (0) target = $region13
  $region12: #{roberta_merged_forward.1} parent=0 // pred_region
    _
  $region13: #{roberta_merged_forward.1} parent=0 // pred_fallthru
    _
  // Predicated region
  $region14: #{roberta_merged_forward.1} parent=0 // pred_check
    _
  $region15: #{roberta_merged_forward.1} parent=0 // pred_check_branch
    %32 = sbr.rel (0) target = $region17
  $region16: #{roberta_merged_forward.1} parent=0 // pred_region
    _
  $region17: #{roberta_merged_forward.1} parent=0 // pred_fallthru
    _
  // Predicated region
  $region18: #{roberta_merged_forward.1} parent=0 // pred_check
    _
  $region19: #{roberta_merged_forward.1} parent=0 // pred_check_branch
    %34 = sbr.rel (0) target = $region21
  $region20: #{roberta_merged_forward.1} parent=0 // pred_region
    _
  $region21: #{roberta_merged_forward.1} parent=0 // pred_fallthru
    _
  // Predicated region
  $region22: #{roberta_merged_forward.1} parent=0 // pred_check
    _
  $region23: #{roberta_merged_forward.1} parent=0 // pred_check_branch
    %36 = sbr.rel (0) target = $region25
  $region24: #{roberta_merged_forward.1} parent=0 // pred_region
    _
  $region25: #{roberta_merged_forward.1} parent=0 // pred_fallthru
    _
  // Predicated region
  $region26: #{roberta_merged_forward.1} parent=0 // pred_check
    _
  $region27: #{roberta_merged_forward.1} parent=0 // pred_check_branch
    %38 = sbr.rel (0) target = $region29
  $region28: #{roberta_merged_forward.1} parent=0 // pred_region
    _
  $region29: #{roberta_merged_forward.1} parent=0 // pred_fallthru
    _
  // Predicated region
  $region30: #{roberta_merged_forward.1} parent=0 // pred_check
    _
  $region31: #{roberta_merged_forward.1} parent=0 // pred_check_branch
    %40 = sbr.rel (0) target = $region33
  $region32: #{roberta_merged_forward.1} parent=0 // pred_region
    _
  $region33: #{roberta_merged_forward.1} parent=0 // pred_fallthru
    _
  // Predicated region
  $region34: #{roberta_merged_forward.1} parent=0 // pred_check
    _
  $region35: #{roberta_merged_forward.1} parent=0 // pred_check_branch
    %42 = sbr.rel (0) target = $region37
  $region36: #{roberta_merged_forward.1} parent=0 // pred_region
    _
  $region37: #{roberta_merged_forward.1} parent=0 // pred_fallthru
    _
  // Predicated region
  $region38: #{roberta_merged_forward.1} parent=0 // pred_check
    _
  $region39: #{roberta_merged_forward.1} parent=0 // pred_check_branch
    %44 = sbr.rel (0) target = $region41
  $region40: #{roberta_merged_forward.1} parent=0 // pred_region
    _
  $region41: #{roberta_merged_forward.1} parent=0 // pred_fallthru
    _
  // Predicated region
  $region42: #{roberta_merged_forward.1} parent=0 // pred_check
    _
  $region43: #{roberta_merged_forward.1} parent=0 // pred_check_branch
    %46 = sbr.rel (0) target = $region45
  $region44: #{roberta_merged_forward.1} parent=0 // pred_region
    _
  $region45: #{roberta_merged_forward.1} parent=0 // pred_fallthru
    _
  // Predicated region
  $region46: #{roberta_merged_forward.1} parent=0 // pred_check
    _
  $region47: #{roberta_merged_forward.1} parent=0 // pred_check_branch
    %48 = sbr.rel (0) target = $region49
  $region48: #{roberta_merged_forward.1} parent=0 // pred_region
    _
  $region49: #{roberta_merged_forward.1} parent=0 // pred_fallthru
    _
  // Predicated region
  $region50: #{roberta_merged_forward.1} parent=0 // pred_check
    _
  $region51: #{roberta_merged_forward.1} parent=0 // pred_check_branch
    %50 = sbr.rel (0) target = $region53
  $region52: #{roberta_merged_forward.1} parent=0 // pred_region
    _
  $region53: #{roberta_merged_forward.1} parent=0 // pred_fallthru
    _
  // Predicated region
  $region54: #{roberta_merged_forward.1} parent=0 // pred_check
    _
  $region55: #{roberta_merged_forward.1} parent=0 // pred_check_branch
    %52 = sbr.rel (0) target = $region57
  $region56: #{roberta_merged_forward.1} parent=0 // pred_region
    _
  $region57: #{roberta_merged_forward.1} parent=0 // pred_fallthru
    _
  // Predicated region
  $region58: #{roberta_merged_forward.1} parent=0 // pred_check
    _
  $region59: #{roberta_merged_forward.1} parent=0 // pred_check_branch
    %54 = sbr.rel (0) target = $region61
  $region60: #{roberta_merged_forward.1} parent=0 // pred_region
    _
  $region61: #{roberta_merged_forward.1} parent=0 // pred_fallthru
    _
  // Predicated region
  $region62: #{roberta_merged_forward.1} parent=0 // pred_check
    _
  $region63: #{roberta_merged_forward.1} parent=0 // pred_check_branch
    %56 = sbr.rel (0) target = $region65
  $region64: #{roberta_merged_forward.1} parent=0 // pred_region
    _
  $region65: #{roberta_merged_forward.1} parent=0 // pred_fallthru
    _
  // Predicated region
  $region66: #{roberta_merged_forward.1} parent=0 // pred_check
    _
  $region67: #{roberta_merged_forward.1} parent=0 // pred_check_branch
    %58 = sbr.rel (0) target = $region69
  $region68: #{roberta_merged_forward.1} parent=0 // pred_region
    _
  $region69: #{roberta_merged_forward.1} parent=0 // pred_fallthru
    _
  // Predicated region
  $region70: #{roberta_merged_forward.1} parent=0 // pred_check
    _
  $region71: #{roberta_merged_forward.1} parent=0 // pred_check_branch
    %60 = sbr.rel (0) target = $region73
  $region72: #{roberta_merged_forward.1} parent=0 // pred_region
    _
  $region73: #{roberta_merged_forward.1} parent=0 // pred_fallthru
    _
  // Predicated region
  $region74: #{roberta_merged_forward.1} parent=0 // pred_check
    _
  $region75: #{roberta_merged_forward.1} parent=0 // pred_check_branch
    %62 = sbr.rel (0) target = $region77
  $region76: #{roberta_merged_forward.1} parent=0 // pred_region
    _
  $region77: #{roberta_merged_forward.1} parent=0 // pred_fallthru
    _
  // Predicated region
  $region78: #{roberta_merged_forward.1} parent=0 // pred_check
    _
  $region79: #{roberta_merged_forward.1} parent=0 // pred_check_branch
    %64 = sbr.rel (0) target = $region81
  $region80: #{roberta_merged_forward.1} parent=0 // pred_region
    _
  $region81: #{roberta_merged_forward.1} parent=0 // pred_fallthru
    _
  %v65 = vld [vmem:[%s0] sm:$0xff]
  %v66 = vld [vmem:[%s0 + $0x8] sm:$0xff]
  %v67 = vld [vmem:[%s2] sm:$0x1]
  %v68 = vld [vmem:[%s3] sm:$0x1]
  %vm69 = vcmask 261120
  %v70 = vsel %vm69, %v65, 0.0
  %71 = vadd.xlane.f32.xlu0 %v70
  %v72 = vpop.xlane.xlu0 %71
  %v73 = vsel %vm69, %v66, 0.0
  %74 = vadd.xlane.f32.xlu0 %v73
  %v75 = vpop.xlane.xlu0 %74
  %v76 = vrcp.pop 32.0
  %v77 = vmul.f32 %v72, %v76
  %v78 = vmul.f32 %v75, %v76
  %v79 = vsub.f32 %v65, %v77
  %v80 = vsub.f32 %v66, %v78
  %v81 = vmul.f32 %v79, %v79
  %v82 = vmul.f32 %v80, %v80
  %v83 = vsel %vm69, %v81, 0.0
  %84 = vadd.xlane.f32.xlu0 %v83
  %v85 = vpop.xlane.xlu0 %84
  %v86 = vsel %vm69, %v82, 0.0
  %87 = vadd.xlane.f32.xlu0 %v86
  %v88 = vpop.xlane.xlu0 %87
  %v89 = vmul.f32 %v85, %v76
  %v90 = vmul.f32 %v88, %v76
  %v91 = vadd.f32 %v89, 1e-05
  %v92 = vadd.f32 %v90, 1e-05
  %v93 = vrsqrt.pop %v91
  %v94 = vrsqrt.pop %v92
  %v95 = vmul.f32 %v79, %v93
  %v96 = vmul.f32 %v80, %v94
  %v98 = vlaneseq
  %v99 = vshrl.u32 %v98, 7
  %v100 = vsub.s32 0, %v99
  %v101 = vrot.slane %v67, %v100
  %v103 = vmul.f32 %v95, %v101
  %v104 = vmul.f32 %v96, %v101
  %v106 = vlaneseq
  %v107 = vshrl.u32 %v106, 7
  %v108 = vsub.s32 0, %v107
  %v109 = vrot.slane %v68, %v108
  %v111 = vadd.f32 %v103, %v109
  %v112 = vadd.f32 %v104, %v109
  %v113 = vld [vmem:[%s1] sm:$0x1]
  %v114 = vld [vmem:[%s1 + $0x1] sm:$0x1]
  %v115 = vld [vmem:[%s1 + $0x2] sm:$0x1]
  %v116 = vld [vmem:[%s1 + $0x3] sm:$0x1]
  %v117 = vld [vmem:[%s1 + $0x4] sm:$0x1]
  %v118 = vld [vmem:[%s1 + $0x5] sm:$0x1]
  %v119 = vld [vmem:[%s1 + $0x6] sm:$0x1]
  %v120 = vld [vmem:[%s1 + $0x7] sm:$0x1]
  %v121 = vld [vmem:[%s4] sm:$0xff]
  %v122 = vld [vmem:[%s4 + $0x8] sm:$0xff]
  %v123 = vld [vmem:[%s4 + $0x10] sm:$0xff]
  %v124 = vld [vmem:[%s4 + $0x18] sm:$0xff]
  %v125 = vld [vmem:[%s5] sm:$0x1]
  %v127 = vlaneseq
  %v128 = vshrl.u32 %v127, 7
  %v129 = vsub.s32 0, %v128
  %v130 = vrot.slane %v125, %v129
  %v133 = vsel %vm69, %v111, 0
  %v136 = vsel %vm69, %v112, 0
  %138 = vmatprep.subr.mxu0 0.0
  %139 = vmatpush1.msra.mxu0 0.0
  %140 = vmatprep.subr.mxu0 0.0
  %141 = vmatpush1.msra.mxu0 0.0
  %142 = vmatprep.subr.mxu0 0.0
  %143 = vmatpush1.msra.mxu0 0.0
  %144 = vmatprep.subr.mxu0 0.0
  %145 = vmatpush1.msra.mxu0 0.0
  %146 = vmatprep.subr.mxu0 0.0
  %147 = vmatpush1.msra.mxu0 0.0
  %148 = vmatprep.subr.mxu0 0.0
  %149 = vmatpush1.msra.mxu0 0.0
  %150 = vmatprep.subr.mxu0 0.0
  %151 = vmatpush1.msra.mxu0 0.0
  %152 = vmatprep.subr.mxu0 0.0
  %153 = vmatpush1.msra.mxu0 0.0
  %154 = vmatprep.subr.mxu0 0.0
  %155 = vmatpush1.msra.mxu0 0.0
  %156 = vmatprep.subr.mxu0 0.0
  %157 = vmatpush1.msra.mxu0 0.0
  %158 = vmatprep.subr.mxu0 0.0
  %159 = vmatpush1.msra.mxu0 0.0
  %160 = vmatprep.subr.mxu0 0.0
  %161 = vmatpush1.msra.mxu0 0.0
  %162 = vmatprep.subr.mxu0 0.0
  %163 = vmatpush1.msra.mxu0 %v124
  %164 = vmatprep.subr.mxu0 0.0
  %165 = vmatpush1.msra.mxu0 %v123
  %166 = vmatprep.subr.mxu0 0.0
  %167 = vmatpush1.msra.mxu0 %v122
  %168 = vmatprep.subr.mxu0 0.0
  %169 = vmatpush1.msra.mxu0 %v121
  %170 = vmatprep.subr.mxu0 0.0
  %171 = vmatpush2.msra.mxu0 0.0
  %172 = vmatprep.subr.mxu0 0.0
  %173 = vmatpush2.msra.mxu0 0.0
  %174 = vmatprep.subr.mxu0 0.0
  %175 = vmatpush2.msra.mxu0 0.0
  %176 = vmatprep.subr.mxu0 0.0
  %177 = vmatpush2.msra.mxu0 0.0
  %178 = vmatprep.subr.mxu0 0.0
  %179 = vmatpush2.msra.mxu0 0.0
  %180 = vmatprep.subr.mxu0 0.0
  %181 = vmatpush2.msra.mxu0 0.0
  %182 = vmatprep.subr.mxu0 0.0
  %183 = vmatpush2.msra.mxu0 0.0
  %184 = vmatprep.subr.mxu0 0.0
  %185 = vmatpush2.msra.mxu0 0.0
  %186 = vmatprep.subr.mxu0 0.0
  %187 = vmatpush2.msra.mxu0 0.0
  %188 = vmatprep.subr.mxu0 0.0
  %189 = vmatpush2.msra.mxu0 0.0
  %190 = vmatprep.subr.mxu0 0.0
  %191 = vmatpush2.msra.mxu0 0.0
  %192 = vmatprep.subr.mxu0 0.0
  %193 = vmatpush2.msra.mxu0 0.0
  %194 = vmatprep.subr.mxu0 0.0
  %195 = vmatpush2.msra.mxu0 0.0
  %196 = vmatprep.subr.mxu0 0.0
  %197 = vmatpush2.msra.mxu0 0.0
  %198 = vmatprep.subr.mxu0 0.0
  %199 = vmatpush2.msra.mxu0 0.0
  %200 = vmatprep.subr.mxu0 0.0
  %201 = vmatpush2.msra.mxu0 0.0
  %202 = vmatprep.mubr.f32.mxu0 0.0
  %203 = vmatmul.mubr.f32.gmra.mxu0 %v133
  %v204 = vpop.f32.mrf.mxu0
  %v205 = vadd.f32 %v130, %v204
  %v206 = vpop.f32.mrf.mxu0
  %207 = vmatprep.mubr.f32.mxu0 0.0
  %208 = vmatmul.mubr.f32.gmra.mxu0 %v136
  %v209 = vpop.f32.mrf.mxu0
  %v210 = vadd.f32 %v130, %v209
  %v211 = vpop.f32.mrf.mxu0
  %212 = vdwg.mxu0
  %215 = vrot.lane.b32.xlu0 %v205, 120
  %v216 = vpop.permute.xlu0 %215
  %217 = vrot.lane.b32.xlu0 %v210, 120
  %v218 = vpop.permute.xlu0 %217
  %219 = vrot.lane.b32.xlu0 %v205, 112
  %v220 = vpop.permute.xlu0 %219
  %221 = vrot.lane.b32.xlu0 %v210, 112
  %v222 = vpop.permute.xlu0 %221
  %223 = vrot.lane.b32.xlu0 %v205, 104
  %v224 = vpop.permute.xlu0 %223
  %225 = vrot.lane.b32.xlu0 %v210, 104
  %v226 = vpop.permute.xlu0 %225
  %v235 = vlaneseq
  %v236 = vshrl.u32 %v235, 7
  %v237 = vsub.s32 0, %v236
  %v238 = vrot.slane %v113, %v237
  %v239 = vlaneseq
  %v240 = vshrl.u32 %v239, 7
  %v241 = vsub.s32 0, %v240
  %v242 = vrot.slane %v114, %v241
  %v243 = vlaneseq
  %v244 = vshrl.u32 %v243, 7
  %v245 = vsub.s32 0, %v244
  %v246 = vrot.slane %v115, %v245
  %v247 = vlaneseq
  %v248 = vshrl.u32 %v247, 7
  %v249 = vsub.s32 0, %v248
  %v250 = vrot.slane %v116, %v249
  %v251 = vlaneseq
  %v252 = vshrl.u32 %v251, 7
  %v253 = vsub.s32 0, %v252
  %v254 = vrot.slane %v117, %v253
  %v255 = vlaneseq
  %v256 = vshrl.u32 %v255, 7
  %v257 = vsub.s32 0, %v256
  %v258 = vrot.slane %v118, %v257
  %v259 = vlaneseq
  %v260 = vshrl.u32 %v259, 7
  %v261 = vsub.s32 0, %v260
  %v262 = vrot.slane %v119, %v261
  %v263 = vlaneseq
  %v264 = vshrl.u32 %v263, 7
  %v265 = vsub.s32 0, %v264
  %v266 = vrot.slane %v120, %v265
  %275 = vrot.lane.b32.xlu0 %v205, 96
  %v276 = vpop.permute.xlu0 %275
  %vm277 = vcmask 64512
  %v278 = vsel %vm277, %v205, 0
  %v280 = vsel %vm277, %v276, 0
  %282 = vmatprep.subr.mxu0 0.0
  %283 = vmatpush1.xpose.msra.mxu0 0.0
  %284 = vmatprep.subr.mxu0 0.0
  %285 = vmatpush1.xpose.msra.mxu0 0.0
  %286 = vmatprep.subr.mxu0 0.0
  %287 = vmatpush1.xpose.msra.mxu0 0.0
  %288 = vmatprep.subr.mxu0 0.0
  %289 = vmatpush1.xpose.msra.mxu0 0.0
  %290 = vmatprep.subr.mxu0 0.0
  %291 = vmatpush1.xpose.msra.mxu0 0.0
  %292 = vmatprep.subr.mxu0 0.0
  %293 = vmatpush1.xpose.msra.mxu0 0.0
  %294 = vmatprep.subr.mxu0 0.0
  %295 = vmatpush1.xpose.msra.mxu0 0.0
  %296 = vmatprep.subr.mxu0 0.0
  %297 = vmatpush1.xpose.msra.mxu0 0.0
  %298 = vmatprep.subr.mxu0 0.0
  %299 = vmatpush1.xpose.msra.mxu0 0.0
  %300 = vmatprep.subr.mxu0 0.0
  %301 = vmatpush1.xpose.msra.mxu0 0.0
  %302 = vmatprep.subr.mxu0 0.0
  %303 = vmatpush1.xpose.msra.mxu0 0.0
  %304 = vmatprep.subr.mxu0 0.0
  %305 = vmatpush1.xpose.msra.mxu0 0.0
  %306 = vmatprep.subr.mxu0 0.0
  %307 = vmatpush1.xpose.msra.mxu0 0.0
  %308 = vmatprep.subr.mxu0 0.0
  %309 = vmatpush1.xpose.msra.mxu0 0.0
  %310 = vmatprep.subr.mxu0 0.0
  %311 = vmatpush1.xpose.msra.mxu0 0.0
  %312 = vmatprep.subr.mxu0 0.0
  %313 = vmatpush1.xpose.msra.mxu0 %v280
  %314 = vmatprep.subr.mxu0 0.0
  %315 = vmatpush2.xpose.msra.mxu0 0.0
  %316 = vmatprep.subr.mxu0 0.0
  %317 = vmatpush2.xpose.msra.mxu0 0.0
  %318 = vmatprep.subr.mxu0 0.0
  %319 = vmatpush2.xpose.msra.mxu0 0.0
  %320 = vmatprep.subr.mxu0 0.0
  %321 = vmatpush2.xpose.msra.mxu0 0.0
  %322 = vmatprep.subr.mxu0 0.0
  %323 = vmatpush2.xpose.msra.mxu0 0.0
  %324 = vmatprep.subr.mxu0 0.0
  %325 = vmatpush2.xpose.msra.mxu0 0.0
  %326 = vmatprep.subr.mxu0 0.0
  %327 = vmatpush2.xpose.msra.mxu0 0.0
  %328 = vmatprep.subr.mxu0 0.0
  %329 = vmatpush2.xpose.msra.mxu0 0.0
  %330 = vmatprep.subr.mxu0 0.0
  %331 = vmatpush2.xpose.msra.mxu0 0.0
  %332 = vmatprep.subr.mxu0 0.0
  %333 = vmatpush2.xpose.msra.mxu0 0.0
  %334 = vmatprep.subr.mxu0 0.0
  %335 = vmatpush2.xpose.msra.mxu0 0.0
  %336 = vmatprep.subr.mxu0 0.0
  %337 = vmatpush2.xpose.msra.mxu0 0.0
  %338 = vmatprep.subr.mxu0 0.0
  %339 = vmatpush2.xpose.msra.mxu0 0.0
  %340 = vmatprep.subr.mxu0 0.0
  %341 = vmatpush2.xpose.msra.mxu0 0.0
  %342 = vmatprep.subr.mxu0 0.0
  %343 = vmatpush2.xpose.msra.mxu0 0.0
  %344 = vmatprep.subr.mxu0 0.0
  %345 = vmatpush2.xpose.msra.mxu0 0.0
  %346 = vmatprep.mubr.f32.mxu0 0.0
  %347 = vmatmul.mubr.f32.gmra.mxu0 %v278
  %v348 = vpop.f32.mrf.mxu0
  %v349 = vadd.f32 %v238, %v348
  %v350 = vpop.f32.mrf.mxu0
  %351 = vdwg.mxu0
  %352 = vrot.lane.b32.xlu0 %v210, 96
  %v353 = vpop.permute.xlu0 %352
  %v354 = vsel %vm277, %v210, 0
  %v356 = vsel %vm277, %v353, 0
  %358 = vmatprep.subr.mxu0 0.0
  %359 = vmatpush1.xpose.msra.mxu0 0.0
  %360 = vmatprep.subr.mxu0 0.0
  %361 = vmatpush1.xpose.msra.mxu0 0.0
  %362 = vmatprep.subr.mxu0 0.0
  %363 = vmatpush1.xpose.msra.mxu0 0.0
  %364 = vmatprep.subr.mxu0 0.0
  %365 = vmatpush1.xpose.msra.mxu0 0.0
  %366 = vmatprep.subr.mxu0 0.0
  %367 = vmatpush1.xpose.msra.mxu0 0.0
  %368 = vmatprep.subr.mxu0 0.0
  %369 = vmatpush1.xpose.msra.mxu0 0.0
  %370 = vmatprep.subr.mxu0 0.0
  %371 = vmatpush1.xpose.msra.mxu0 0.0
  %372 = vmatprep.subr.mxu0 0.0
  %373 = vmatpush1.xpose.msra.mxu0 0.0
  %374 = vmatprep.subr.mxu0 0.0
  %375 = vmatpush1.xpose.msra.mxu0 0.0
  %376 = vmatprep.subr.mxu0 0.0
  %377 = vmatpush1.xpose.msra.mxu0 0.0
  %378 = vmatprep.subr.mxu0 0.0
  %379 = vmatpush1.xpose.msra.mxu0 0.0
  %380 = vmatprep.subr.mxu0 0.0
  %381 = vmatpush1.xpose.msra.mxu0 0.0
  %382 = vmatprep.subr.mxu0 0.0
  %383 = vmatpush1.xpose.msra.mxu0 0.0
  %384 = vmatprep.subr.mxu0 0.0
  %385 = vmatpush1.xpose.msra.mxu0 0.0
  %386 = vmatprep.subr.mxu0 0.0
  %387 = vmatpush1.xpose.msra.mxu0 0.0
  %388 = vmatprep.subr.mxu0 0.0
  %389 = vmatpush1.xpose.msra.mxu0 %v356
  %390 = vmatprep.subr.mxu0 0.0
  %391 = vmatpush2.xpose.msra.mxu0 0.0
  %392 = vmatprep.subr.mxu0 0.0
  %393 = vmatpush2.xpose.msra.mxu0 0.0
  %394 = vmatprep.subr.mxu0 0.0
  %395 = vmatpush2.xpose.msra.mxu0 0.0
  %396 = vmatprep.subr.mxu0 0.0
  %397 = vmatpush2.xpose.msra.mxu0 0.0
  %398 = vmatprep.subr.mxu0 0.0
  %399 = vmatpush2.xpose.msra.mxu0 0.0
  %400 = vmatprep.subr.mxu0 0.0
  %401 = vmatpush2.xpose.msra.mxu0 0.0
  %402 = vmatprep.subr.mxu0 0.0
  %403 = vmatpush2.xpose.msra.mxu0 0.0
  %404 = vmatprep.subr.mxu0 0.0
  %405 = vmatpush2.xpose.msra.mxu0 0.0
  %406 = vmatprep.subr.mxu0 0.0
  %407 = vmatpush2.xpose.msra.mxu0 0.0
  %408 = vmatprep.subr.mxu0 0.0
  %409 = vmatpush2.xpose.msra.mxu0 0.0
  %410 = vmatprep.subr.mxu0 0.0
  %411 = vmatpush2.xpose.msra.mxu0 0.0
  %412 = vmatprep.subr.mxu0 0.0
  %413 = vmatpush2.xpose.msra.mxu0 0.0
  %414 = vmatprep.subr.mxu0 0.0
  %415 = vmatpush2.xpose.msra.mxu0 0.0
  %416 = vmatprep.subr.mxu0 0.0
  %417 = vmatpush2.xpose.msra.mxu0 0.0
  %418 = vmatprep.subr.mxu0 0.0
  %419 = vmatpush2.xpose.msra.mxu0 0.0
  %420 = vmatprep.subr.mxu0 0.0
  %421 = vmatpush2.xpose.msra.mxu0 0.0
  %422 = vmatprep.mubr.f32.mxu0 0.0
  %423 = vmatmul.mubr.f32.gmra.mxu0 %v354
  %v424 = vpop.f32.mrf.mxu0
  %v425 = vadd.f32 %v242, %v424
  %v426 = vpop.f32.mrf.mxu0
  %427 = vdwg.mxu0
  %428 = vrot.lane.b32.xlu0 %v216, 96
  %v429 = vpop.permute.xlu0 %428
  %v430 = vsel %vm277, %v216, 0
  %v432 = vsel %vm277, %v429, 0
  %434 = vmatprep.subr.mxu0 0.0
  %435 = vmatpush1.xpose.msra.mxu0 0.0
  %436 = vmatprep.subr.mxu0 0.0
  %437 = vmatpush1.xpose.msra.mxu0 0.0
  %438 = vmatprep.subr.mxu0 0.0
  %439 = vmatpush1.xpose.msra.mxu0 0.0
  %440 = vmatprep.subr.mxu0 0.0
  %441 = vmatpush1.xpose.msra.mxu0 0.0
  %442 = vmatprep.subr.mxu0 0.0
  %443 = vmatpush1.xpose.msra.mxu0 0.0
  %444 = vmatprep.subr.mxu0 0.0
  %445 = vmatpush1.xpose.msra.mxu0 0.0
  %446 = vmatprep.subr.mxu0 0.0
  %447 = vmatpush1.xpose.msra.mxu0 0.0
  %448 = vmatprep.subr.mxu0 0.0
  %449 = vmatpush1.xpose.msra.mxu0 0.0
  %450 = vmatprep.subr.mxu0 0.0
  %451 = vmatpush1.xpose.msra.mxu0 0.0
  %452 = vmatprep.subr.mxu0 0.0
  %453 = vmatpush1.xpose.msra.mxu0 0.0
  %454 = vmatprep.subr.mxu0 0.0
  %455 = vmatpush1.xpose.msra.mxu0 0.0
  %456 = vmatprep.subr.mxu0 0.0
  %457 = vmatpush1.xpose.msra.mxu0 0.0
  %458 = vmatprep.subr.mxu0 0.0
  %459 = vmatpush1.xpose.msra.mxu0 0.0
  %460 = vmatprep.subr.mxu0 0.0
  %461 = vmatpush1.xpose.msra.mxu0 0.0
  %462 = vmatprep.subr.mxu0 0.0
  %463 = vmatpush1.xpose.msra.mxu0 0.0
  %464 = vmatprep.subr.mxu0 0.0
  %465 = vmatpush1.xpose.msra.mxu0 %v432
  %466 = vmatprep.subr.mxu0 0.0
  %467 = vmatpush2.xpose.msra.mxu0 0.0
  %468 = vmatprep.subr.mxu0 0.0
  %469 = vmatpush2.xpose.msra.mxu0 0.0
  %470 = vmatprep.subr.mxu0 0.0
  %471 = vmatpush2.xpose.msra.mxu0 0.0
  %472 = vmatprep.subr.mxu0 0.0
  %473 = vmatpush2.xpose.msra.mxu0 0.0
  %474 = vmatprep.subr.mxu0 0.0
  %475 = vmatpush2.xpose.msra.mxu0 0.0
  %476 = vmatprep.subr.mxu0 0.0
  %477 = vmatpush2.xpose.msra.mxu0 0.0
  %478 = vmatprep.subr.mxu0 0.0
  %479 = vmatpush2.xpose.msra.mxu0 0.0
  %480 = vmatprep.subr.mxu0 0.0
  %481 = vmatpush2.xpose.msra.mxu0 0.0
  %482 = vmatprep.subr.mxu0 0.0
  %483 = vmatpush2.xpose.msra.mxu0 0.0
  %484 = vmatprep.subr.mxu0 0.0
  %485 = vmatpush2.xpose.msra.mxu0 0.0
  %486 = vmatprep.subr.mxu0 0.0
  %487 = vmatpush2.xpose.msra.mxu0 0.0
  %488 = vmatprep.subr.mxu0 0.0
  %489 = vmatpush2.xpose.msra.mxu0 0.0
  %490 = vmatprep.subr.mxu0 0.0
  %491 = vmatpush2.xpose.msra.mxu0 0.0
  %492 = vmatprep.subr.mxu0 0.0
  %493 = vmatpush2.xpose.msra.mxu0 0.0
  %494 = vmatprep.subr.mxu0 0.0
  %495 = vmatpush2.xpose.msra.mxu0 0.0
  %496 = vmatprep.subr.mxu0 0.0
  %497 = vmatpush2.xpose.msra.mxu0 0.0
  %498 = vmatprep.mubr.f32.mxu0 0.0
  %499 = vmatmul.mubr.f32.gmra.mxu0 %v430
  %v500 = vpop.f32.mrf.mxu0
  %v501 = vadd.f32 %v246, %v500
  %v502 = vpop.f32.mrf.mxu0
  %503 = vdwg.mxu0
  %504 = vrot.lane.b32.xlu0 %v218, 96
  %v505 = vpop.permute.xlu0 %504
  %v506 = vsel %vm277, %v218, 0
  %v508 = vsel %vm277, %v505, 0
  %510 = vmatprep.subr.mxu0 0.0
  %511 = vmatpush1.xpose.msra.mxu0 0.0
  %512 = vmatprep.subr.mxu0 0.0
  %513 = vmatpush1.xpose.msra.mxu0 0.0
  %514 = vmatprep.subr.mxu0 0.0
  %515 = vmatpush1.xpose.msra.mxu0 0.0
  %516 = vmatprep.subr.mxu0 0.0
  %517 = vmatpush1.xpose.msra.mxu0 0.0
  %518 = vmatprep.subr.mxu0 0.0
  %519 = vmatpush1.xpose.msra.mxu0 0.0
  %520 = vmatprep.subr.mxu0 0.0
  %521 = vmatpush1.xpose.msra.mxu0 0.0
  %522 = vmatprep.subr.mxu0 0.0
  %523 = vmatpush1.xpose.msra.mxu0 0.0
  %524 = vmatprep.subr.mxu0 0.0
  %525 = vmatpush1.xpose.msra.mxu0 0.0
  %526 = vmatprep.subr.mxu0 0.0
  %527 = vmatpush1.xpose.msra.mxu0 0.0
  %528 = vmatprep.subr.mxu0 0.0
  %529 = vmatpush1.xpose.msra.mxu0 0.0
  %530 = vmatprep.subr.mxu0 0.0
  %531 = vmatpush1.xpose.msra.mxu0 0.0
  %532 = vmatprep.subr.mxu0 0.0
  %533 = vmatpush1.xpose.msra.mxu0 0.0
  %534 = vmatprep.subr.mxu0 0.0
  %535 = vmatpush1.xpose.msra.mxu0 0.0
  %536 = vmatprep.subr.mxu0 0.0
  %537 = vmatpush1.xpose.msra.mxu0 0.0
  %538 = vmatprep.subr.mxu0 0.0
  %539 = vmatpush1.xpose.msra.mxu0 0.0
  %540 = vmatprep.subr.mxu0 0.0
  %541 = vmatpush1.xpose.msra.mxu0 %v508
  %542 = vmatprep.subr.mxu0 0.0
  %543 = vmatpush2.xpose.msra.mxu0 0.0
  %544 = vmatprep.subr.mxu0 0.0
  %545 = vmatpush2.xpose.msra.mxu0 0.0
  %546 = vmatprep.subr.mxu0 0.0
  %547 = vmatpush2.xpose.msra.mxu0 0.0
  %548 = vmatprep.subr.mxu0 0.0
  %549 = vmatpush2.xpose.msra.mxu0 0.0
  %550 = vmatprep.subr.mxu0 0.0
  %551 = vmatpush2.xpose.msra.mxu0 0.0
  %552 = vmatprep.subr.mxu0 0.0
  %553 = vmatpush2.xpose.msra.mxu0 0.0
  %554 = vmatprep.subr.mxu0 0.0
  %555 = vmatpush2.xpose.msra.mxu0 0.0
  %556 = vmatprep.subr.mxu0 0.0
  %557 = vmatpush2.xpose.msra.mxu0 0.0
  %558 = vmatprep.subr.mxu0 0.0
  %559 = vmatpush2.xpose.msra.mxu0 0.0
  %560 = vmatprep.subr.mxu0 0.0
  %561 = vmatpush2.xpose.msra.mxu0 0.0
  %562 = vmatprep.subr.mxu0 0.0
  %563 = vmatpush2.xpose.msra.mxu0 0.0
  %564 = vmatprep.subr.mxu0 0.0
  %565 = vmatpush2.xpose.msra.mxu0 0.0
  %566 = vmatprep.subr.mxu0 0.0
  %567 = vmatpush2.xpose.msra.mxu0 0.0
  %568 = vmatprep.subr.mxu0 0.0
  %569 = vmatpush2.xpose.msra.mxu0 0.0
  %570 = vmatprep.subr.mxu0 0.0
  %571 = vmatpush2.xpose.msra.mxu0 0.0
  %572 = vmatprep.subr.mxu0 0.0
  %573 = vmatpush2.xpose.msra.mxu0 0.0
  %574 = vmatprep.mubr.f32.mxu0 0.0
  %575 = vmatmul.mubr.f32.gmra.mxu0 %v506
  %v576 = vpop.f32.mrf.mxu0
  %v577 = vadd.f32 %v250, %v576
  %v578 = vpop.f32.mrf.mxu0
  %579 = vdwg.mxu0
  %580 = vrot.lane.b32.xlu0 %v220, 96
  %v581 = vpop.permute.xlu0 %580
  %v582 = vsel %vm277, %v220, 0
  %v584 = vsel %vm277, %v581, 0
  %586 = vmatprep.subr.mxu0 0.0
  %587 = vmatpush1.xpose.msra.mxu0 0.0
  %588 = vmatprep.subr.mxu0 0.0
  %589 = vmatpush1.xpose.msra.mxu0 0.0
  %590 = vmatprep.subr.mxu0 0.0
  %591 = vmatpush1.xpose.msra.mxu0 0.0
  %592 = vmatprep.subr.mxu0 0.0
  %593 = vmatpush1.xpose.msra.mxu0 0.0
  %594 = vmatprep.subr.mxu0 0.0
  %595 = vmatpush1.xpose.msra.mxu0 0.0
  %596 = vmatprep.subr.mxu0 0.0
  %597 = vmatpush1.xpose.msra.mxu0 0.0
  %598 = vmatprep.subr.mxu0 0.0
  %599 = vmatpush1.xpose.msra.mxu0 0.0
  %600 = vmatprep.subr.mxu0 0.0
  %601 = vmatpush1.xpose.msra.mxu0 0.0
  %602 = vmatprep.subr.mxu0 0.0
  %603 = vmatpush1.xpose.msra.mxu0 0.0
  %604 = vmatprep.subr.mxu0 0.0
  %605 = vmatpush1.xpose.msra.mxu0 0.0
  %606 = vmatprep.subr.mxu0 0.0
  %607 = vmatpush1.xpose.msra.mxu0 0.0
  %608 = vmatprep.subr.mxu0 0.0
  %609 = vmatpush1.xpose.msra.mxu0 0.0
  %610 = vmatprep.subr.mxu0 0.0
  %611 = vmatpush1.xpose.msra.mxu0 0.0
  %612 = vmatprep.subr.mxu0 0.0
  %613 = vmatpush1.xpose.msra.mxu0 0.0
  %614 = vmatprep.subr.mxu0 0.0
  %615 = vmatpush1.xpose.msra.mxu0 0.0
  %616 = vmatprep.subr.mxu0 0.0
  %617 = vmatpush1.xpose.msra.mxu0 %v584
  %618 = vmatprep.subr.mxu0 0.0
  %619 = vmatpush2.xpose.msra.mxu0 0.0
  %620 = vmatprep.subr.mxu0 0.0
  %621 = vmatpush2.xpose.msra.mxu0 0.0
  %622 = vmatprep.subr.mxu0 0.0
  %623 = vmatpush2.xpose.msra.mxu0 0.0
  %624 = vmatprep.subr.mxu0 0.0
  %625 = vmatpush2.xpose.msra.mxu0 0.0
  %626 = vmatprep.subr.mxu0 0.0
  %627 = vmatpush2.xpose.msra.mxu0 0.0
  %628 = vmatprep.subr.mxu0 0.0
  %629 = vmatpush2.xpose.msra.mxu0 0.0
  %630 = vmatprep.subr.mxu0 0.0
  %631 = vmatpush2.xpose.msra.mxu0 0.0
  %632 = vmatprep.subr.mxu0 0.0
  %633 = vmatpush2.xpose.msra.mxu0 0.0
  %634 = vmatprep.subr.mxu0 0.0
  %635 = vmatpush2.xpose.msra.mxu0 0.0
  %636 = vmatprep.subr.mxu0 0.0
  %637 = vmatpush2.xpose.msra.mxu0 0.0
  %638 = vmatprep.subr.mxu0 0.0
  %639 = vmatpush2.xpose.msra.mxu0 0.0
  %640 = vmatprep.subr.mxu0 0.0
  %641 = vmatpush2.xpose.msra.mxu0 0.0
  %642 = vmatprep.subr.mxu0 0.0
  %643 = vmatpush2.xpose.msra.mxu0 0.0
  %644 = vmatprep.subr.mxu0 0.0
  %645 = vmatpush2.xpose.msra.mxu0 0.0
  %646 = vmatprep.subr.mxu0 0.0
  %647 = vmatpush2.xpose.msra.mxu0 0.0
  %648 = vmatprep.subr.mxu0 0.0
  %649 = vmatpush2.xpose.msra.mxu0 0.0
  %650 = vmatprep.mubr.f32.mxu0 0.0
  %651 = vmatmul.mubr.f32.gmra.mxu0 %v582
  %v652 = vpop.f32.mrf.mxu0
  %v653 = vadd.f32 %v254, %v652
  %v654 = vpop.f32.mrf.mxu0
  %655 = vdwg.mxu0
  %656 = vrot.lane.b32.xlu0 %v222, 96
  %v657 = vpop.permute.xlu0 %656
  %v658 = vsel %vm277, %v222, 0
  %v660 = vsel %vm277, %v657, 0
  %662 = vmatprep.subr.mxu0 0.0
  %663 = vmatpush1.xpose.msra.mxu0 0.0
  %664 = vmatprep.subr.mxu0 0.0
  %665 = vmatpush1.xpose.msra.mxu0 0.0
  %666 = vmatprep.subr.mxu0 0.0
  %667 = vmatpush1.xpose.msra.mxu0 0.0
  %668 = vmatprep.subr.mxu0 0.0
  %669 = vmatpush1.xpose.msra.mxu0 0.0
  %670 = vmatprep.subr.mxu0 0.0
  %671 = vmatpush1.xpose.msra.mxu0 0.0
  %672 = vmatprep.subr.mxu0 0.0
  %673 = vmatpush1.xpose.msra.mxu0 0.0
  %674 = vmatprep.subr.mxu0 0.0
  %675 = vmatpush1.xpose.msra.mxu0 0.0
  %676 = vmatprep.subr.mxu0 0.0
  %677 = vmatpush1.xpose.msra.mxu0 0.0
  %678 = vmatprep.subr.mxu0 0.0
  %679 = vmatpush1.xpose.msra.mxu0 0.0
  %680 = vmatprep.subr.mxu0 0.0
  %681 = vmatpush1.xpose.msra.mxu0 0.0
  %682 = vmatprep.subr.mxu0 0.0
  %683 = vmatpush1.xpose.msra.mxu0 0.0
  %684 = vmatprep.subr.mxu0 0.0
  %685 = vmatpush1.xpose.msra.mxu0 0.0
  %686 = vmatprep.subr.mxu0 0.0
  %687 = vmatpush1.xpose.msra.mxu0 0.0
  %688 = vmatprep.subr.mxu0 0.0
  %689 = vmatpush1.xpose.msra.mxu0 0.0
  %690 = vmatprep.subr.mxu0 0.0
  %691 = vmatpush1.xpose.msra.mxu0 0.0
  %692 = vmatprep.subr.mxu0 0.0
  %693 = vmatpush1.xpose.msra.mxu0 %v660
  %694 = vmatprep.subr.mxu0 0.0
  %695 = vmatpush2.xpose.msra.mxu0 0.0
  %696 = vmatprep.subr.mxu0 0.0
  %697 = vmatpush2.xpose.msra.mxu0 0.0
  %698 = vmatprep.subr.mxu0 0.0
  %699 = vmatpush2.xpose.msra.mxu0 0.0
  %700 = vmatprep.subr.mxu0 0.0
  %701 = vmatpush2.xpose.msra.mxu0 0.0
  %702 = vmatprep.subr.mxu0 0.0
  %703 = vmatpush2.xpose.msra.mxu0 0.0
  %704 = vmatprep.subr.mxu0 0.0
  %705 = vmatpush2.xpose.msra.mxu0 0.0
  %706 = vmatprep.subr.mxu0 0.0
  %707 = vmatpush2.xpose.msra.mxu0 0.0
  %708 = vmatprep.subr.mxu0 0.0
  %709 = vmatpush2.xpose.msra.mxu0 0.0
  %710 = vmatprep.subr.mxu0 0.0
  %711 = vmatpush2.xpose.msra.mxu0 0.0
  %712 = vmatprep.subr.mxu0 0.0
  %713 = vmatpush2.xpose.msra.mxu0 0.0
  %714 = vmatprep.subr.mxu0 0.0
  %715 = vmatpush2.xpose.msra.mxu0 0.0
  %716 = vmatprep.subr.mxu0 0.0
  %717 = vmatpush2.xpose.msra.mxu0 0.0
  %718 = vmatprep.subr.mxu0 0.0
  %719 = vmatpush2.xpose.msra.mxu0 0.0
  %720 = vmatprep.subr.mxu0 0.0
  %721 = vmatpush2.xpose.msra.mxu0 0.0
  %722 = vmatprep.subr.mxu0 0.0
  %723 = vmatpush2.xpose.msra.mxu0 0.0
  %724 = vmatprep.subr.mxu0 0.0
  %725 = vmatpush2.xpose.msra.mxu0 0.0
  %726 = vmatprep.mubr.f32.mxu0 0.0
  %727 = vmatmul.mubr.f32.gmra.mxu0 %v658
  %v728 = vpop.f32.mrf.mxu0
  %v729 = vadd.f32 %v258, %v728
  %v730 = vpop.f32.mrf.mxu0
  %731 = vdwg.mxu0
  %732 = vrot.lane.b32.xlu0 %v224, 96
  %v733 = vpop.permute.xlu0 %732
  %v734 = vsel %vm277, %v224, 0
  %v736 = vsel %vm277, %v733, 0
  %738 = vmatprep.subr.mxu0 0.0
  %739 = vmatpush1.xpose.msra.mxu0 0.0
  %740 = vmatprep.subr.mxu0 0.0
  %741 = vmatpush1.xpose.msra.mxu0 0.0
  %742 = vmatprep.subr.mxu0 0.0
  %743 = vmatpush1.xpose.msra.mxu0 0.0
  %744 = vmatprep.subr.mxu0 0.0
  %745 = vmatpush1.xpose.msra.mxu0 0.0
  %746 = vmatprep.subr.mxu0 0.0
  %747 = vmatpush1.xpose.msra.mxu0 0.0
  %748 = vmatprep.subr.mxu0 0.0
  %749 = vmatpush1.xpose.msra.mxu0 0.0
  %750 = vmatprep.subr.mxu0 0.0
  %751 = vmatpush1.xpose.msra.mxu0 0.0
  %752 = vmatprep.subr.mxu0 0.0
  %753 = vmatpush1.xpose.msra.mxu0 0.0
  %754 = vmatprep.subr.mxu0 0.0
  %755 = vmatpush1.xpose.msra.mxu0 0.0
  %756 = vmatprep.subr.mxu0 0.0
  %757 = vmatpush1.xpose.msra.mxu0 0.0
  %758 = vmatprep.subr.mxu0 0.0
  %759 = vmatpush1.xpose.msra.mxu0 0.0
  %760 = vmatprep.subr.mxu0 0.0
  %761 = vmatpush1.xpose.msra.mxu0 0.0
  %762 = vmatprep.subr.mxu0 0.0
  %763 = vmatpush1.xpose.msra.mxu0 0.0
  %764 = vmatprep.subr.mxu0 0.0
  %765 = vmatpush1.xpose.msra.mxu0 0.0
  %766 = vmatprep.subr.mxu0 0.0
  %767 = vmatpush1.xpose.msra.mxu0 0.0
  %768 = vmatprep.subr.mxu0 0.0
  %769 = vmatpush1.xpose.msra.mxu0 %v736
  %770 = vmatprep.subr.mxu0 0.0
  %771 = vmatpush2.xpose.msra.mxu0 0.0
  %772 = vmatprep.subr.mxu0 0.0
  %773 = vmatpush2.xpose.msra.mxu0 0.0
  %774 = vmatprep.subr.mxu0 0.0
  %775 = vmatpush2.xpose.msra.mxu0 0.0
  %776 = vmatprep.subr.mxu0 0.0
  %777 = vmatpush2.xpose.msra.mxu0 0.0
  %778 = vmatprep.subr.mxu0 0.0
  %779 = vmatpush2.xpose.msra.mxu0 0.0
  %780 = vmatprep.subr.mxu0 0.0
  %781 = vmatpush2.xpose.msra.mxu0 0.0
  %782 = vmatprep.subr.mxu0 0.0
  %783 = vmatpush2.xpose.msra.mxu0 0.0
  %784 = vmatprep.subr.mxu0 0.0
  %785 = vmatpush2.xpose.msra.mxu0 0.0
  %786 = vmatprep.subr.mxu0 0.0
  %787 = vmatpush2.xpose.msra.mxu0 0.0
  %788 = vmatprep.subr.mxu0 0.0
  %789 = vmatpush2.xpose.msra.mxu0 0.0
  %790 = vmatprep.subr.mxu0 0.0
  %791 = vmatpush2.xpose.msra.mxu0 0.0
  %792 = vmatprep.subr.mxu0 0.0
  %793 = vmatpush2.xpose.msra.mxu0 0.0
  %794 = vmatprep.subr.mxu0 0.0
  %795 = vmatpush2.xpose.msra.mxu0 0.0
  %796 = vmatprep.subr.mxu0 0.0
  %797 = vmatpush2.xpose.msra.mxu0 0.0
  %798 = vmatprep.subr.mxu0 0.0
  %799 = vmatpush2.xpose.msra.mxu0 0.0
  %800 = vmatprep.subr.mxu0 0.0
  %801 = vmatpush2.xpose.msra.mxu0 0.0
  %802 = vmatprep.mubr.f32.mxu0 0.0
  %803 = vmatmul.mubr.f32.gmra.mxu0 %v734
  %v804 = vpop.f32.mrf.mxu0
  %v805 = vadd.f32 %v262, %v804
  %v806 = vpop.f32.mrf.mxu0
  %807 = vdwg.mxu0
  %808 = vrot.lane.b32.xlu0 %v226, 96
  %v809 = vpop.permute.xlu0 %808
  %v810 = vsel %vm277, %v226, 0
  %v812 = vsel %vm277, %v809, 0
  %814 = vmatprep.subr.mxu0 0.0
  %815 = vmatpush1.xpose.msra.mxu0 0.0
  %816 = vmatprep.subr.mxu0 0.0
  %817 = vmatpush1.xpose.msra.mxu0 0.0
  %818 = vmatprep.subr.mxu0 0.0
  %819 = vmatpush1.xpose.msra.mxu0 0.0
  %820 = vmatprep.subr.mxu0 0.0
  %821 = vmatpush1.xpose.msra.mxu0 0.0
  %822 = vmatprep.subr.mxu0 0.0
  %823 = vmatpush1.xpose.msra.mxu0 0.0
  %824 = vmatprep.subr.mxu0 0.0
  %825 = vmatpush1.xpose.msra.mxu0 0.0
  %826 = vmatprep.subr.mxu0 0.0
  %827 = vmatpush1.xpose.msra.mxu0 0.0
  %828 = vmatprep.subr.mxu0 0.0
  %829 = vmatpush1.xpose.msra.mxu0 0.0
  %830 = vmatprep.subr.mxu0 0.0
  %831 = vmatpush1.xpose.msra.mxu0 0.0
  %832 = vmatprep.subr.mxu0 0.0
  %833 = vmatpush1.xpose.msra.mxu0 0.0
  %834 = vmatprep.subr.mxu0 0.0
  %835 = vmatpush1.xpose.msra.mxu0 0.0
  %836 = vmatprep.subr.mxu0 0.0
  %837 = vmatpush1.xpose.msra.mxu0 0.0
  %838 = vmatprep.subr.mxu0 0.0
  %839 = vmatpush1.xpose.msra.mxu0 0.0
  %840 = vmatprep.subr.mxu0 0.0
  %841 = vmatpush1.xpose.msra.mxu0 0.0
  %842 = vmatprep.subr.mxu0 0.0
  %843 = vmatpush1.xpose.msra.mxu0 0.0
  %844 = vmatprep.subr.mxu0 0.0
  %845 = vmatpush1.xpose.msra.mxu0 %v812
  %846 = vmatprep.subr.mxu0 0.0
  %847 = vmatpush2.xpose.msra.mxu0 0.0
  %848 = vmatprep.subr.mxu0 0.0
  %849 = vmatpush2.xpose.msra.mxu0 0.0
  %850 = vmatprep.subr.mxu0 0.0
  %851 = vmatpush2.xpose.msra.mxu0 0.0
  %852 = vmatprep.subr.mxu0 0.0
  %853 = vmatpush2.xpose.msra.mxu0 0.0
  %854 = vmatprep.subr.mxu0 0.0
  %855 = vmatpush2.xpose.msra.mxu0 0.0
  %856 = vmatprep.subr.mxu0 0.0
  %857 = vmatpush2.xpose.msra.mxu0 0.0
  %858 = vmatprep.subr.mxu0 0.0
  %859 = vmatpush2.xpose.msra.mxu0 0.0
  %860 = vmatprep.subr.mxu0 0.0
  %861 = vmatpush2.xpose.msra.mxu0 0.0
  %862 = vmatprep.subr.mxu0 0.0
  %863 = vmatpush2.xpose.msra.mxu0 0.0
  %864 = vmatprep.subr.mxu0 0.0
  %865 = vmatpush2.xpose.msra.mxu0 0.0
  %866 = vmatprep.subr.mxu0 0.0
  %867 = vmatpush2.xpose.msra.mxu0 0.0
  %868 = vmatprep.subr.mxu0 0.0
  %869 = vmatpush2.xpose.msra.mxu0 0.0
  %870 = vmatprep.subr.mxu0 0.0
  %871 = vmatpush2.xpose.msra.mxu0 0.0
  %872 = vmatprep.subr.mxu0 0.0
  %873 = vmatpush2.xpose.msra.mxu0 0.0
  %874 = vmatprep.subr.mxu0 0.0
  %875 = vmatpush2.xpose.msra.mxu0 0.0
  %876 = vmatprep.subr.mxu0 0.0
  %877 = vmatpush2.xpose.msra.mxu0 0.0
  %878 = vmatprep.mubr.f32.mxu0 0.0
  %879 = vmatmul.mubr.f32.gmra.mxu0 %v810
  %v880 = vpop.f32.mrf.mxu0
  %v881 = vadd.f32 %v266, %v880
  %v882 = vpop.f32.mrf.mxu0
  %883 = vdwg.mxu0
  %v884 = vsel %vm277, %v349, -inf
  %885 = vmax.xlane.f32.xlu0 %v884
  %v886 = vpop.xlane.xlu0 %885
  %v887 = vsel %vm277, %v425, -inf
  %888 = vmax.xlane.f32.xlu0 %v887
  %v889 = vpop.xlane.xlu0 %888
  %v890 = vsel %vm277, %v501, -inf
  %891 = vmax.xlane.f32.xlu0 %v890
  %v892 = vpop.xlane.xlu0 %891
  %v893 = vsel %vm277, %v577, -inf
  %894 = vmax.xlane.f32.xlu0 %v893
  %v895 = vpop.xlane.xlu0 %894
  %v896 = vsel %vm277, %v653, -inf
  %897 = vmax.xlane.f32.xlu0 %v896
  %v898 = vpop.xlane.xlu0 %897
  %v899 = vsel %vm277, %v729, -inf
  %900 = vmax.xlane.f32.xlu0 %v899
  %v901 = vpop.xlane.xlu0 %900
  %v902 = vsel %vm277, %v805, -inf
  %903 = vmax.xlane.f32.xlu0 %v902
  %v904 = vpop.xlane.xlu0 %903
  %v905 = vsel %vm277, %v881, -inf
  %906 = vmax.xlane.f32.xlu0 %v905
  %v907 = vpop.xlane.xlu0 %906
  %v908 = vsub.f32 %v349, %v886
  %v909 = vsub.f32 %v425, %v889
  %v910 = vsub.f32 %v501, %v892
  %v911 = vsub.f32 %v577, %v895
  %v912 = vsub.f32 %v653, %v898
  %v913 = vsub.f32 %v729, %v901
  %v914 = vsub.f32 %v805, %v904
  %v915 = vsub.f32 %v881, %v907
  %v916 = vmul.f32 %v908, 1.442695
  %v917 = vpow.pop %v916
  %v918 = vmul.f32 %v909, 1.442695
  %v919 = vpow.pop %v918
  %v920 = vmul.f32 %v910, 1.442695
  %v921 = vpow.pop %v920
  %v922 = vmul.f32 %v911, 1.442695
  %v923 = vpow.pop %v922
  %v924 = vmul.f32 %v912, 1.442695
  %v925 = vpow.pop %v924
  %v926 = vmul.f32 %v913, 1.442695
  %v927 = vpow.pop %v926
  %v928 = vmul.f32 %v914, 1.442695
  %v929 = vpow.pop %v928
  %v930 = vmul.f32 %v915, 1.442695
  %v931 = vpow.pop %v930
  %v932 = vsel %vm277, %v917, 0.0
  %933 = vadd.xlane.f32.xlu0 %v932
  %v934 = vpop.xlane.xlu0 %933
  %v935 = vsel %vm277, %v919, 0.0
  %936 = vadd.xlane.f32.xlu0 %v935
  %v937 = vpop.xlane.xlu0 %936
  %v938 = vsel %vm277, %v921, 0.0
  %939 = vadd.xlane.f32.xlu0 %v938
  %v940 = vpop.xlane.xlu0 %939
  %v941 = vsel %vm277, %v923, 0.0
  %942 = vadd.xlane.f32.xlu0 %v941
  %v943 = vpop.xlane.xlu0 %942
  %v944 = vsel %vm277, %v925, 0.0
  %945 = vadd.xlane.f32.xlu0 %v944
  %v946 = vpop.xlane.xlu0 %945
  %v947 = vsel %vm277, %v927, 0.0
  %948 = vadd.xlane.f32.xlu0 %v947
  %v949 = vpop.xlane.xlu0 %948
  %v950 = vsel %vm277, %v929, 0.0
  %951 = vadd.xlane.f32.xlu0 %v950
  %v952 = vpop.xlane.xlu0 %951
  %v953 = vsel %vm277, %v931, 0.0
  %954 = vadd.xlane.f32.xlu0 %v953
  %v955 = vpop.xlane.xlu0 %954
  %v956 = vrcp.pop %v934
  %v957 = vrcp.pop %v937
  %v958 = vrcp.pop %v940
  %v959 = vrcp.pop %v943
  %v960 = vrcp.pop %v946
  %v961 = vrcp.pop %v949
  %v962 = vrcp.pop %v952
  %v963 = vrcp.pop %v955
  %v964 = vmul.f32 %v917, %v956
  %v965 = vmul.f32 %v919, %v957
  %v966 = vmul.f32 %v921, %v958
  %v967 = vmul.f32 %v923, %v959
  %v968 = vmul.f32 %v925, %v960
  %v969 = vmul.f32 %v927, %v961
  %v970 = vmul.f32 %v929, %v962
  %v971 = vmul.f32 %v931, %v963
  %972 = vrot.lane.b32.xlu0 %v205, 64
  %v973 = vpop.permute.xlu0 %972
  %v976 = vsel %vm277, %v964, 0
  %978 = vmatprep.subr.mxu0 0.0
  %979 = vmatpush1.msra.mxu0 0.0
  %980 = vmatprep.subr.mxu0 0.0
  %981 = vmatpush1.msra.mxu0 0.0
  %982 = vmatprep.subr.mxu0 0.0
  %983 = vmatpush1.msra.mxu0 0.0
  %984 = vmatprep.subr.mxu0 0.0
  %985 = vmatpush1.msra.mxu0 0.0
  %986 = vmatprep.subr.mxu0 0.0
  %987 = vmatpush1.msra.mxu0 0.0
  %988 = vmatprep.subr.mxu0 0.0
  %989 = vmatpush1.msra.mxu0 0.0
  %990 = vmatprep.subr.mxu0 0.0
  %991 = vmatpush1.msra.mxu0 0.0
  %992 = vmatprep.subr.mxu0 0.0
  %993 = vmatpush1.msra.mxu0 0.0
  %994 = vmatprep.subr.mxu0 0.0
  %995 = vmatpush1.msra.mxu0 0.0
  %996 = vmatprep.subr.mxu0 0.0
  %997 = vmatpush1.msra.mxu0 0.0
  %998 = vmatprep.subr.mxu0 0.0
  %999 = vmatpush1.msra.mxu0 0.0
  %1000 = vmatprep.subr.mxu0 0.0
  %1001 = vmatpush1.msra.mxu0 0.0
  %1002 = vmatprep.subr.mxu0 0.0
  %1003 = vmatpush1.msra.mxu0 0.0
  %1004 = vmatprep.subr.mxu0 0.0
  %1005 = vmatpush1.msra.mxu0 0.0
  %1006 = vmatprep.subr.mxu0 0.0
  %1007 = vmatpush1.msra.mxu0 0.0
  %1008 = vmatprep.subr.mxu0 0.0
  %1009 = vmatpush1.msra.mxu0 %v973
  %1010 = vmatprep.subr.mxu0 0.0
  %1011 = vmatpush2.msra.mxu0 0.0
  %1012 = vmatprep.subr.mxu0 0.0
  %1013 = vmatpush2.msra.mxu0 0.0
  %1014 = vmatprep.subr.mxu0 0.0
  %1015 = vmatpush2.msra.mxu0 0.0
  %1016 = vmatprep.subr.mxu0 0.0
  %1017 = vmatpush2.msra.mxu0 0.0
  %1018 = vmatprep.subr.mxu0 0.0
  %1019 = vmatpush2.msra.mxu0 0.0
  %1020 = vmatprep.subr.mxu0 0.0
  %1021 = vmatpush2.msra.mxu0 0.0
  %1022 = vmatprep.subr.mxu0 0.0
  %1023 = vmatpush2.msra.mxu0 0.0
  %1024 = vmatprep.subr.mxu0 0.0
  %1025 = vmatpush2.msra.mxu0 0.0
  %1026 = vmatprep.subr.mxu0 0.0
  %1027 = vmatpush2.msra.mxu0 0.0
  %1028 = vmatprep.subr.mxu0 0.0
  %1029 = vmatpush2.msra.mxu0 0.0
  %1030 = vmatprep.subr.mxu0 0.0
  %1031 = vmatpush2.msra.mxu0 0.0
  %1032 = vmatprep.subr.mxu0 0.0
  %1033 = vmatpush2.msra.mxu0 0.0
  %1034 = vmatprep.subr.mxu0 0.0
  %1035 = vmatpush2.msra.mxu0 0.0
  %1036 = vmatprep.subr.mxu0 0.0
  %1037 = vmatpush2.msra.mxu0 0.0
  %1038 = vmatprep.subr.mxu0 0.0
  %1039 = vmatpush2.msra.mxu0 0.0
  %1040 = vmatprep.subr.mxu0 0.0
  %1041 = vmatpush2.msra.mxu0 0.0
  %1042 = vmatprep.mubr.f32.mxu0 0.0
  %1043 = vmatmul.mubr.f32.gmra.mxu0 %v976
  %v1044 = vpop.f32.mrf.mxu0
  %v1045 = vadd.f32 0.0, %v1044
  %v1046 = vpop.f32.mrf.mxu0
  %1047 = vdwg.mxu0
  %1048 = vrot.lane.b32.xlu0 %v210, 64
  %v1049 = vpop.permute.xlu0 %1048
  %v1052 = vsel %vm277, %v965, 0
  %1054 = vmatprep.subr.mxu0 0.0
  %1055 = vmatpush1.msra.mxu0 0.0
  %1056 = vmatprep.subr.mxu0 0.0
  %1057 = vmatpush1.msra.mxu0 0.0
  %1058 = vmatprep.subr.mxu0 0.0
  %1059 = vmatpush1.msra.mxu0 0.0
  %1060 = vmatprep.subr.mxu0 0.0
  %1061 = vmatpush1.msra.mxu0 0.0
  %1062 = vmatprep.subr.mxu0 0.0
  %1063 = vmatpush1.msra.mxu0 0.0
  %1064 = vmatprep.subr.mxu0 0.0
  %1065 = vmatpush1.msra.mxu0 0.0
  %1066 = vmatprep.subr.mxu0 0.0
  %1067 = vmatpush1.msra.mxu0 0.0
  %1068 = vmatprep.subr.mxu0 0.0
  %1069 = vmatpush1.msra.mxu0 0.0
  %1070 = vmatprep.subr.mxu0 0.0
  %1071 = vmatpush1.msra.mxu0 0.0
  %1072 = vmatprep.subr.mxu0 0.0
  %1073 = vmatpush1.msra.mxu0 0.0
  %1074 = vmatprep.subr.mxu0 0.0
  %1075 = vmatpush1.msra.mxu0 0.0
  %1076 = vmatprep.subr.mxu0 0.0
  %1077 = vmatpush1.msra.mxu0 0.0
  %1078 = vmatprep.subr.mxu0 0.0
  %1079 = vmatpush1.msra.mxu0 0.0
  %1080 = vmatprep.subr.mxu0 0.0
  %1081 = vmatpush1.msra.mxu0 0.0
  %1082 = vmatprep.subr.mxu0 0.0
  %1083 = vmatpush1.msra.mxu0 0.0
  %1084 = vmatprep.subr.mxu0 0.0
  %1085 = vmatpush1.msra.mxu0 %v1049
  %1086 = vmatprep.subr.mxu0 0.0
  %1087 = vmatpush2.msra.mxu0 0.0
  %1088 = vmatprep.subr.mxu0 0.0
  %1089 = vmatpush2.msra.mxu0 0.0
  %1090 = vmatprep.subr.mxu0 0.0
  %1091 = vmatpush2.msra.mxu0 0.0
  %1092 = vmatprep.subr.mxu0 0.0
  %1093 = vmatpush2.msra.mxu0 0.0
  %1094 = vmatprep.subr.mxu0 0.0
  %1095 = vmatpush2.msra.mxu0 0.0
  %1096 = vmatprep.subr.mxu0 0.0
  %1097 = vmatpush2.msra.mxu0 0.0
  %1098 = vmatprep.subr.mxu0 0.0
  %1099 = vmatpush2.msra.mxu0 0.0
  %1100 = vmatprep.subr.mxu0 0.0
  %1101 = vmatpush2.msra.mxu0 0.0
  %1102 = vmatprep.subr.mxu0 0.0
  %1103 = vmatpush2.msra.mxu0 0.0
  %1104 = vmatprep.subr.mxu0 0.0
  %1105 = vmatpush2.msra.mxu0 0.0
  %1106 = vmatprep.subr.mxu0 0.0
  %1107 = vmatpush2.msra.mxu0 0.0
  %1108 = vmatprep.subr.mxu0 0.0
  %1109 = vmatpush2.msra.mxu0 0.0
  %1110 = vmatprep.subr.mxu0 0.0
  %1111 = vmatpush2.msra.mxu0 0.0
  %1112 = vmatprep.subr.mxu0 0.0
  %1113 = vmatpush2.msra.mxu0 0.0
  %1114 = vmatprep.subr.mxu0 0.0
  %1115 = vmatpush2.msra.mxu0 0.0
  %1116 = vmatprep.subr.mxu0 0.0
  %1117 = vmatpush2.msra.mxu0 0.0
  %1118 = vmatprep.mubr.f32.mxu0 0.0
  %1119 = vmatmul.mubr.f32.gmra.mxu0 %v1052
  %v1120 = vpop.f32.mrf.mxu0
  %v1121 = vadd.f32 0.0, %v1120
  %v1122 = vpop.f32.mrf.mxu0
  %1123 = vdwg.mxu0
  %1124 = vrot.lane.b32.xlu0 %v216, 64
  %v1125 = vpop.permute.xlu0 %1124
  %v1128 = vsel %vm277, %v966, 0
  %1130 = vmatprep.subr.mxu0 0.0
  %1131 = vmatpush1.msra.mxu0 0.0
  %1132 = vmatprep.subr.mxu0 0.0
  %1133 = vmatpush1.msra.mxu0 0.0
  %1134 = vmatprep.subr.mxu0 0.0
  %1135 = vmatpush1.msra.mxu0 0.0
  %1136 = vmatprep.subr.mxu0 0.0
  %1137 = vmatpush1.msra.mxu0 0.0
  %1138 = vmatprep.subr.mxu0 0.0
  %1139 = vmatpush1.msra.mxu0 0.0
  %1140 = vmatprep.subr.mxu0 0.0
  %1141 = vmatpush1.msra.mxu0 0.0
  %1142 = vmatprep.subr.mxu0 0.0
  %1143 = vmatpush1.msra.mxu0 0.0
  %1144 = vmatprep.subr.mxu0 0.0
  %1145 = vmatpush1.msra.mxu0 0.0
  %1146 = vmatprep.subr.mxu0 0.0
  %1147 = vmatpush1.msra.mxu0 0.0
  %1148 = vmatprep.subr.mxu0 0.0
  %1149 = vmatpush1.msra.mxu0 0.0
  %1150 = vmatprep.subr.mxu0 0.0
  %1151 = vmatpush1.msra.mxu0 0.0
  %1152 = vmatprep.subr.mxu0 0.0
  %1153 = vmatpush1.msra.mxu0 0.0
  %1154 = vmatprep.subr.mxu0 0.0
  %1155 = vmatpush1.msra.mxu0 0.0
  %1156 = vmatprep.subr.mxu0 0.0
  %1157 = vmatpush1.msra.mxu0 0.0
  %1158 = vmatprep.subr.mxu0 0.0
  %1159 = vmatpush1.msra.mxu0 0.0
  %1160 = vmatprep.subr.mxu0 0.0
  %1161 = vmatpush1.msra.mxu0 %v1125
  %1162 = vmatprep.subr.mxu0 0.0
  %1163 = vmatpush2.msra.mxu0 0.0
  %1164 = vmatprep.subr.mxu0 0.0
  %1165 = vmatpush2.msra.mxu0 0.0
  %1166 = vmatprep.subr.mxu0 0.0
  %1167 = vmatpush2.msra.mxu0 0.0
  %1168 = vmatprep.subr.mxu0 0.0
  %1169 = vmatpush2.msra.mxu0 0.0
  %1170 = vmatprep.subr.mxu0 0.0
  %1171 = vmatpush2.msra.mxu0 0.0
  %1172 = vmatprep.subr.mxu0 0.0
  %1173 = vmatpush2.msra.mxu0 0.0
  %1174 = vmatprep.subr.mxu0 0.0
  %1175 = vmatpush2.msra.mxu0 0.0
  %1176 = vmatprep.subr.mxu0 0.0
  %1177 = vmatpush2.msra.mxu0 0.0
  %1178 = vmatprep.subr.mxu0 0.0
  %1179 = vmatpush2.msra.mxu0 0.0
  %1180 = vmatprep.subr.mxu0 0.0
  %1181 = vmatpush2.msra.mxu0 0.0
  %1182 = vmatprep.subr.mxu0 0.0
  %1183 = vmatpush2.msra.mxu0 0.0
  %1184 = vmatprep.subr.mxu0 0.0
  %1185 = vmatpush2.msra.mxu0 0.0
  %1186 = vmatprep.subr.mxu0 0.0
  %1187 = vmatpush2.msra.mxu0 0.0
  %1188 = vmatprep.subr.mxu0 0.0
  %1189 = vmatpush2.msra.mxu0 0.0
  %1190 = vmatprep.subr.mxu0 0.0
  %1191 = vmatpush2.msra.mxu0 0.0
  %1192 = vmatprep.subr.mxu0 0.0
  %1193 = vmatpush2.msra.mxu0 0.0
  %1194 = vmatprep.mubr.f32.mxu0 0.0
  %1195 = vmatmul.mubr.f32.gmra.mxu0 %v1128
  %v1196 = vpop.f32.mrf.mxu0
  %v1197 = vadd.f32 0.0, %v1196
  %v1198 = vpop.f32.mrf.mxu0
  %1199 = vdwg.mxu0
  %1200 = vrot.lane.b32.xlu0 %v218, 64
  %v1201 = vpop.permute.xlu0 %1200
  %v1204 = vsel %vm277, %v967, 0
  %1206 = vmatprep.subr.mxu0 0.0
  %1207 = vmatpush1.msra.mxu0 0.0
  %1208 = vmatprep.subr.mxu0 0.0
  %1209 = vmatpush1.msra.mxu0 0.0
  %1210 = vmatprep.subr.mxu0 0.0
  %1211 = vmatpush1.msra.mxu0 0.0
  %1212 = vmatprep.subr.mxu0 0.0
  %1213 = vmatpush1.msra.mxu0 0.0
  %1214 = vmatprep.subr.mxu0 0.0
  %1215 = vmatpush1.msra.mxu0 0.0
  %1216 = vmatprep.subr.mxu0 0.0
  %1217 = vmatpush1.msra.mxu0 0.0
  %1218 = vmatprep.subr.mxu0 0.0
  %1219 = vmatpush1.msra.mxu0 0.0
  %1220 = vmatprep.subr.mxu0 0.0
  %1221 = vmatpush1.msra.mxu0 0.0
  %1222 = vmatprep.subr.mxu0 0.0
  %1223 = vmatpush1.msra.mxu0 0.0
  %1224 = vmatprep.subr.mxu0 0.0
  %1225 = vmatpush1.msra.mxu0 0.0
  %1226 = vmatprep.subr.mxu0 0.0
  %1227 = vmatpush1.msra.mxu0 0.0
  %1228 = vmatprep.subr.mxu0 0.0
  %1229 = vmatpush1.msra.mxu0 0.0
  %1230 = vmatprep.subr.mxu0 0.0
  %1231 = vmatpush1.msra.mxu0 0.0
  %1232 = vmatprep.subr.mxu0 0.0
  %1233 = vmatpush1.msra.mxu0 0.0
  %1234 = vmatprep.subr.mxu0 0.0
  %1235 = vmatpush1.msra.mxu0 0.0
  %1236 = vmatprep.subr.mxu0 0.0
  %1237 = vmatpush1.msra.mxu0 %v1201
  %1238 = vmatprep.subr.mxu0 0.0
  %1239 = vmatpush2.msra.mxu0 0.0
  %1240 = vmatprep.subr.mxu0 0.0
  %1241 = vmatpush2.msra.mxu0 0.0
  %1242 = vmatprep.subr.mxu0 0.0
  %1243 = vmatpush2.msra.mxu0 0.0
  %1244 = vmatprep.subr.mxu0 0.0
  %1245 = vmatpush2.msra.mxu0 0.0
  %1246 = vmatprep.subr.mxu0 0.0
  %1247 = vmatpush2.msra.mxu0 0.0
  %1248 = vmatprep.subr.mxu0 0.0
  %1249 = vmatpush2.msra.mxu0 0.0
  %1250 = vmatprep.subr.mxu0 0.0
  %1251 = vmatpush2.msra.mxu0 0.0
  %1252 = vmatprep.subr.mxu0 0.0
  %1253 = vmatpush2.msra.mxu0 0.0
  %1254 = vmatprep.subr.mxu0 0.0
  %1255 = vmatpush2.msra.mxu0 0.0
  %1256 = vmatprep.subr.mxu0 0.0
  %1257 = vmatpush2.msra.mxu0 0.0
  %1258 = vmatprep.subr.mxu0 0.0
  %1259 = vmatpush2.msra.mxu0 0.0
  %1260 = vmatprep.subr.mxu0 0.0
  %1261 = vmatpush2.msra.mxu0 0.0
  %1262 = vmatprep.subr.mxu0 0.0
  %1263 = vmatpush2.msra.mxu0 0.0
  %1264 = vmatprep.subr.mxu0 0.0
  %1265 = vmatpush2.msra.mxu0 0.0
  %1266 = vmatprep.subr.mxu0 0.0
  %1267 = vmatpush2.msra.mxu0 0.0
  %1268 = vmatprep.subr.mxu0 0.0
  %1269 = vmatpush2.msra.mxu0 0.0
  %1270 = vmatprep.mubr.f32.mxu0 0.0
  %1271 = vmatmul.mubr.f32.gmra.mxu0 %v1204
  %v1272 = vpop.f32.mrf.mxu0
  %v1273 = vadd.f32 0.0, %v1272
  %v1274 = vpop.f32.mrf.mxu0
  %1275 = vdwg.mxu0
  %1276 = vrot.lane.b32.xlu0 %v220, 64
  %v1277 = vpop.permute.xlu0 %1276
  %v1280 = vsel %vm277, %v968, 0
  %1282 = vmatprep.subr.mxu0 0.0
  %1283 = vmatpush1.msra.mxu0 0.0
  %1284 = vmatprep.subr.mxu0 0.0
  %1285 = vmatpush1.msra.mxu0 0.0
  %1286 = vmatprep.subr.mxu0 0.0
  %1287 = vmatpush1.msra.mxu0 0.0
  %1288 = vmatprep.subr.mxu0 0.0
  %1289 = vmatpush1.msra.mxu0 0.0
  %1290 = vmatprep.subr.mxu0 0.0
  %1291 = vmatpush1.msra.mxu0 0.0
  %1292 = vmatprep.subr.mxu0 0.0
  %1293 = vmatpush1.msra.mxu0 0.0
  %1294 = vmatprep.subr.mxu0 0.0
  %1295 = vmatpush1.msra.mxu0 0.0
  %1296 = vmatprep.subr.mxu0 0.0
  %1297 = vmatpush1.msra.mxu0 0.0
  %1298 = vmatprep.subr.mxu0 0.0
  %1299 = vmatpush1.msra.mxu0 0.0
  %1300 = vmatprep.subr.mxu0 0.0
  %1301 = vmatpush1.msra.mxu0 0.0
  %1302 = vmatprep.subr.mxu0 0.0
  %1303 = vmatpush1.msra.mxu0 0.0
  %1304 = vmatprep.subr.mxu0 0.0
  %1305 = vmatpush1.msra.mxu0 0.0
  %1306 = vmatprep.subr.mxu0 0.0
  %1307 = vmatpush1.msra.mxu0 0.0
  %1308 = vmatprep.subr.mxu0 0.0
  %1309 = vmatpush1.msra.mxu0 0.0
  %1310 = vmatprep.subr.mxu0 0.0
  %1311 = vmatpush1.msra.mxu0 0.0
  %1312 = vmatprep.subr.mxu0 0.0
  %1313 = vmatpush1.msra.mxu0 %v1277
  %1314 = vmatprep.subr.mxu0 0.0
  %1315 = vmatpush2.msra.mxu0 0.0
  %1316 = vmatprep.subr.mxu0 0.0
  %1317 = vmatpush2.msra.mxu0 0.0
  %1318 = vmatprep.subr.mxu0 0.0
  %1319 = vmatpush2.msra.mxu0 0.0
  %1320 = vmatprep.subr.mxu0 0.0
  %1321 = vmatpush2.msra.mxu0 0.0
  %1322 = vmatprep.subr.mxu0 0.0
  %1323 = vmatpush2.msra.mxu0 0.0
  %1324 = vmatprep.subr.mxu0 0.0
  %1325 = vmatpush2.msra.mxu0 0.0
  %1326 = vmatprep.subr.mxu0 0.0
  %1327 = vmatpush2.msra.mxu0 0.0
  %1328 = vmatprep.subr.mxu0 0.0
  %1329 = vmatpush2.msra.mxu0 0.0
  %1330 = vmatprep.subr.mxu0 0.0
  %1331 = vmatpush2.msra.mxu0 0.0
  %1332 = vmatprep.subr.mxu0 0.0
  %1333 = vmatpush2.msra.mxu0 0.0
  %1334 = vmatprep.subr.mxu0 0.0
  %1335 = vmatpush2.msra.mxu0 0.0
  %1336 = vmatprep.subr.mxu0 0.0
  %1337 = vmatpush2.msra.mxu0 0.0
  %1338 = vmatprep.subr.mxu0 0.0
  %1339 = vmatpush2.msra.mxu0 0.0
  %1340 = vmatprep.subr.mxu0 0.0
  %1341 = vmatpush2.msra.mxu0 0.0
  %1342 = vmatprep.subr.mxu0 0.0
  %1343 = vmatpush2.msra.mxu0 0.0
  %1344 = vmatprep.subr.mxu0 0.0
  %1345 = vmatpush2.msra.mxu0 0.0
  %1346 = vmatprep.mubr.f32.mxu0 0.0
  %1347 = vmatmul.mubr.f32.gmra.mxu0 %v1280
  %v1348 = vpop.f32.mrf.mxu0
  %v1349 = vadd.f32 0.0, %v1348
  %v1350 = vpop.f32.mrf.mxu0
  %1351 = vdwg.mxu0
  %1352 = vrot.lane.b32.xlu0 %v222, 64
  %v1353 = vpop.permute.xlu0 %1352
  %v1356 = vsel %vm277, %v969, 0
  %1358 = vmatprep.subr.mxu0 0.0
  %1359 = vmatpush1.msra.mxu0 0.0
  %1360 = vmatprep.subr.mxu0 0.0
  %1361 = vmatpush1.msra.mxu0 0.0
  %1362 = vmatprep.subr.mxu0 0.0
  %1363 = vmatpush1.msra.mxu0 0.0
  %1364 = vmatprep.subr.mxu0 0.0
  %1365 = vmatpush1.msra.mxu0 0.0
  %1366 = vmatprep.subr.mxu0 0.0
  %1367 = vmatpush1.msra.mxu0 0.0
  %1368 = vmatprep.subr.mxu0 0.0
  %1369 = vmatpush1.msra.mxu0 0.0
  %1370 = vmatprep.subr.mxu0 0.0
  %1371 = vmatpush1.msra.mxu0 0.0
  %1372 = vmatprep.subr.mxu0 0.0
  %1373 = vmatpush1.msra.mxu0 0.0
  %1374 = vmatprep.subr.mxu0 0.0
  %1375 = vmatpush1.msra.mxu0 0.0
  %1376 = vmatprep.subr.mxu0 0.0
  %1377 = vmatpush1.msra.mxu0 0.0
  %1378 = vmatprep.subr.mxu0 0.0
  %1379 = vmatpush1.msra.mxu0 0.0
  %1380 = vmatprep.subr.mxu0 0.0
  %1381 = vmatpush1.msra.mxu0 0.0
  %1382 = vmatprep.subr.mxu0 0.0
  %1383 = vmatpush1.msra.mxu0 0.0
  %1384 = vmatprep.subr.mxu0 0.0
  %1385 = vmatpush1.msra.mxu0 0.0
  %1386 = vmatprep.subr.mxu0 0.0
  %1387 = vmatpush1.msra.mxu0 0.0
  %1388 = vmatprep.subr.mxu0 0.0
  %1389 = vmatpush1.msra.mxu0 %v1353
  %1390 = vmatprep.subr.mxu0 0.0
  %1391 = vmatpush2.msra.mxu0 0.0
  %1392 = vmatprep.subr.mxu0 0.0
  %1393 = vmatpush2.msra.mxu0 0.0
  %1394 = vmatprep.subr.mxu0 0.0
  %1395 = vmatpush2.msra.mxu0 0.0
  %1396 = vmatprep.subr.mxu0 0.0
  %1397 = vmatpush2.msra.mxu0 0.0
  %1398 = vmatprep.subr.mxu0 0.0
  %1399 = vmatpush2.msra.mxu0 0.0
  %1400 = vmatprep.subr.mxu0 0.0
  %1401 = vmatpush2.msra.mxu0 0.0
  %1402 = vmatprep.subr.mxu0 0.0
  %1403 = vmatpush2.msra.mxu0 0.0
  %1404 = vmatprep.subr.mxu0 0.0
  %1405 = vmatpush2.msra.mxu0 0.0
  %1406 = vmatprep.subr.mxu0 0.0
  %1407 = vmatpush2.msra.mxu0 0.0
  %1408 = vmatprep.subr.mxu0 0.0
  %1409 = vmatpush2.msra.mxu0 0.0
  %1410 = vmatprep.subr.mxu0 0.0
  %1411 = vmatpush2.msra.mxu0 0.0
  %1412 = vmatprep.subr.mxu0 0.0
  %1413 = vmatpush2.msra.mxu0 0.0
  %1414 = vmatprep.subr.mxu0 0.0
  %1415 = vmatpush2.msra.mxu0 0.0
  %1416 = vmatprep.subr.mxu0 0.0
  %1417 = vmatpush2.msra.mxu0 0.0
  %1418 = vmatprep.subr.mxu0 0.0
  %1419 = vmatpush2.msra.mxu0 0.0
  %1420 = vmatprep.subr.mxu0 0.0
  %1421 = vmatpush2.msra.mxu0 0.0
  %1422 = vmatprep.mubr.f32.mxu0 0.0
  %1423 = vmatmul.mubr.f32.gmra.mxu0 %v1356
  %v1424 = vpop.f32.mrf.mxu0
  %v1425 = vadd.f32 0.0, %v1424
  %v1426 = vpop.f32.mrf.mxu0
  %1427 = vdwg.mxu0
  %1428 = vrot.lane.b32.xlu0 %v224, 64
  %v1429 = vpop.permute.xlu0 %1428
  %v1432 = vsel %vm277, %v970, 0
  %1434 = vmatprep.subr.mxu0 0.0
  %1435 = vmatpush1.msra.mxu0 0.0
  %1436 = vmatprep.subr.mxu0 0.0
  %1437 = vmatpush1.msra.mxu0 0.0
  %1438 = vmatprep.subr.mxu0 0.0
  %1439 = vmatpush1.msra.mxu0 0.0
  %1440 = vmatprep.subr.mxu0 0.0
  %1441 = vmatpush1.msra.mxu0 0.0
  %1442 = vmatprep.subr.mxu0 0.0
  %1443 = vmatpush1.msra.mxu0 0.0
  %1444 = vmatprep.subr.mxu0 0.0
  %1445 = vmatpush1.msra.mxu0 0.0
  %1446 = vmatprep.subr.mxu0 0.0
  %1447 = vmatpush1.msra.mxu0 0.0
  %1448 = vmatprep.subr.mxu0 0.0
  %1449 = vmatpush1.msra.mxu0 0.0
  %1450 = vmatprep.subr.mxu0 0.0
  %1451 = vmatpush1.msra.mxu0 0.0
  %1452 = vmatprep.subr.mxu0 0.0
  %1453 = vmatpush1.msra.mxu0 0.0
  %1454 = vmatprep.subr.mxu0 0.0
  %1455 = vmatpush1.msra.mxu0 0.0
  %1456 = vmatprep.subr.mxu0 0.0
  %1457 = vmatpush1.msra.mxu0 0.0
  %1458 = vmatprep.subr.mxu0 0.0
  %1459 = vmatpush1.msra.mxu0 0.0
  %1460 = vmatprep.subr.mxu0 0.0
  %1461 = vmatpush1.msra.mxu0 0.0
  %1462 = vmatprep.subr.mxu0 0.0
  %1463 = vmatpush1.msra.mxu0 0.0
  %1464 = vmatprep.subr.mxu0 0.0
  %1465 = vmatpush1.msra.mxu0 %v1429
  %1466 = vmatprep.subr.mxu0 0.0
  %1467 = vmatpush2.msra.mxu0 0.0
  %1468 = vmatprep.subr.mxu0 0.0
  %1469 = vmatpush2.msra.mxu0 0.0
  %1470 = vmatprep.subr.mxu0 0.0
  %1471 = vmatpush2.msra.mxu0 0.0
  %1472 = vmatprep.subr.mxu0 0.0
  %1473 = vmatpush2.msra.mxu0 0.0
  %1474 = vmatprep.subr.mxu0 0.0
  %1475 = vmatpush2.msra.mxu0 0.0
  %1476 = vmatprep.subr.mxu0 0.0
  %1477 = vmatpush2.msra.mxu0 0.0
  %1478 = vmatprep.subr.mxu0 0.0
  %1479 = vmatpush2.msra.mxu0 0.0
  %1480 = vmatprep.subr.mxu0 0.0
  %1481 = vmatpush2.msra.mxu0 0.0
  %1482 = vmatprep.subr.mxu0 0.0
  %1483 = vmatpush2.msra.mxu0 0.0
  %1484 = vmatprep.subr.mxu0 0.0
  %1485 = vmatpush2.msra.mxu0 0.0
  %1486 = vmatprep.subr.mxu0 0.0
  %1487 = vmatpush2.msra.mxu0 0.0
  %1488 = vmatprep.subr.mxu0 0.0
  %1489 = vmatpush2.msra.mxu0 0.0
  %1490 = vmatprep.subr.mxu0 0.0
  %1491 = vmatpush2.msra.mxu0 0.0
  %1492 = vmatprep.subr.mxu0 0.0
  %1493 = vmatpush2.msra.mxu0 0.0
  %1494 = vmatprep.subr.mxu0 0.0
  %1495 = vmatpush2.msra.mxu0 0.0
  %1496 = vmatprep.subr.mxu0 0.0
  %1497 = vmatpush2.msra.mxu0 0.0
  %1498 = vmatprep.mubr.f32.mxu0 0.0
  %1499 = vmatmul.mubr.f32.gmra.mxu0 %v1432
  %v1500 = vpop.f32.mrf.mxu0
  %v1501 = vadd.f32 0.0, %v1500
  %v1502 = vpop.f32.mrf.mxu0
  %1503 = vdwg.mxu0
  %1504 = vrot.lane.b32.xlu0 %v226, 64
  %v1505 = vpop.permute.xlu0 %1504
  %v1508 = vsel %vm277, %v971, 0
  %1510 = vmatprep.subr.mxu0 0.0
  %1511 = vmatpush1.msra.mxu0 0.0
  %1512 = vmatprep.subr.mxu0 0.0
  %1513 = vmatpush1.msra.mxu0 0.0
  %1514 = vmatprep.subr.mxu0 0.0
  %1515 = vmatpush1.msra.mxu0 0.0
  %1516 = vmatprep.subr.mxu0 0.0
  %1517 = vmatpush1.msra.mxu0 0.0
  %1518 = vmatprep.subr.mxu0 0.0
  %1519 = vmatpush1.msra.mxu0 0.0
  %1520 = vmatprep.subr.mxu0 0.0
  %1521 = vmatpush1.msra.mxu0 0.0
  %1522 = vmatprep.subr.mxu0 0.0
  %1523 = vmatpush1.msra.mxu0 0.0
  %1524 = vmatprep.subr.mxu0 0.0
  %1525 = vmatpush1.msra.mxu0 0.0
  %1526 = vmatprep.subr.mxu0 0.0
  %1527 = vmatpush1.msra.mxu0 0.0
  %1528 = vmatprep.subr.mxu0 0.0
  %1529 = vmatpush1.msra.mxu0 0.0
  %1530 = vmatprep.subr.mxu0 0.0
  %1531 = vmatpush1.msra.mxu0 0.0
  %1532 = vmatprep.subr.mxu0 0.0
  %1533 = vmatpush1.msra.mxu0 0.0
  %1534 = vmatprep.subr.mxu0 0.0
  %1535 = vmatpush1.msra.mxu0 0.0
  %1536 = vmatprep.subr.mxu0 0.0
  %1537 = vmatpush1.msra.mxu0 0.0
  %1538 = vmatprep.subr.mxu0 0.0
  %1539 = vmatpush1.msra.mxu0 0.0
  %1540 = vmatprep.subr.mxu0 0.0
  %1541 = vmatpush1.msra.mxu0 %v1505
  %1542 = vmatprep.subr.mxu0 0.0
  %1543 = vmatpush2.msra.mxu0 0.0
  %1544 = vmatprep.subr.mxu0 0.0
  %1545 = vmatpush2.msra.mxu0 0.0
  %1546 = vmatprep.subr.mxu0 0.0
  %1547 = vmatpush2.msra.mxu0 0.0
  %1548 = vmatprep.subr.mxu0 0.0
  %1549 = vmatpush2.msra.mxu0 0.0
  %1550 = vmatprep.subr.mxu0 0.0
  %1551 = vmatpush2.msra.mxu0 0.0
  %1552 = vmatprep.subr.mxu0 0.0
  %1553 = vmatpush2.msra.mxu0 0.0
  %1554 = vmatprep.subr.mxu0 0.0
  %1555 = vmatpush2.msra.mxu0 0.0
  %1556 = vmatprep.subr.mxu0 0.0
  %1557 = vmatpush2.msra.mxu0 0.0
  %1558 = vmatprep.subr.mxu0 0.0
  %1559 = vmatpush2.msra.mxu0 0.0
  %1560 = vmatprep.subr.mxu0 0.0
  %1561 = vmatpush2.msra.mxu0 0.0
  %1562 = vmatprep.subr.mxu0 0.0
  %1563 = vmatpush2.msra.mxu0 0.0
  %1564 = vmatprep.subr.mxu0 0.0
  %1565 = vmatpush2.msra.mxu0 0.0
  %1566 = vmatprep.subr.mxu0 0.0
  %1567 = vmatpush2.msra.mxu0 0.0
  %1568 = vmatprep.subr.mxu0 0.0
  %1569 = vmatpush2.msra.mxu0 0.0
  %1570 = vmatprep.subr.mxu0 0.0
  %1571 = vmatpush2.msra.mxu0 0.0
  %1572 = vmatprep.subr.mxu0 0.0
  %1573 = vmatpush2.msra.mxu0 0.0
  %1574 = vmatprep.mubr.f32.mxu0 0.0
  %1575 = vmatmul.mubr.f32.gmra.mxu0 %v1508
  %v1576 = vpop.f32.mrf.mxu0
  %v1577 = vadd.f32 0.0, %v1576
  %v1578 = vpop.f32.mrf.mxu0
  %1579 = vdwg.mxu0
  %1582 = vrot.lane.b32.xlu0 %v1197, 8
  %v1583 = vpop.permute.xlu0 %1582
  %1584 = vrot.lane.b32.xlu0 %v1273, 8
  %v1585 = vpop.permute.xlu0 %1584
  %1590 = vrot.lane.b32.xlu0 %v1349, 16
  %v1591 = vpop.permute.xlu0 %1590
  %1592 = vrot.lane.b32.xlu0 %v1425, 16
  %v1593 = vpop.permute.xlu0 %1592
  %1598 = vrot.lane.b32.xlu0 %v1501, 24
  %v1599 = vpop.permute.xlu0 %1598
  %1600 = vrot.lane.b32.xlu0 %v1577, 24
  %v1601 = vpop.permute.xlu0 %1600
  %v1604 = vsel %vm277, %v1045, %v1583
  %v1605 = vsel %vm277, %v1121, %v1585
  %vm1606 = vcmask 130048
  %v1607 = vsel %vm1606, %v1604, %v1591
  %v1608 = vsel %vm1606, %v1605, %v1593
  %vm1609 = vcmask 195584
  %v1610 = vsel %vm1609, %v1607, %v1599
  %v1611 = vsel %vm1609, %v1608, %v1601
  %v1612 = vld [vmem:[%s6] sm:$0xff]
  %v1613 = vld [vmem:[%s6 + $0x8] sm:$0xff]
  %v1614 = vld [vmem:[%s6 + $0x10] sm:$0xff]
  %v1615 = vld [vmem:[%s6 + $0x18] sm:$0xff]
  %v1616 = vld [vmem:[%s7] sm:$0x1]
  %v1618 = vlaneseq
  %v1619 = vshrl.u32 %v1618, 7
  %v1620 = vsub.s32 0, %v1619
  %v1621 = vrot.slane %v1616, %v1620
  %v1624 = vsel %vm69, %v1610, 0
  %v1627 = vsel %vm69, %v1611, 0
  %1629 = vmatprep.subr.mxu0 0.0
  %1630 = vmatpush1.msra.mxu0 0.0
  %1631 = vmatprep.subr.mxu0 0.0
  %1632 = vmatpush1.msra.mxu0 0.0
  %1633 = vmatprep.subr.mxu0 0.0
  %1634 = vmatpush1.msra.mxu0 0.0
  %1635 = vmatprep.subr.mxu0 0.0
  %1636 = vmatpush1.msra.mxu0 0.0
  %1637 = vmatprep.subr.mxu0 0.0
  %1638 = vmatpush1.msra.mxu0 0.0
  %1639 = vmatprep.subr.mxu0 0.0
  %1640 = vmatpush1.msra.mxu0 0.0
  %1641 = vmatprep.subr.mxu0 0.0
  %1642 = vmatpush1.msra.mxu0 0.0
  %1643 = vmatprep.subr.mxu0 0.0
  %1644 = vmatpush1.msra.mxu0 0.0
  %1645 = vmatprep.subr.mxu0 0.0
  %1646 = vmatpush1.msra.mxu0 0.0
  %1647 = vmatprep.subr.mxu0 0.0
  %1648 = vmatpush1.msra.mxu0 0.0
  %1649 = vmatprep.subr.mxu0 0.0
  %1650 = vmatpush1.msra.mxu0 0.0
  %1651 = vmatprep.subr.mxu0 0.0
  %1652 = vmatpush1.msra.mxu0 0.0
  %1653 = vmatprep.subr.mxu0 0.0
  %1654 = vmatpush1.msra.mxu0 %v1615
  %1655 = vmatprep.subr.mxu0 0.0
  %1656 = vmatpush1.msra.mxu0 %v1614
  %1657 = vmatprep.subr.mxu0 0.0
  %1658 = vmatpush1.msra.mxu0 %v1613
  %1659 = vmatprep.subr.mxu0 0.0
  %1660 = vmatpush1.msra.mxu0 %v1612
  %1661 = vmatprep.subr.mxu0 0.0
  %1662 = vmatpush2.msra.mxu0 0.0
  %1663 = vmatprep.subr.mxu0 0.0
  %1664 = vmatpush2.msra.mxu0 0.0
  %1665 = vmatprep.subr.mxu0 0.0
  %1666 = vmatpush2.msra.mxu0 0.0
  %1667 = vmatprep.subr.mxu0 0.0
  %1668 = vmatpush2.msra.mxu0 0.0
  %1669 = vmatprep.subr.mxu0 0.0
  %1670 = vmatpush2.msra.mxu0 0.0
  %1671 = vmatprep.subr.mxu0 0.0
  %1672 = vmatpush2.msra.mxu0 0.0
  %1673 = vmatprep.subr.mxu0 0.0
  %1674 = vmatpush2.msra.mxu0 0.0
  %1675 = vmatprep.subr.mxu0 0.0
  %1676 = vmatpush2.msra.mxu0 0.0
  %1677 = vmatprep.subr.mxu0 0.0
  %1678 = vmatpush2.msra.mxu0 0.0
  %1679 = vmatprep.subr.mxu0 0.0
  %1680 = vmatpush2.msra.mxu0 0.0
  %1681 = vmatprep.subr.mxu0 0.0
  %1682 = vmatpush2.msra.mxu0 0.0
  %1683 = vmatprep.subr.mxu0 0.0
  %1684 = vmatpush2.msra.mxu0 0.0
  %1685 = vmatprep.subr.mxu0 0.0
  %1686 = vmatpush2.msra.mxu0 0.0
  %1687 = vmatprep.subr.mxu0 0.0
  %1688 = vmatpush2.msra.mxu0 0.0
  %1689 = vmatprep.subr.mxu0 0.0
  %1690 = vmatpush2.msra.mxu0 0.0
  %1691 = vmatprep.subr.mxu0 0.0
  %1692 = vmatpush2.msra.mxu0 0.0
  %1693 = vmatprep.mubr.f32.mxu0 0.0
  %1694 = vmatmul.mubr.f32.gmra.mxu0 %v1624
  %v1695 = vpop.f32.mrf.mxu0
  %v1696 = vadd.f32 %v1621, %v1695
  %v1697 = vpop.f32.mrf.mxu0
  %1698 = vmatprep.mubr.f32.mxu0 0.0
  %1699 = vmatmul.mubr.f32.gmra.mxu0 %v1627
  %v1700 = vpop.f32.mrf.mxu0
  %v1701 = vadd.f32 %v1621, %v1700
  %v1702 = vpop.f32.mrf.mxu0
  %1703 = vdwg.mxu0
  %v1704 = vadd.f32 %v111, %v1696
  %v1705 = vadd.f32 %v112, %v1701
  %v1706 = vld [vmem:[%s8] sm:$0x1]
  %v1707 = vld [vmem:[%s9] sm:$0x1]
  %v1708 = vsel %vm69, %v1704, 0.0
  %1709 = vadd.xlane.f32.xlu0 %v1708
  %v1710 = vpop.xlane.xlu0 %1709
  %v1711 = vsel %vm69, %v1705, 0.0
  %1712 = vadd.xlane.f32.xlu0 %v1711
  %v1713 = vpop.xlane.xlu0 %1712
  %v1714 = vmul.f32 %v1710, %v76
  %v1715 = vmul.f32 %v1713, %v76
  %v1716 = vsub.f32 %v1704, %v1714
  %v1717 = vsub.f32 %v1705, %v1715
  %v1718 = vmul.f32 %v1716, %v1716
  %v1719 = vmul.f32 %v1717, %v1717
  %v1720 = vsel %vm69, %v1718, 0.0
  %1721 = vadd.xlane.f32.xlu0 %v1720
  %v1722 = vpop.xlane.xlu0 %1721
  %v1723 = vsel %vm69, %v1719, 0.0
  %1724 = vadd.xlane.f32.xlu0 %v1723
  %v1725 = vpop.xlane.xlu0 %1724
  %v1726 = vmul.f32 %v1722, %v76
  %v1727 = vmul.f32 %v1725, %v76
  %v1728 = vadd.f32 %v1726, 1e-05
  %v1729 = vadd.f32 %v1727, 1e-05
  %v1730 = vrsqrt.pop %v1728
  %v1731 = vrsqrt.pop %v1729
  %v1732 = vmul.f32 %v1716, %v1730
  %v1733 = vmul.f32 %v1717, %v1731
  %v1735 = vlaneseq
  %v1736 = vshrl.u32 %v1735, 7
  %v1737 = vsub.s32 0, %v1736
  %v1738 = vrot.slane %v1706, %v1737
  %v1740 = vmul.f32 %v1732, %v1738
  %v1741 = vmul.f32 %v1733, %v1738
  %v1743 = vlaneseq
  %v1744 = vshrl.u32 %v1743, 7
  %v1745 = vsub.s32 0, %v1744
  %v1746 = vrot.slane %v1707, %v1745
  %v1748 = vadd.f32 %v1740, %v1746
  %v1749 = vadd.f32 %v1741, %v1746
  %v1750 = vld [vmem:[%s10] sm:$0xff]
  %v1751 = vld [vmem:[%s10 + $0x8] sm:$0xff]
  %v1752 = vld [vmem:[%s10 + $0x10] sm:$0xff]
  %v1753 = vld [vmem:[%s10 + $0x18] sm:$0xff]
  %v1754 = vld [vmem:[%s11] sm:$0x1]
  %v1756 = vlaneseq
  %v1757 = vshrl.u32 %v1756, 7
  %v1758 = vsub.s32 0, %v1757
  %v1759 = vrot.slane %v1754, %v1758
  %v1762 = vsel %vm69, %v1748, 0
  %v1765 = vsel %vm69, %v1749, 0
  %1767 = vmatprep.subr.mxu0 0.0
  %1768 = vmatpush1.msra.mxu0 0.0
  %1769 = vmatprep.subr.mxu0 0.0
  %1770 = vmatpush1.msra.mxu0 0.0
  %1771 = vmatprep.subr.mxu0 0.0
  %1772 = vmatpush1.msra.mxu0 0.0
  %1773 = vmatprep.subr.mxu0 0.0
  %1774 = vmatpush1.msra.mxu0 0.0
  %1775 = vmatprep.subr.mxu0 0.0
  %1776 = vmatpush1.msra.mxu0 0.0
  %1777 = vmatprep.subr.mxu0 0.0
  %1778 = vmatpush1.msra.mxu0 0.0
  %1779 = vmatprep.subr.mxu0 0.0
  %1780 = vmatpush1.msra.mxu0 0.0
  %1781 = vmatprep.subr.mxu0 0.0
  %1782 = vmatpush1.msra.mxu0 0.0
  %1783 = vmatprep.subr.mxu0 0.0
  %1784 = vmatpush1.msra.mxu0 0.0
  %1785 = vmatprep.subr.mxu0 0.0
  %1786 = vmatpush1.msra.mxu0 0.0
  %1787 = vmatprep.subr.mxu0 0.0
  %1788 = vmatpush1.msra.mxu0 0.0
  %1789 = vmatprep.subr.mxu0 0.0
  %1790 = vmatpush1.msra.mxu0 0.0
  %1791 = vmatprep.subr.mxu0 0.0
  %1792 = vmatpush1.msra.mxu0 %v1753
  %1793 = vmatprep.subr.mxu0 0.0
  %1794 = vmatpush1.msra.mxu0 %v1752
  %1795 = vmatprep.subr.mxu0 0.0
  %1796 = vmatpush1.msra.mxu0 %v1751
  %1797 = vmatprep.subr.mxu0 0.0
  %1798 = vmatpush1.msra.mxu0 %v1750
  %1799 = vmatprep.subr.mxu0 0.0
  %1800 = vmatpush2.msra.mxu0 0.0
  %1801 = vmatprep.subr.mxu0 0.0
  %1802 = vmatpush2.msra.mxu0 0.0
  %1803 = vmatprep.subr.mxu0 0.0
  %1804 = vmatpush2.msra.mxu0 0.0
  %1805 = vmatprep.subr.mxu0 0.0
  %1806 = vmatpush2.msra.mxu0 0.0
  %1807 = vmatprep.subr.mxu0 0.0
  %1808 = vmatpush2.msra.mxu0 0.0
  %1809 = vmatprep.subr.mxu0 0.0
  %1810 = vmatpush2.msra.mxu0 0.0
  %1811 = vmatprep.subr.mxu0 0.0
  %1812 = vmatpush2.msra.mxu0 0.0
  %1813 = vmatprep.subr.mxu0 0.0
  %1814 = vmatpush2.msra.mxu0 0.0
  %1815 = vmatprep.subr.mxu0 0.0
  %1816 = vmatpush2.msra.mxu0 0.0
  %1817 = vmatprep.subr.mxu0 0.0
  %1818 = vmatpush2.msra.mxu0 0.0
  %1819 = vmatprep.subr.mxu0 0.0
  %1820 = vmatpush2.msra.mxu0 0.0
  %1821 = vmatprep.subr.mxu0 0.0
  %1822 = vmatpush2.msra.mxu0 0.0
  %1823 = vmatprep.subr.mxu0 0.0
  %1824 = vmatpush2.msra.mxu0 0.0
  %1825 = vmatprep.subr.mxu0 0.0
  %1826 = vmatpush2.msra.mxu0 0.0
  %1827 = vmatprep.subr.mxu0 0.0
  %1828 = vmatpush2.msra.mxu0 0.0
  %1829 = vmatprep.subr.mxu0 0.0
  %1830 = vmatpush2.msra.mxu0 0.0
  %1831 = vmatprep.mubr.f32.mxu0 0.0
  %1832 = vmatmul.mubr.f32.gmra.mxu0 %v1762
  %v1833 = vpop.f32.mrf.mxu0
  %v1834 = vadd.f32 %v1759, %v1833
  %v1835 = vpop.f32.mrf.mxu0
  %1836 = vmatprep.mubr.f32.mxu0 0.0
  %1837 = vmatmul.mubr.f32.gmra.mxu0 %v1765
  %v1838 = vpop.f32.mrf.mxu0
  %v1839 = vadd.f32 %v1759, %v1838
  %v1840 = vpop.f32.mrf.mxu0
  %1841 = vdwg.mxu0
  %v1842 = vmul.f32 %v1834, %v1834
  %v1843 = vmul.f32 %v1839, %v1839
  %v1844 = vmul.f32 %v1834, %v1842
  %v1845 = vmul.f32 %v1839, %v1843
  %v1846 = vmul.f32 %v1844, 0.044715
  %v1847 = vmul.f32 %v1845, 0.044715
  %v1848 = vadd.f32 %v1834, %v1846
  %v1849 = vadd.f32 %v1839, %v1847
  %v1850 = vmul.f32 %v1848, 0.7978846
  %v1851 = vmul.f32 %v1849, 0.7978846
  %v1852 = vtanh.pop %v1850
  %v1853 = vtanh.pop %v1851
  %v1854 = vadd.f32 %v1852, 1.0
  %v1855 = vadd.f32 %v1853, 1.0
  %v1856 = vmul.f32 %v1854, 0.5
  %v1857 = vmul.f32 %v1855, 0.5
  %v1858 = vmul.f32 %v1834, %v1856
  %v1859 = vmul.f32 %v1839, %v1857
  %v1860 = vld [vmem:[%s12] sm:$0xff]
  %v1861 = vld [vmem:[%s12 + $0x8] sm:$0xff]
  %v1862 = vld [vmem:[%s12 + $0x10] sm:$0xff]
  %v1863 = vld [vmem:[%s12 + $0x18] sm:$0xff]
  %v1864 = vld [vmem:[%s12 + $0x20] sm:$0xff]
  %v1865 = vld [vmem:[%s12 + $0x28] sm:$0xff]
  %v1866 = vld [vmem:[%s12 + $0x30] sm:$0xff]
  %v1867 = vld [vmem:[%s12 + $0x38] sm:$0xff]
  %v1868 = vld [vmem:[%s13] sm:$0x1]
  %v1870 = vlaneseq
  %v1871 = vshrl.u32 %v1870, 7
  %v1872 = vsub.s32 0, %v1871
  %v1873 = vrot.slane %v1868, %v1872
  %vm1875 = vcmask 523264
  %v1877 = vsel %vm1875, %v1858, 0
  %v1880 = vsel %vm1875, %v1859, 0
  %1882 = vmatprep.subr.mxu0 0.0
  %1883 = vmatpush1.msra.mxu0 0.0
  %1884 = vmatprep.subr.mxu0 0.0
  %1885 = vmatpush1.msra.mxu0 0.0
  %1886 = vmatprep.subr.mxu0 0.0
  %1887 = vmatpush1.msra.mxu0 0.0
  %1888 = vmatprep.subr.mxu0 0.0
  %1889 = vmatpush1.msra.mxu0 0.0
  %1890 = vmatprep.subr.mxu0 0.0
  %1891 = vmatpush1.msra.mxu0 0.0
  %1892 = vmatprep.subr.mxu0 0.0
  %1893 = vmatpush1.msra.mxu0 0.0
  %1894 = vmatprep.subr.mxu0 0.0
  %1895 = vmatpush1.msra.mxu0 0.0
  %1896 = vmatprep.subr.mxu0 0.0
  %1897 = vmatpush1.msra.mxu0 0.0
  %1898 = vmatprep.subr.mxu0 0.0
  %1899 = vmatpush1.msra.mxu0 %v1867
  %1900 = vmatprep.subr.mxu0 0.0
  %1901 = vmatpush1.msra.mxu0 %v1866
  %1902 = vmatprep.subr.mxu0 0.0
  %1903 = vmatpush1.msra.mxu0 %v1865
  %1904 = vmatprep.subr.mxu0 0.0
  %1905 = vmatpush1.msra.mxu0 %v1864
  %1906 = vmatprep.subr.mxu0 0.0
  %1907 = vmatpush1.msra.mxu0 %v1863
  %1908 = vmatprep.subr.mxu0 0.0
  %1909 = vmatpush1.msra.mxu0 %v1862
  %1910 = vmatprep.subr.mxu0 0.0
  %1911 = vmatpush1.msra.mxu0 %v1861
  %1912 = vmatprep.subr.mxu0 0.0
  %1913 = vmatpush1.msra.mxu0 %v1860
  %1914 = vmatprep.subr.mxu0 0.0
  %1915 = vmatpush2.msra.mxu0 0.0
  %1916 = vmatprep.subr.mxu0 0.0
  %1917 = vmatpush2.msra.mxu0 0.0
  %1918 = vmatprep.subr.mxu0 0.0
  %1919 = vmatpush2.msra.mxu0 0.0
  %1920 = vmatprep.subr.mxu0 0.0
  %1921 = vmatpush2.msra.mxu0 0.0
  %1922 = vmatprep.subr.mxu0 0.0
  %1923 = vmatpush2.msra.mxu0 0.0
  %1924 = vmatprep.subr.mxu0 0.0
  %1925 = vmatpush2.msra.mxu0 0.0
  %1926 = vmatprep.subr.mxu0 0.0
  %1927 = vmatpush2.msra.mxu0 0.0
  %1928 = vmatprep.subr.mxu0 0.0
  %1929 = vmatpush2.msra.mxu0 0.0
  %1930 = vmatprep.subr.mxu0 0.0
  %1931 = vmatpush2.msra.mxu0 0.0
  %1932 = vmatprep.subr.mxu0 0.0
  %1933 = vmatpush2.msra.mxu0 0.0
  %1934 = vmatprep.subr.mxu0 0.0
  %1935 = vmatpush2.msra.mxu0 0.0
  %1936 = vmatprep.subr.mxu0 0.0
  %1937 = vmatpush2.msra.mxu0 0.0
  %1938 = vmatprep.subr.mxu0 0.0
  %1939 = vmatpush2.msra.mxu0 0.0
  %1940 = vmatprep.subr.mxu0 0.0
  %1941 = vmatpush2.msra.mxu0 0.0
  %1942 = vmatprep.subr.mxu0 0.0
  %1943 = vmatpush2.msra.mxu0 0.0
  %1944 = vmatprep.subr.mxu0 0.0
  %1945 = vmatpush2.msra.mxu0 0.0
  %1946 = vmatprep.mubr.f32.mxu0 0.0
  %1947 = vmatmul.mubr.f32.gmra.mxu0 %v1877
  %v1948 = vpop.f32.mrf.mxu0
  %v1949 = vadd.f32 %v1873, %v1948
  %v1950 = vpop.f32.mrf.mxu0
  %1951 = vmatprep.mubr.f32.mxu0 0.0
  %1952 = vmatmul.mubr.f32.gmra.mxu0 %v1880
  %v1953 = vpop.f32.mrf.mxu0
  %v1954 = vadd.f32 %v1873, %v1953
  %v1955 = vpop.f32.mrf.mxu0
  %1956 = vdwg.mxu0
  %v1957 = vadd.f32 %v1748, %v1949
  %v1958 = vadd.f32 %v1749, %v1954
  %v1959 = vld [vmem:[%s14] sm:$0x1]
  %v1960 = vld [vmem:[%s15] sm:$0x1]
  %v1961 = vsel %vm69, %v1957, 0.0
  %1962 = vadd.xlane.f32.xlu0 %v1961
  %v1963 = vpop.xlane.xlu0 %1962
  %v1964 = vsel %vm69, %v1958, 0.0
  %1965 = vadd.xlane.f32.xlu0 %v1964
  %v1966 = vpop.xlane.xlu0 %1965
  %v1967 = vmul.f32 %v1963, %v76
  %v1968 = vmul.f32 %v1966, %v76
  %v1969 = vsub.f32 %v1957, %v1967
  %v1970 = vsub.f32 %v1958, %v1968
  %v1971 = vmul.f32 %v1969, %v1969
  %v1972 = vmul.f32 %v1970, %v1970
  %v1973 = vsel %vm69, %v1971, 0.0
  %1974 = vadd.xlane.f32.xlu0 %v1973
  %v1975 = vpop.xlane.xlu0 %1974
  %v1976 = vsel %vm69, %v1972, 0.0
  %1977 = vadd.xlane.f32.xlu0 %v1976
  %v1978 = vpop.xlane.xlu0 %1977
  %v1979 = vmul.f32 %v1975, %v76
  %v1980 = vmul.f32 %v1978, %v76
  %v1981 = vadd.f32 %v1979, 1e-05
  %v1982 = vadd.f32 %v1980, 1e-05
  %v1983 = vrsqrt.pop %v1981
  %v1984 = vrsqrt.pop %v1982
  %v1985 = vmul.f32 %v1969, %v1983
  %v1986 = vmul.f32 %v1970, %v1984
  %v1988 = vlaneseq
  %v1989 = vshrl.u32 %v1988, 7
  %v1990 = vsub.s32 0, %v1989
  %v1991 = vrot.slane %v1959, %v1990
  %v1993 = vmul.f32 %v1985, %v1991
  %v1994 = vmul.f32 %v1986, %v1991
  %v1996 = vlaneseq
  %v1997 = vshrl.u32 %v1996, 7
  %v1998 = vsub.s32 0, %v1997
  %v1999 = vrot.slane %v1960, %v1998
  %v2001 = vadd.f32 %v1993, %v1999
  %v2002 = vadd.f32 %v1994, %v1999
  %s2003 = scalar_lea.vmem %s4, 32
  %v2004 = vld [vmem:[%s2003] sm:$0xff]
  %v2005 = vld [vmem:[%s2003 + $0x8] sm:$0xff]
  %v2006 = vld [vmem:[%s2003 + $0x10] sm:$0xff]
  %v2007 = vld [vmem:[%s2003 + $0x18] sm:$0xff]
  %s2008 = scalar_lea.vmem %s5, 1
  %v2009 = vld [vmem:[%s2008] sm:$0x1]
  %v2011 = vlaneseq
  %v2012 = vshrl.u32 %v2011, 7
  %v2013 = vsub.s32 0, %v2012
  %v2014 = vrot.slane %v2009, %v2013
  %v2017 = vsel %vm69, %v2001, 0
  %v2020 = vsel %vm69, %v2002, 0
  %2022 = vmatprep.subr.mxu0 0.0
  %2023 = vmatpush1.msra.mxu0 0.0
  %2024 = vmatprep.subr.mxu0 0.0
  %2025 = vmatpush1.msra.mxu0 0.0
  %2026 = vmatprep.subr.mxu0 0.0
  %2027 = vmatpush1.msra.mxu0 0.0
  %2028 = vmatprep.subr.mxu0 0.0
  %2029 = vmatpush1.msra.mxu0 0.0
  %2030 = vmatprep.subr.mxu0 0.0
  %2031 = vmatpush1.msra.mxu0 0.0
  %2032 = vmatprep.subr.mxu0 0.0
  %2033 = vmatpush1.msra.mxu0 0.0
  %2034 = vmatprep.subr.mxu0 0.0
  %2035 = vmatpush1.msra.mxu0 0.0
  %2036 = vmatprep.subr.mxu0 0.0
  %2037 = vmatpush1.msra.mxu0 0.0
  %2038 = vmatprep.subr.mxu0 0.0
  %2039 = vmatpush1.msra.mxu0 0.0
  %2040 = vmatprep.subr.mxu0 0.0
  %2041 = vmatpush1.msra.mxu0 0.0
  %2042 = vmatprep.subr.mxu0 0.0
  %2043 = vmatpush1.msra.mxu0 0.0
  %2044 = vmatprep.subr.mxu0 0.0
  %2045 = vmatpush1.msra.mxu0 0.0
  %2046 = vmatprep.subr.mxu0 0.0
  %2047 = vmatpush1.msra.mxu0 %v2007
  %2048 = vmatprep.subr.mxu0 0.0
  %2049 = vmatpush1.msra.mxu0 %v2006
  %2050 = vmatprep.subr.mxu0 0.0
  %2051 = vmatpush1.msra.mxu0 %v2005
  %2052 = vmatprep.subr.mxu0 0.0
  %2053 = vmatpush1.msra.mxu0 %v2004
  %2054 = vmatprep.subr.mxu0 0.0
  %2055 = vmatpush2.msra.mxu0 0.0
  %2056 = vmatprep.subr.mxu0 0.0
  %2057 = vmatpush2.msra.mxu0 0.0
  %2058 = vmatprep.subr.mxu0 0.0
  %2059 = vmatpush2.msra.mxu0 0.0
  %2060 = vmatprep.subr.mxu0 0.0
  %2061 = vmatpush2.msra.mxu0 0.0
  %2062 = vmatprep.subr.mxu0 0.0
  %2063 = vmatpush2.msra.mxu0 0.0
  %2064 = vmatprep.subr.mxu0 0.0
  %2065 = vmatpush2.msra.mxu0 0.0
  %2066 = vmatprep.subr.mxu0 0.0
  %2067 = vmatpush2.msra.mxu0 0.0
  %2068 = vmatprep.subr.mxu0 0.0
  %2069 = vmatpush2.msra.mxu0 0.0
  %2070 = vmatprep.subr.mxu0 0.0
  %2071 = vmatpush2.msra.mxu0 0.0
  %2072 = vmatprep.subr.mxu0 0.0
  %2073 = vmatpush2.msra.mxu0 0.0
  %2074 = vmatprep.subr.mxu0 0.0
  %2075 = vmatpush2.msra.mxu0 0.0
  %2076 = vmatprep.subr.mxu0 0.0
  %2077 = vmatpush2.msra.mxu0 0.0
  %2078 = vmatprep.subr.mxu0 0.0
  %2079 = vmatpush2.msra.mxu0 0.0
  %2080 = vmatprep.subr.mxu0 0.0
  %2081 = vmatpush2.msra.mxu0 0.0
  %2082 = vmatprep.subr.mxu0 0.0
  %2083 = vmatpush2.msra.mxu0 0.0
  %2084 = vmatprep.subr.mxu0 0.0
  %2085 = vmatpush2.msra.mxu0 0.0
  %2086 = vmatprep.mubr.f32.mxu0 0.0
  %2087 = vmatmul.mubr.f32.gmra.mxu0 %v2017
  %v2088 = vpop.f32.mrf.mxu0
  %v2089 = vadd.f32 %v2014, %v2088
  %v2090 = vpop.f32.mrf.mxu0
  %2091 = vmatprep.mubr.f32.mxu0 0.0
  %2092 = vmatmul.mubr.f32.gmra.mxu0 %v2020
  %v2093 = vpop.f32.mrf.mxu0
  %v2094 = vadd.f32 %v2014, %v2093
  %v2095 = vpop.f32.mrf.mxu0
  %2096 = vdwg.mxu0
  %2099 = vrot.lane.b32.xlu0 %v2089, 120
  %v2100 = vpop.permute.xlu0 %2099
  %2101 = vrot.lane.b32.xlu0 %v2094, 120
  %v2102 = vpop.permute.xlu0 %2101
  %2103 = vrot.lane.b32.xlu0 %v2089, 112
  %v2104 = vpop.permute.xlu0 %2103
  %2105 = vrot.lane.b32.xlu0 %v2094, 112
  %v2106 = vpop.permute.xlu0 %2105
  %2107 = vrot.lane.b32.xlu0 %v2089, 104
  %v2108 = vpop.permute.xlu0 %2107
  %2109 = vrot.lane.b32.xlu0 %v2094, 104
  %v2110 = vpop.permute.xlu0 %2109
  %2111 = vrot.lane.b32.xlu0 %v2089, 96
  %v2112 = vpop.permute.xlu0 %2111
  %v2113 = vsel %vm277, %v2089, 0
  %v2115 = vsel %vm277, %v2112, 0
  %2117 = vmatprep.subr.mxu0 0.0
  %2118 = vmatpush1.xpose.msra.mxu0 0.0
  %2119 = vmatprep.subr.mxu0 0.0
  %2120 = vmatpush1.xpose.msra.mxu0 0.0
  %2121 = vmatprep.subr.mxu0 0.0
  %2122 = vmatpush1.xpose.msra.mxu0 0.0
  %2123 = vmatprep.subr.mxu0 0.0
  %2124 = vmatpush1.xpose.msra.mxu0 0.0
  %2125 = vmatprep.subr.mxu0 0.0
  %2126 = vmatpush1.xpose.msra.mxu0 0.0
  %2127 = vmatprep.subr.mxu0 0.0
  %2128 = vmatpush1.xpose.msra.mxu0 0.0
  %2129 = vmatprep.subr.mxu0 0.0
  %2130 = vmatpush1.xpose.msra.mxu0 0.0
  %2131 = vmatprep.subr.mxu0 0.0
  %2132 = vmatpush1.xpose.msra.mxu0 0.0
  %2133 = vmatprep.subr.mxu0 0.0
  %2134 = vmatpush1.xpose.msra.mxu0 0.0
  %2135 = vmatprep.subr.mxu0 0.0
  %2136 = vmatpush1.xpose.msra.mxu0 0.0
  %2137 = vmatprep.subr.mxu0 0.0
  %2138 = vmatpush1.xpose.msra.mxu0 0.0
  %2139 = vmatprep.subr.mxu0 0.0
  %2140 = vmatpush1.xpose.msra.mxu0 0.0
  %2141 = vmatprep.subr.mxu0 0.0
  %2142 = vmatpush1.xpose.msra.mxu0 0.0
  %2143 = vmatprep.subr.mxu0 0.0
  %2144 = vmatpush1.xpose.msra.mxu0 0.0
  %2145 = vmatprep.subr.mxu0 0.0
  %2146 = vmatpush1.xpose.msra.mxu0 0.0
  %2147 = vmatprep.subr.mxu0 0.0
  %2148 = vmatpush1.xpose.msra.mxu0 %v2115
  %2149 = vmatprep.subr.mxu0 0.0
  %2150 = vmatpush2.xpose.msra.mxu0 0.0
  %2151 = vmatprep.subr.mxu0 0.0
  %2152 = vmatpush2.xpose.msra.mxu0 0.0
  %2153 = vmatprep.subr.mxu0 0.0
  %2154 = vmatpush2.xpose.msra.mxu0 0.0
  %2155 = vmatprep.subr.mxu0 0.0
  %2156 = vmatpush2.xpose.msra.mxu0 0.0
  %2157 = vmatprep.subr.mxu0 0.0
  %2158 = vmatpush2.xpose.msra.mxu0 0.0
  %2159 = vmatprep.subr.mxu0 0.0
  %2160 = vmatpush2.xpose.msra.mxu0 0.0
  %2161 = vmatprep.subr.mxu0 0.0
  %2162 = vmatpush2.xpose.msra.mxu0 0.0
  %2163 = vmatprep.subr.mxu0 0.0
  %2164 = vmatpush2.xpose.msra.mxu0 0.0
  %2165 = vmatprep.subr.mxu0 0.0
  %2166 = vmatpush2.xpose.msra.mxu0 0.0
  %2167 = vmatprep.subr.mxu0 0.0
  %2168 = vmatpush2.xpose.msra.mxu0 0.0
  %2169 = vmatprep.subr.mxu0 0.0
  %2170 = vmatpush2.xpose.msra.mxu0 0.0
  %2171 = vmatprep.subr.mxu0 0.0
  %2172 = vmatpush2.xpose.msra.mxu0 0.0
  %2173 = vmatprep.subr.mxu0 0.0
  %2174 = vmatpush2.xpose.msra.mxu0 0.0
  %2175 = vmatprep.subr.mxu0 0.0
  %2176 = vmatpush2.xpose.msra.mxu0 0.0
  %2177 = vmatprep.subr.mxu0 0.0
  %2178 = vmatpush2.xpose.msra.mxu0 0.0
  %2179 = vmatprep.subr.mxu0 0.0
  %2180 = vmatpush2.xpose.msra.mxu0 0.0
  %2181 = vmatprep.mubr.f32.mxu0 0.0
  %2182 = vmatmul.mubr.f32.gmra.mxu0 %v2113
  %v2183 = vpop.f32.mrf.mxu0
  %v2184 = vadd.f32 %v238, %v2183
  %v2185 = vpop.f32.mrf.mxu0
  %2186 = vdwg.mxu0
  %2187 = vrot.lane.b32.xlu0 %v2094, 96
  %v2188 = vpop.permute.xlu0 %2187
  %v2189 = vsel %vm277, %v2094, 0
  %v2191 = vsel %vm277, %v2188, 0
  %2193 = vmatprep.subr.mxu0 0.0
  %2194 = vmatpush1.xpose.msra.mxu0 0.0
  %2195 = vmatprep.subr.mxu0 0.0
  %2196 = vmatpush1.xpose.msra.mxu0 0.0
  %2197 = vmatprep.subr.mxu0 0.0
  %2198 = vmatpush1.xpose.msra.mxu0 0.0
  %2199 = vmatprep.subr.mxu0 0.0
  %2200 = vmatpush1.xpose.msra.mxu0 0.0
  %2201 = vmatprep.subr.mxu0 0.0
  %2202 = vmatpush1.xpose.msra.mxu0 0.0
  %2203 = vmatprep.subr.mxu0 0.0
  %2204 = vmatpush1.xpose.msra.mxu0 0.0
  %2205 = vmatprep.subr.mxu0 0.0
  %2206 = vmatpush1.xpose.msra.mxu0 0.0
  %2207 = vmatprep.subr.mxu0 0.0
  %2208 = vmatpush1.xpose.msra.mxu0 0.0
  %2209 = vmatprep.subr.mxu0 0.0
  %2210 = vmatpush1.xpose.msra.mxu0 0.0
  %2211 = vmatprep.subr.mxu0 0.0
  %2212 = vmatpush1.xpose.msra.mxu0 0.0
  %2213 = vmatprep.subr.mxu0 0.0
  %2214 = vmatpush1.xpose.msra.mxu0 0.0
  %2215 = vmatprep.subr.mxu0 0.0
  %2216 = vmatpush1.xpose.msra.mxu0 0.0
  %2217 = vmatprep.subr.mxu0 0.0
  %2218 = vmatpush1.xpose.msra.mxu0 0.0
  %2219 = vmatprep.subr.mxu0 0.0
  %2220 = vmatpush1.xpose.msra.mxu0 0.0
  %2221 = vmatprep.subr.mxu0 0.0
  %2222 = vmatpush1.xpose.msra.mxu0 0.0
  %2223 = vmatprep.subr.mxu0 0.0
  %2224 = vmatpush1.xpose.msra.mxu0 %v2191
  %2225 = vmatprep.subr.mxu0 0.0
  %2226 = vmatpush2.xpose.msra.mxu0 0.0
  %2227 = vmatprep.subr.mxu0 0.0
  %2228 = vmatpush2.xpose.msra.mxu0 0.0
  %2229 = vmatprep.subr.mxu0 0.0
  %2230 = vmatpush2.xpose.msra.mxu0 0.0
  %2231 = vmatprep.subr.mxu0 0.0
  %2232 = vmatpush2.xpose.msra.mxu0 0.0
  %2233 = vmatprep.subr.mxu0 0.0
  %2234 = vmatpush2.xpose.msra.mxu0 0.0
  %2235 = vmatprep.subr.mxu0 0.0
  %2236 = vmatpush2.xpose.msra.mxu0 0.0
  %2237 = vmatprep.subr.mxu0 0.0
  %2238 = vmatpush2.xpose.msra.mxu0 0.0
  %2239 = vmatprep.subr.mxu0 0.0
  %2240 = vmatpush2.xpose.msra.mxu0 0.0
  %2241 = vmatprep.subr.mxu0 0.0
  %2242 = vmatpush2.xpose.msra.mxu0 0.0
  %2243 = vmatprep.subr.mxu0 0.0
  %2244 = vmatpush2.xpose.msra.mxu0 0.0
  %2245 = vmatprep.subr.mxu0 0.0
  %2246 = vmatpush2.xpose.msra.mxu0 0.0
  %2247 = vmatprep.subr.mxu0 0.0
  %2248 = vmatpush2.xpose.msra.mxu0 0.0
  %2249 = vmatprep.subr.mxu0 0.0
  %2250 = vmatpush2.xpose.msra.mxu0 0.0
  %2251 = vmatprep.subr.mxu0 0.0
  %2252 = vmatpush2.xpose.msra.mxu0 0.0
  %2253 = vmatprep.subr.mxu0 0.0
  %2254 = vmatpush2.xpose.msra.mxu0 0.0
  %2255 = vmatprep.subr.mxu0 0.0
  %2256 = vmatpush2.xpose.msra.mxu0 0.0
  %2257 = vmatprep.mubr.f32.mxu0 0.0
  %2258 = vmatmul.mubr.f32.gmra.mxu0 %v2189
  %v2259 = vpop.f32.mrf.mxu0
  %v2260 = vadd.f32 %v242, %v2259
  %v2261 = vpop.f32.mrf.mxu0
  %2262 = vdwg.mxu0
  %2263 = vrot.lane.b32.xlu0 %v2100, 96
  %v2264 = vpop.permute.xlu0 %2263
  %v2265 = vsel %vm277, %v2100, 0
  %v2267 = vsel %vm277, %v2264, 0
  %2269 = vmatprep.subr.mxu0 0.0
  %2270 = vmatpush1.xpose.msra.mxu0 0.0
  %2271 = vmatprep.subr.mxu0 0.0
  %2272 = vmatpush1.xpose.msra.mxu0 0.0
  %2273 = vmatprep.subr.mxu0 0.0
  %2274 = vmatpush1.xpose.msra.mxu0 0.0
  %2275 = vmatprep.subr.mxu0 0.0
  %2276 = vmatpush1.xpose.msra.mxu0 0.0
  %2277 = vmatprep.subr.mxu0 0.0
  %2278 = vmatpush1.xpose.msra.mxu0 0.0
  %2279 = vmatprep.subr.mxu0 0.0
  %2280 = vmatpush1.xpose.msra.mxu0 0.0
  %2281 = vmatprep.subr.mxu0 0.0
  %2282 = vmatpush1.xpose.msra.mxu0 0.0
  %2283 = vmatprep.subr.mxu0 0.0
  %2284 = vmatpush1.xpose.msra.mxu0 0.0
  %2285 = vmatprep.subr.mxu0 0.0
  %2286 = vmatpush1.xpose.msra.mxu0 0.0
  %2287 = vmatprep.subr.mxu0 0.0
  %2288 = vmatpush1.xpose.msra.mxu0 0.0
  %2289 = vmatprep.subr.mxu0 0.0
  %2290 = vmatpush1.xpose.msra.mxu0 0.0
  %2291 = vmatprep.subr.mxu0 0.0
  %2292 = vmatpush1.xpose.msra.mxu0 0.0
  %2293 = vmatprep.subr.mxu0 0.0
  %2294 = vmatpush1.xpose.msra.mxu0 0.0
  %2295 = vmatprep.subr.mxu0 0.0
  %2296 = vmatpush1.xpose.msra.mxu0 0.0
  %2297 = vmatprep.subr.mxu0 0.0
  %2298 = vmatpush1.xpose.msra.mxu0 0.0
  %2299 = vmatprep.subr.mxu0 0.0
  %2300 = vmatpush1.xpose.msra.mxu0 %v2267
  %2301 = vmatprep.subr.mxu0 0.0
  %2302 = vmatpush2.xpose.msra.mxu0 0.0
  %2303 = vmatprep.subr.mxu0 0.0
  %2304 = vmatpush2.xpose.msra.mxu0 0.0
  %2305 = vmatprep.subr.mxu0 0.0
  %2306 = vmatpush2.xpose.msra.mxu0 0.0
  %2307 = vmatprep.subr.mxu0 0.0
  %2308 = vmatpush2.xpose.msra.mxu0 0.0
  %2309 = vmatprep.subr.mxu0 0.0
  %2310 = vmatpush2.xpose.msra.mxu0 0.0
  %2311 = vmatprep.subr.mxu0 0.0
  %2312 = vmatpush2.xpose.msra.mxu0 0.0
  %2313 = vmatprep.subr.mxu0 0.0
  %2314 = vmatpush2.xpose.msra.mxu0 0.0
  %2315 = vmatprep.subr.mxu0 0.0
  %2316 = vmatpush2.xpose.msra.mxu0 0.0
  %2317 = vmatprep.subr.mxu0 0.0
  %2318 = vmatpush2.xpose.msra.mxu0 0.0
  %2319 = vmatprep.subr.mxu0 0.0
  %2320 = vmatpush2.xpose.msra.mxu0 0.0
  %2321 = vmatprep.subr.mxu0 0.0
  %2322 = vmatpush2.xpose.msra.mxu0 0.0
  %2323 = vmatprep.subr.mxu0 0.0
  %2324 = vmatpush2.xpose.msra.mxu0 0.0
  %2325 = vmatprep.subr.mxu0 0.0
  %2326 = vmatpush2.xpose.msra.mxu0 0.0
  %2327 = vmatprep.subr.mxu0 0.0
  %2328 = vmatpush2.xpose.msra.mxu0 0.0
  %2329 = vmatprep.subr.mxu0 0.0
  %2330 = vmatpush2.xpose.msra.mxu0 0.0
  %2331 = vmatprep.subr.mxu0 0.0
  %2332 = vmatpush2.xpose.msra.mxu0 0.0
  %2333 = vmatprep.mubr.f32.mxu0 0.0
  %2334 = vmatmul.mubr.f32.gmra.mxu0 %v2265
  %v2335 = vpop.f32.mrf.mxu0
  %v2336 = vadd.f32 %v246, %v2335
  %v2337 = vpop.f32.mrf.mxu0
  %2338 = vdwg.mxu0
  %2339 = vrot.lane.b32.xlu0 %v2102, 96
  %v2340 = vpop.permute.xlu0 %2339
  %v2341 = vsel %vm277, %v2102, 0
  %v2343 = vsel %vm277, %v2340, 0
  %2345 = vmatprep.subr.mxu0 0.0
  %2346 = vmatpush1.xpose.msra.mxu0 0.0
  %2347 = vmatprep.subr.mxu0 0.0
  %2348 = vmatpush1.xpose.msra.mxu0 0.0
  %2349 = vmatprep.subr.mxu0 0.0
  %2350 = vmatpush1.xpose.msra.mxu0 0.0
  %2351 = vmatprep.subr.mxu0 0.0
  %2352 = vmatpush1.xpose.msra.mxu0 0.0
  %2353 = vmatprep.subr.mxu0 0.0
  %2354 = vmatpush1.xpose.msra.mxu0 0.0
  %2355 = vmatprep.subr.mxu0 0.0
  %2356 = vmatpush1.xpose.msra.mxu0 0.0
  %2357 = vmatprep.subr.mxu0 0.0
  %2358 = vmatpush1.xpose.msra.mxu0 0.0
  %2359 = vmatprep.subr.mxu0 0.0
  %2360 = vmatpush1.xpose.msra.mxu0 0.0
  %2361 = vmatprep.subr.mxu0 0.0
  %2362 = vmatpush1.xpose.msra.mxu0 0.0
  %2363 = vmatprep.subr.mxu0 0.0
  %2364 = vmatpush1.xpose.msra.mxu0 0.0
  %2365 = vmatprep.subr.mxu0 0.0
  %2366 = vmatpush1.xpose.msra.mxu0 0.0
  %2367 = vmatprep.subr.mxu0 0.0
  %2368 = vmatpush1.xpose.msra.mxu0 0.0
  %2369 = vmatprep.subr.mxu0 0.0
  %2370 = vmatpush1.xpose.msra.mxu0 0.0
  %2371 = vmatprep.subr.mxu0 0.0
  %2372 = vmatpush1.xpose.msra.mxu0 0.0
  %2373 = vmatprep.subr.mxu0 0.0
  %2374 = vmatpush1.xpose.msra.mxu0 0.0
  %2375 = vmatprep.subr.mxu0 0.0
  %2376 = vmatpush1.xpose.msra.mxu0 %v2343
  %2377 = vmatprep.subr.mxu0 0.0
  %2378 = vmatpush2.xpose.msra.mxu0 0.0
  %2379 = vmatprep.subr.mxu0 0.0
  %2380 = vmatpush2.xpose.msra.mxu0 0.0
  %2381 = vmatprep.subr.mxu0 0.0
  %2382 = vmatpush2.xpose.msra.mxu0 0.0
  %2383 = vmatprep.subr.mxu0 0.0
  %2384 = vmatpush2.xpose.msra.mxu0 0.0
  %2385 = vmatprep.subr.mxu0 0.0
  %2386 = vmatpush2.xpose.msra.mxu0 0.0
  %2387 = vmatprep.subr.mxu0 0.0
  %2388 = vmatpush2.xpose.msra.mxu0 0.0
  %2389 = vmatprep.subr.mxu0 0.0
  %2390 = vmatpush2.xpose.msra.mxu0 0.0
  %2391 = vmatprep.subr.mxu0 0.0
  %2392 = vmatpush2.xpose.msra.mxu0 0.0
  %2393 = vmatprep.subr.mxu0 0.0
  %2394 = vmatpush2.xpose.msra.mxu0 0.0
  %2395 = vmatprep.subr.mxu0 0.0
  %2396 = vmatpush2.xpose.msra.mxu0 0.0
  %2397 = vmatprep.subr.mxu0 0.0
  %2398 = vmatpush2.xpose.msra.mxu0 0.0
  %2399 = vmatprep.subr.mxu0 0.0
  %2400 = vmatpush2.xpose.msra.mxu0 0.0
  %2401 = vmatprep.subr.mxu0 0.0
  %2402 = vmatpush2.xpose.msra.mxu0 0.0
  %2403 = vmatprep.subr.mxu0 0.0
  %2404 = vmatpush2.xpose.msra.mxu0 0.0
  %2405 = vmatprep.subr.mxu0 0.0
  %2406 = vmatpush2.xpose.msra.mxu0 0.0
  %2407 = vmatprep.subr.mxu0 0.0
  %2408 = vmatpush2.xpose.msra.mxu0 0.0
  %2409 = vmatprep.mubr.f32.mxu0 0.0
  %2410 = vmatmul.mubr.f32.gmra.mxu0 %v2341
  %v2411 = vpop.f32.mrf.mxu0
  %v2412 = vadd.f32 %v250, %v2411
  %v2413 = vpop.f32.mrf.mxu0
  %2414 = vdwg.mxu0
  %2415 = vrot.lane.b32.xlu0 %v2104, 96
  %v2416 = vpop.permute.xlu0 %2415
  %v2417 = vsel %vm277, %v2104, 0
  %v2419 = vsel %vm277, %v2416, 0
  %2421 = vmatprep.subr.mxu0 0.0
  %2422 = vmatpush1.xpose.msra.mxu0 0.0
  %2423 = vmatprep.subr.mxu0 0.0
  %2424 = vmatpush1.xpose.msra.mxu0 0.0
  %2425 = vmatprep.subr.mxu0 0.0
  %2426 = vmatpush1.xpose.msra.mxu0 0.0
  %2427 = vmatprep.subr.mxu0 0.0
  %2428 = vmatpush1.xpose.msra.mxu0 0.0
  %2429 = vmatprep.subr.mxu0 0.0
  %2430 = vmatpush1.xpose.msra.mxu0 0.0
  %2431 = vmatprep.subr.mxu0 0.0
  %2432 = vmatpush1.xpose.msra.mxu0 0.0
  %2433 = vmatprep.subr.mxu0 0.0
  %2434 = vmatpush1.xpose.msra.mxu0 0.0
  %2435 = vmatprep.subr.mxu0 0.0
  %2436 = vmatpush1.xpose.msra.mxu0 0.0
  %2437 = vmatprep.subr.mxu0 0.0
  %2438 = vmatpush1.xpose.msra.mxu0 0.0
  %2439 = vmatprep.subr.mxu0 0.0
  %2440 = vmatpush1.xpose.msra.mxu0 0.0
  %2441 = vmatprep.subr.mxu0 0.0
  %2442 = vmatpush1.xpose.msra.mxu0 0.0
  %2443 = vmatprep.subr.mxu0 0.0
  %2444 = vmatpush1.xpose.msra.mxu0 0.0
  %2445 = vmatprep.subr.mxu0 0.0
  %2446 = vmatpush1.xpose.msra.mxu0 0.0
  %2447 = vmatprep.subr.mxu0 0.0
  %2448 = vmatpush1.xpose.msra.mxu0 0.0
  %2449 = vmatprep.subr.mxu0 0.0
  %2450 = vmatpush1.xpose.msra.mxu0 0.0
  %2451 = vmatprep.subr.mxu0 0.0
  %2452 = vmatpush1.xpose.msra.mxu0 %v2419
  %2453 = vmatprep.subr.mxu0 0.0
  %2454 = vmatpush2.xpose.msra.mxu0 0.0
  %2455 = vmatprep.subr.mxu0 0.0
  %2456 = vmatpush2.xpose.msra.mxu0 0.0
  %2457 = vmatprep.subr.mxu0 0.0
  %2458 = vmatpush2.xpose.msra.mxu0 0.0
  %2459 = vmatprep.subr.mxu0 0.0
  %2460 = vmatpush2.xpose.msra.mxu0 0.0
  %2461 = vmatprep.subr.mxu0 0.0
  %2462 = vmatpush2.xpose.msra.mxu0 0.0
  %2463 = vmatprep.subr.mxu0 0.0
  %2464 = vmatpush2.xpose.msra.mxu0 0.0
  %2465 = vmatprep.subr.mxu0 0.0
  %2466 = vmatpush2.xpose.msra.mxu0 0.0
  %2467 = vmatprep.subr.mxu0 0.0
  %2468 = vmatpush2.xpose.msra.mxu0 0.0
  %2469 = vmatprep.subr.mxu0 0.0
  %2470 = vmatpush2.xpose.msra.mxu0 0.0
  %2471 = vmatprep.subr.mxu0 0.0
  %2472 = vmatpush2.xpose.msra.mxu0 0.0
  %2473 = vmatprep.subr.mxu0 0.0
  %2474 = vmatpush2.xpose.msra.mxu0 0.0
  %2475 = vmatprep.subr.mxu0 0.0
  %2476 = vmatpush2.xpose.msra.mxu0 0.0
  %2477 = vmatprep.subr.mxu0 0.0
  %2478 = vmatpush2.xpose.msra.mxu0 0.0
  %2479 = vmatprep.subr.mxu0 0.0
  %2480 = vmatpush2.xpose.msra.mxu0 0.0
  %2481 = vmatprep.subr.mxu0 0.0
  %2482 = vmatpush2.xpose.msra.mxu0 0.0
  %2483 = vmatprep.subr.mxu0 0.0
  %2484 = vmatpush2.xpose.msra.mxu0 0.0
  %2485 = vmatprep.mubr.f32.mxu0 0.0
  %2486 = vmatmul.mubr.f32.gmra.mxu0 %v2417
  %v2487 = vpop.f32.mrf.mxu0
  %v2488 = vadd.f32 %v254, %v2487
  %v2489 = vpop.f32.mrf.mxu0
  %2490 = vdwg.mxu0
  %2491 = vrot.lane.b32.xlu0 %v2106, 96
  %v2492 = vpop.permute.xlu0 %2491
  %v2493 = vsel %vm277, %v2106, 0
  %v2495 = vsel %vm277, %v2492, 0
  %2497 = vmatprep.subr.mxu0 0.0
  %2498 = vmatpush1.xpose.msra.mxu0 0.0
  %2499 = vmatprep.subr.mxu0 0.0
  %2500 = vmatpush1.xpose.msra.mxu0 0.0
  %2501 = vmatprep.subr.mxu0 0.0
  %2502 = vmatpush1.xpose.msra.mxu0 0.0
  %2503 = vmatprep.subr.mxu0 0.0
  %2504 = vmatpush1.xpose.msra.mxu0 0.0
  %2505 = vmatprep.subr.mxu0 0.0
  %2506 = vmatpush1.xpose.msra.mxu0 0.0
  %2507 = vmatprep.subr.mxu0 0.0
  %2508 = vmatpush1.xpose.msra.mxu0 0.0
  %2509 = vmatprep.subr.mxu0 0.0
  %2510 = vmatpush1.xpose.msra.mxu0 0.0
  %2511 = vmatprep.subr.mxu0 0.0
  %2512 = vmatpush1.xpose.msra.mxu0 0.0
  %2513 = vmatprep.subr.mxu0 0.0
  %2514 = vmatpush1.xpose.msra.mxu0 0.0
  %2515 = vmatprep.subr.mxu0 0.0
  %2516 = vmatpush1.xpose.msra.mxu0 0.0
  %2517 = vmatprep.subr.mxu0 0.0
  %2518 = vmatpush1.xpose.msra.mxu0 0.0
  %2519 = vmatprep.subr.mxu0 0.0
  %2520 = vmatpush1.xpose.msra.mxu0 0.0
  %2521 = vmatprep.subr.mxu0 0.0
  %2522 = vmatpush1.xpose.msra.mxu0 0.0
  %2523 = vmatprep.subr.mxu0 0.0
  %2524 = vmatpush1.xpose.msra.mxu0 0.0
  %2525 = vmatprep.subr.mxu0 0.0
  %2526 = vmatpush1.xpose.msra.mxu0 0.0
  %2527 = vmatprep.subr.mxu0 0.0
  %2528 = vmatpush1.xpose.msra.mxu0 %v2495
  %2529 = vmatprep.subr.mxu0 0.0
  %2530 = vmatpush2.xpose.msra.mxu0 0.0
  %2531 = vmatprep.subr.mxu0 0.0
  %2532 = vmatpush2.xpose.msra.mxu0 0.0
  %2533 = vmatprep.subr.mxu0 0.0
  %2534 = vmatpush2.xpose.msra.mxu0 0.0
  %2535 = vmatprep.subr.mxu0 0.0
  %2536 = vmatpush2.xpose.msra.mxu0 0.0
  %2537 = vmatprep.subr.mxu0 0.0
  %2538 = vmatpush2.xpose.msra.mxu0 0.0
  %2539 = vmatprep.subr.mxu0 0.0
  %2540 = vmatpush2.xpose.msra.mxu0 0.0
  %2541 = vmatprep.subr.mxu0 0.0
  %2542 = vmatpush2.xpose.msra.mxu0 0.0
  %2543 = vmatprep.subr.mxu0 0.0
  %2544 = vmatpush2.xpose.msra.mxu0 0.0
  %2545 = vmatprep.subr.mxu0 0.0
  %2546 = vmatpush2.xpose.msra.mxu0 0.0
  %2547 = vmatprep.subr.mxu0 0.0
  %2548 = vmatpush2.xpose.msra.mxu0 0.0
  %2549 = vmatprep.subr.mxu0 0.0
  %2550 = vmatpush2.xpose.msra.mxu0 0.0
  %2551 = vmatprep.subr.mxu0 0.0
  %2552 = vmatpush2.xpose.msra.mxu0 0.0
  %2553 = vmatprep.subr.mxu0 0.0
  %2554 = vmatpush2.xpose.msra.mxu0 0.0
  %2555 = vmatprep.subr.mxu0 0.0
  %2556 = vmatpush2.xpose.msra.mxu0 0.0
  %2557 = vmatprep.subr.mxu0 0.0
  %2558 = vmatpush2.xpose.msra.mxu0 0.0
  %2559 = vmatprep.subr.mxu0 0.0
  %2560 = vmatpush2.xpose.msra.mxu0 0.0
  %2561 = vmatprep.mubr.f32.mxu0 0.0
  %2562 = vmatmul.mubr.f32.gmra.mxu0 %v2493
  %v2563 = vpop.f32.mrf.mxu0
  %v2564 = vadd.f32 %v258, %v2563
  %v2565 = vpop.f32.mrf.mxu0
  %2566 = vdwg.mxu0
  %2567 = vrot.lane.b32.xlu0 %v2108, 96
  %v2568 = vpop.permute.xlu0 %2567
  %v2569 = vsel %vm277, %v2108, 0
  %v2571 = vsel %vm277, %v2568, 0
  %2573 = vmatprep.subr.mxu0 0.0
  %2574 = vmatpush1.xpose.msra.mxu0 0.0
  %2575 = vmatprep.subr.mxu0 0.0
  %2576 = vmatpush1.xpose.msra.mxu0 0.0
  %2577 = vmatprep.subr.mxu0 0.0
  %2578 = vmatpush1.xpose.msra.mxu0 0.0
  %2579 = vmatprep.subr.mxu0 0.0
  %2580 = vmatpush1.xpose.msra.mxu0 0.0
  %2581 = vmatprep.subr.mxu0 0.0
  %2582 = vmatpush1.xpose.msra.mxu0 0.0
  %2583 = vmatprep.subr.mxu0 0.0
  %2584 = vmatpush1.xpose.msra.mxu0 0.0
  %2585 = vmatprep.subr.mxu0 0.0
  %2586 = vmatpush1.xpose.msra.mxu0 0.0
  %2587 = vmatprep.subr.mxu0 0.0
  %2588 = vmatpush1.xpose.msra.mxu0 0.0
  %2589 = vmatprep.subr.mxu0 0.0
  %2590 = vmatpush1.xpose.msra.mxu0 0.0
  %2591 = vmatprep.subr.mxu0 0.0
  %2592 = vmatpush1.xpose.msra.mxu0 0.0
  %2593 = vmatprep.subr.mxu0 0.0
  %2594 = vmatpush1.xpose.msra.mxu0 0.0
  %2595 = vmatprep.subr.mxu0 0.0
  %2596 = vmatpush1.xpose.msra.mxu0 0.0
  %2597 = vmatprep.subr.mxu0 0.0
  %2598 = vmatpush1.xpose.msra.mxu0 0.0
  %2599 = vmatprep.subr.mxu0 0.0
  %2600 = vmatpush1.xpose.msra.mxu0 0.0
  %2601 = vmatprep.subr.mxu0 0.0
  %2602 = vmatpush1.xpose.msra.mxu0 0.0
  %2603 = vmatprep.subr.mxu0 0.0
  %2604 = vmatpush1.xpose.msra.mxu0 %v2571
  %2605 = vmatprep.subr.mxu0 0.0
  %2606 = vmatpush2.xpose.msra.mxu0 0.0
  %2607 = vmatprep.subr.mxu0 0.0
  %2608 = vmatpush2.xpose.msra.mxu0 0.0
  %2609 = vmatprep.subr.mxu0 0.0
  %2610 = vmatpush2.xpose.msra.mxu0 0.0
  %2611 = vmatprep.subr.mxu0 0.0
  %2612 = vmatpush2.xpose.msra.mxu0 0.0
  %2613 = vmatprep.subr.mxu0 0.0
  %2614 = vmatpush2.xpose.msra.mxu0 0.0
  %2615 = vmatprep.subr.mxu0 0.0
  %2616 = vmatpush2.xpose.msra.mxu0 0.0
  %2617 = vmatprep.subr.mxu0 0.0
  %2618 = vmatpush2.xpose.msra.mxu0 0.0
  %2619 = vmatprep.subr.mxu0 0.0
  %2620 = vmatpush2.xpose.msra.mxu0 0.0
  %2621 = vmatprep.subr.mxu0 0.0
  %2622 = vmatpush2.xpose.msra.mxu0 0.0
  %2623 = vmatprep.subr.mxu0 0.0
  %2624 = vmatpush2.xpose.msra.mxu0 0.0
  %2625 = vmatprep.subr.mxu0 0.0
  %2626 = vmatpush2.xpose.msra.mxu0 0.0
  %2627 = vmatprep.subr.mxu0 0.0
  %2628 = vmatpush2.xpose.msra.mxu0 0.0
  %2629 = vmatprep.subr.mxu0 0.0
  %2630 = vmatpush2.xpose.msra.mxu0 0.0
  %2631 = vmatprep.subr.mxu0 0.0
  %2632 = vmatpush2.xpose.msra.mxu0 0.0
  %2633 = vmatprep.subr.mxu0 0.0
  %2634 = vmatpush2.xpose.msra.mxu0 0.0
  %2635 = vmatprep.subr.mxu0 0.0
  %2636 = vmatpush2.xpose.msra.mxu0 0.0
  %2637 = vmatprep.mubr.f32.mxu0 0.0
  %2638 = vmatmul.mubr.f32.gmra.mxu0 %v2569
  %v2639 = vpop.f32.mrf.mxu0
  %v2640 = vadd.f32 %v262, %v2639
  %v2641 = vpop.f32.mrf.mxu0
  %2642 = vdwg.mxu0
  %2643 = vrot.lane.b32.xlu0 %v2110, 96
  %v2644 = vpop.permute.xlu0 %2643
  %v2645 = vsel %vm277, %v2110, 0
  %v2647 = vsel %vm277, %v2644, 0
  %2649 = vmatprep.subr.mxu0 0.0
  %2650 = vmatpush1.xpose.msra.mxu0 0.0
  %2651 = vmatprep.subr.mxu0 0.0
  %2652 = vmatpush1.xpose.msra.mxu0 0.0
  %2653 = vmatprep.subr.mxu0 0.0
  %2654 = vmatpush1.xpose.msra.mxu0 0.0
  %2655 = vmatprep.subr.mxu0 0.0
  %2656 = vmatpush1.xpose.msra.mxu0 0.0
  %2657 = vmatprep.subr.mxu0 0.0
  %2658 = vmatpush1.xpose.msra.mxu0 0.0
  %2659 = vmatprep.subr.mxu0 0.0
  %2660 = vmatpush1.xpose.msra.mxu0 0.0
  %2661 = vmatprep.subr.mxu0 0.0
  %2662 = vmatpush1.xpose.msra.mxu0 0.0
  %2663 = vmatprep.subr.mxu0 0.0
  %2664 = vmatpush1.xpose.msra.mxu0 0.0
  %2665 = vmatprep.subr.mxu0 0.0
  %2666 = vmatpush1.xpose.msra.mxu0 0.0
  %2667 = vmatprep.subr.mxu0 0.0
  %2668 = vmatpush1.xpose.msra.mxu0 0.0
  %2669 = vmatprep.subr.mxu0 0.0
  %2670 = vmatpush1.xpose.msra.mxu0 0.0
  %2671 = vmatprep.subr.mxu0 0.0
  %2672 = vmatpush1.xpose.msra.mxu0 0.0
  %2673 = vmatprep.subr.mxu0 0.0
  %2674 = vmatpush1.xpose.msra.mxu0 0.0
  %2675 = vmatprep.subr.mxu0 0.0
  %2676 = vmatpush1.xpose.msra.mxu0 0.0
  %2677 = vmatprep.subr.mxu0 0.0
  %2678 = vmatpush1.xpose.msra.mxu0 0.0
  %2679 = vmatprep.subr.mxu0 0.0
  %2680 = vmatpush1.xpose.msra.mxu0 %v2647
  %2681 = vmatprep.subr.mxu0 0.0
  %2682 = vmatpush2.xpose.msra.mxu0 0.0
  %2683 = vmatprep.subr.mxu0 0.0
  %2684 = vmatpush2.xpose.msra.mxu0 0.0
  %2685 = vmatprep.subr.mxu0 0.0
  %2686 = vmatpush2.xpose.msra.mxu0 0.0
  %2687 = vmatprep.subr.mxu0 0.0
  %2688 = vmatpush2.xpose.msra.mxu0 0.0
  %2689 = vmatprep.subr.mxu0 0.0
  %2690 = vmatpush2.xpose.msra.mxu0 0.0
  %2691 = vmatprep.subr.mxu0 0.0
  %2692 = vmatpush2.xpose.msra.mxu0 0.0
  %2693 = vmatprep.subr.mxu0 0.0
  %2694 = vmatpush2.xpose.msra.mxu0 0.0
  %2695 = vmatprep.subr.mxu0 0.0
  %2696 = vmatpush2.xpose.msra.mxu0 0.0
  %2697 = vmatprep.subr.mxu0 0.0
  %2698 = vmatpush2.xpose.msra.mxu0 0.0
  %2699 = vmatprep.subr.mxu0 0.0
  %2700 = vmatpush2.xpose.msra.mxu0 0.0
  %2701 = vmatprep.subr.mxu0 0.0
  %2702 = vmatpush2.xpose.msra.mxu0 0.0
  %2703 = vmatprep.subr.mxu0 0.0
  %2704 = vmatpush2.xpose.msra.mxu0 0.0
  %2705 = vmatprep.subr.mxu0 0.0
  %2706 = vmatpush2.xpose.msra.mxu0 0.0
  %2707 = vmatprep.subr.mxu0 0.0
  %2708 = vmatpush2.xpose.msra.mxu0 0.0
  %2709 = vmatprep.subr.mxu0 0.0
  %2710 = vmatpush2.xpose.msra.mxu0 0.0
  %2711 = vmatprep.subr.mxu0 0.0
  %2712 = vmatpush2.xpose.msra.mxu0 0.0
  %2713 = vmatprep.mubr.f32.mxu0 0.0
  %2714 = vmatmul.mubr.f32.gmra.mxu0 %v2645
  %v2715 = vpop.f32.mrf.mxu0
  %v2716 = vadd.f32 %v266, %v2715
  %v2717 = vpop.f32.mrf.mxu0
  %2718 = vdwg.mxu0
  %v2719 = vsel %vm277, %v2184, -inf
  %2720 = vmax.xlane.f32.xlu0 %v2719
  %v2721 = vpop.xlane.xlu0 %2720
  %v2722 = vsel %vm277, %v2260, -inf
  %2723 = vmax.xlane.f32.xlu0 %v2722
  %v2724 = vpop.xlane.xlu0 %2723
  %v2725 = vsel %vm277, %v2336, -inf
  %2726 = vmax.xlane.f32.xlu0 %v2725
  %v2727 = vpop.xlane.xlu0 %2726
  %v2728 = vsel %vm277, %v2412, -inf
  %2729 = vmax.xlane.f32.xlu0 %v2728
  %v2730 = vpop.xlane.xlu0 %2729
  %v2731 = vsel %vm277, %v2488, -inf
  %2732 = vmax.xlane.f32.xlu0 %v2731
  %v2733 = vpop.xlane.xlu0 %2732
  %v2734 = vsel %vm277, %v2564, -inf
  %2735 = vmax.xlane.f32.xlu0 %v2734
  %v2736 = vpop.xlane.xlu0 %2735
  %v2737 = vsel %vm277, %v2640, -inf
  %2738 = vmax.xlane.f32.xlu0 %v2737
  %v2739 = vpop.xlane.xlu0 %2738
  %v2740 = vsel %vm277, %v2716, -inf
  %2741 = vmax.xlane.f32.xlu0 %v2740
  %v2742 = vpop.xlane.xlu0 %2741
  %v2743 = vsub.f32 %v2184, %v2721
  %v2744 = vsub.f32 %v2260, %v2724
  %v2745 = vsub.f32 %v2336, %v2727
  %v2746 = vsub.f32 %v2412, %v2730
  %v2747 = vsub.f32 %v2488, %v2733
  %v2748 = vsub.f32 %v2564, %v2736
  %v2749 = vsub.f32 %v2640, %v2739
  %v2750 = vsub.f32 %v2716, %v2742
  %v2751 = vmul.f32 %v2743, 1.442695
  %v2752 = vpow.pop %v2751
  %v2753 = vmul.f32 %v2744, 1.442695
  %v2754 = vpow.pop %v2753
  %v2755 = vmul.f32 %v2745, 1.442695
  %v2756 = vpow.pop %v2755
  %v2757 = vmul.f32 %v2746, 1.442695
  %v2758 = vpow.pop %v2757
  %v2759 = vmul.f32 %v2747, 1.442695
  %v2760 = vpow.pop %v2759
  %v2761 = vmul.f32 %v2748, 1.442695
  %v2762 = vpow.pop %v2761
  %v2763 = vmul.f32 %v2749, 1.442695
  %v2764 = vpow.pop %v2763
  %v2765 = vmul.f32 %v2750, 1.442695
  %v2766 = vpow.pop %v2765
  %v2767 = vsel %vm277, %v2752, 0.0
  %2768 = vadd.xlane.f32.xlu0 %v2767
  %v2769 = vpop.xlane.xlu0 %2768
  %v2770 = vsel %vm277, %v2754, 0.0
  %2771 = vadd.xlane.f32.xlu0 %v2770
  %v2772 = vpop.xlane.xlu0 %2771
  %v2773 = vsel %vm277, %v2756, 0.0
  %2774 = vadd.xlane.f32.xlu0 %v2773
  %v2775 = vpop.xlane.xlu0 %2774
  %v2776 = vsel %vm277, %v2758, 0.0
  %2777 = vadd.xlane.f32.xlu0 %v2776
  %v2778 = vpop.xlane.xlu0 %2777
  %v2779 = vsel %vm277, %v2760, 0.0
  %2780 = vadd.xlane.f32.xlu0 %v2779
  %v2781 = vpop.xlane.xlu0 %2780
  %v2782 = vsel %vm277, %v2762, 0.0
  %2783 = vadd.xlane.f32.xlu0 %v2782
  %v2784 = vpop.xlane.xlu0 %2783
  %v2785 = vsel %vm277, %v2764, 0.0
  %2786 = vadd.xlane.f32.xlu0 %v2785
  %v2787 = vpop.xlane.xlu0 %2786
  %v2788 = vsel %vm277, %v2766, 0.0
  %2789 = vadd.xlane.f32.xlu0 %v2788
  %v2790 = vpop.xlane.xlu0 %2789
  %v2791 = vrcp.pop %v2769
  %v2792 = vrcp.pop %v2772
  %v2793 = vrcp.pop %v2775
  %v2794 = vrcp.pop %v2778
  %v2795 = vrcp.pop %v2781
  %v2796 = vrcp.pop %v2784
  %v2797 = vrcp.pop %v2787
  %v2798 = vrcp.pop %v2790
  %v2799 = vmul.f32 %v2752, %v2791
  %v2800 = vmul.f32 %v2754, %v2792
  %v2801 = vmul.f32 %v2756, %v2793
  %v2802 = vmul.f32 %v2758, %v2794
  %v2803 = vmul.f32 %v2760, %v2795
  %v2804 = vmul.f32 %v2762, %v2796
  %v2805 = vmul.f32 %v2764, %v2797
  %v2806 = vmul.f32 %v2766, %v2798
  %2807 = vrot.lane.b32.xlu0 %v2089, 64
  %v2808 = vpop.permute.xlu0 %2807
  %v2811 = vsel %vm277, %v2799, 0
  %2813 = vmatprep.subr.mxu0 0.0
  %2814 = vmatpush1.msra.mxu0 0.0
  %2815 = vmatprep.subr.mxu0 0.0
  %2816 = vmatpush1.msra.mxu0 0.0
  %2817 = vmatprep.subr.mxu0 0.0
  %2818 = vmatpush1.msra.mxu0 0.0
  %2819 = vmatprep.subr.mxu0 0.0
  %2820 = vmatpush1.msra.mxu0 0.0
  %2821 = vmatprep.subr.mxu0 0.0
  %2822 = vmatpush1.msra.mxu0 0.0
  %2823 = vmatprep.subr.mxu0 0.0
  %2824 = vmatpush1.msra.mxu0 0.0
  %2825 = vmatprep.subr.mxu0 0.0
  %2826 = vmatpush1.msra.mxu0 0.0
  %2827 = vmatprep.subr.mxu0 0.0
  %2828 = vmatpush1.msra.mxu0 0.0
  %2829 = vmatprep.subr.mxu0 0.0
  %2830 = vmatpush1.msra.mxu0 0.0
  %2831 = vmatprep.subr.mxu0 0.0
  %2832 = vmatpush1.msra.mxu0 0.0
  %2833 = vmatprep.subr.mxu0 0.0
  %2834 = vmatpush1.msra.mxu0 0.0
  %2835 = vmatprep.subr.mxu0 0.0
  %2836 = vmatpush1.msra.mxu0 0.0
  %2837 = vmatprep.subr.mxu0 0.0
  %2838 = vmatpush1.msra.mxu0 0.0
  %2839 = vmatprep.subr.mxu0 0.0
  %2840 = vmatpush1.msra.mxu0 0.0
  %2841 = vmatprep.subr.mxu0 0.0
  %2842 = vmatpush1.msra.mxu0 0.0
  %2843 = vmatprep.subr.mxu0 0.0
  %2844 = vmatpush1.msra.mxu0 %v2808
  %2845 = vmatprep.subr.mxu0 0.0
  %2846 = vmatpush2.msra.mxu0 0.0
  %2847 = vmatprep.subr.mxu0 0.0
  %2848 = vmatpush2.msra.mxu0 0.0
  %2849 = vmatprep.subr.mxu0 0.0
  %2850 = vmatpush2.msra.mxu0 0.0
  %2851 = vmatprep.subr.mxu0 0.0
  %2852 = vmatpush2.msra.mxu0 0.0
  %2853 = vmatprep.subr.mxu0 0.0
  %2854 = vmatpush2.msra.mxu0 0.0
  %2855 = vmatprep.subr.mxu0 0.0
  %2856 = vmatpush2.msra.mxu0 0.0
  %2857 = vmatprep.subr.mxu0 0.0
  %2858 = vmatpush2.msra.mxu0 0.0
  %2859 = vmatprep.subr.mxu0 0.0
  %2860 = vmatpush2.msra.mxu0 0.0
  %2861 = vmatprep.subr.mxu0 0.0
  %2862 = vmatpush2.msra.mxu0 0.0
  %2863 = vmatprep.subr.mxu0 0.0
  %2864 = vmatpush2.msra.mxu0 0.0
  %2865 = vmatprep.subr.mxu0 0.0
  %2866 = vmatpush2.msra.mxu0 0.0
  %2867 = vmatprep.subr.mxu0 0.0
  %2868 = vmatpush2.msra.mxu0 0.0
  %2869 = vmatprep.subr.mxu0 0.0
  %2870 = vmatpush2.msra.mxu0 0.0
  %2871 = vmatprep.subr.mxu0 0.0
  %2872 = vmatpush2.msra.mxu0 0.0
  %2873 = vmatprep.subr.mxu0 0.0
  %2874 = vmatpush2.msra.mxu0 0.0
  %2875 = vmatprep.subr.mxu0 0.0
  %2876 = vmatpush2.msra.mxu0 0.0
  %2877 = vmatprep.mubr.f32.mxu0 0.0
  %2878 = vmatmul.mubr.f32.gmra.mxu0 %v2811
  %v2879 = vpop.f32.mrf.mxu0
  %v2880 = vadd.f32 0.0, %v2879
  %v2881 = vpop.f32.mrf.mxu0
  %2882 = vdwg.mxu0
  %2883 = vrot.lane.b32.xlu0 %v2094, 64
  %v2884 = vpop.permute.xlu0 %2883
  %v2887 = vsel %vm277, %v2800, 0
  %2889 = vmatprep.subr.mxu0 0.0
  %2890 = vmatpush1.msra.mxu0 0.0
  %2891 = vmatprep.subr.mxu0 0.0
  %2892 = vmatpush1.msra.mxu0 0.0
  %2893 = vmatprep.subr.mxu0 0.0
  %2894 = vmatpush1.msra.mxu0 0.0
  %2895 = vmatprep.subr.mxu0 0.0
  %2896 = vmatpush1.msra.mxu0 0.0
  %2897 = vmatprep.subr.mxu0 0.0
  %2898 = vmatpush1.msra.mxu0 0.0
  %2899 = vmatprep.subr.mxu0 0.0
  %2900 = vmatpush1.msra.mxu0 0.0
  %2901 = vmatprep.subr.mxu0 0.0
  %2902 = vmatpush1.msra.mxu0 0.0
  %2903 = vmatprep.subr.mxu0 0.0
  %2904 = vmatpush1.msra.mxu0 0.0
  %2905 = vmatprep.subr.mxu0 0.0
  %2906 = vmatpush1.msra.mxu0 0.0
  %2907 = vmatprep.subr.mxu0 0.0
  %2908 = vmatpush1.msra.mxu0 0.0
  %2909 = vmatprep.subr.mxu0 0.0
  %2910 = vmatpush1.msra.mxu0 0.0
  %2911 = vmatprep.subr.mxu0 0.0
  %2912 = vmatpush1.msra.mxu0 0.0
  %2913 = vmatprep.subr.mxu0 0.0
  %2914 = vmatpush1.msra.mxu0 0.0
  %2915 = vmatprep.subr.mxu0 0.0
  %2916 = vmatpush1.msra.mxu0 0.0
  %2917 = vmatprep.subr.mxu0 0.0
  %2918 = vmatpush1.msra.mxu0 0.0
  %2919 = vmatprep.subr.mxu0 0.0
  %2920 = vmatpush1.msra.mxu0 %v2884
  %2921 = vmatprep.subr.mxu0 0.0
  %2922 = vmatpush2.msra.mxu0 0.0
  %2923 = vmatprep.subr.mxu0 0.0
  %2924 = vmatpush2.msra.mxu0 0.0
  %2925 = vmatprep.subr.mxu0 0.0
  %2926 = vmatpush2.msra.mxu0 0.0
  %2927 = vmatprep.subr.mxu0 0.0
  %2928 = vmatpush2.msra.mxu0 0.0
  %2929 = vmatprep.subr.mxu0 0.0
  %2930 = vmatpush2.msra.mxu0 0.0
  %2931 = vmatprep.subr.mxu0 0.0
  %2932 = vmatpush2.msra.mxu0 0.0
  %2933 = vmatprep.subr.mxu0 0.0
  %2934 = vmatpush2.msra.mxu0 0.0
  %2935 = vmatprep.subr.mxu0 0.0
  %2936 = vmatpush2.msra.mxu0 0.0
  %2937 = vmatprep.subr.mxu0 0.0
  %2938 = vmatpush2.msra.mxu0 0.0
  %2939 = vmatprep.subr.mxu0 0.0
  %2940 = vmatpush2.msra.mxu0 0.0
  %2941 = vmatprep.subr.mxu0 0.0
  %2942 = vmatpush2.msra.mxu0 0.0
  %2943 = vmatprep.subr.mxu0 0.0
  %2944 = vmatpush2.msra.mxu0 0.0
  %2945 = vmatprep.subr.mxu0 0.0
  %2946 = vmatpush2.msra.mxu0 0.0
  %2947 = vmatprep.subr.mxu0 0.0
  %2948 = vmatpush2.msra.mxu0 0.0
  %2949 = vmatprep.subr.mxu0 0.0
  %2950 = vmatpush2.msra.mxu0 0.0
  %2951 = vmatprep.subr.mxu0 0.0
  %2952 = vmatpush2.msra.mxu0 0.0
  %2953 = vmatprep.mubr.f32.mxu0 0.0
  %2954 = vmatmul.mubr.f32.gmra.mxu0 %v2887
  %v2955 = vpop.f32.mrf.mxu0
  %v2956 = vadd.f32 0.0, %v2955
  %v2957 = vpop.f32.mrf.mxu0
  %2958 = vdwg.mxu0
  %2959 = vrot.lane.b32.xlu0 %v2100, 64
  %v2960 = vpop.permute.xlu0 %2959
  %v2963 = vsel %vm277, %v2801, 0
  %2965 = vmatprep.subr.mxu0 0.0
  %2966 = vmatpush1.msra.mxu0 0.0
  %2967 = vmatprep.subr.mxu0 0.0
  %2968 = vmatpush1.msra.mxu0 0.0
  %2969 = vmatprep.subr.mxu0 0.0
  %2970 = vmatpush1.msra.mxu0 0.0
  %2971 = vmatprep.subr.mxu0 0.0
  %2972 = vmatpush1.msra.mxu0 0.0
  %2973 = vmatprep.subr.mxu0 0.0
  %2974 = vmatpush1.msra.mxu0 0.0
  %2975 = vmatprep.subr.mxu0 0.0
  %2976 = vmatpush1.msra.mxu0 0.0
  %2977 = vmatprep.subr.mxu0 0.0
  %2978 = vmatpush1.msra.mxu0 0.0
  %2979 = vmatprep.subr.mxu0 0.0
  %2980 = vmatpush1.msra.mxu0 0.0
  %2981 = vmatprep.subr.mxu0 0.0
  %2982 = vmatpush1.msra.mxu0 0.0
  %2983 = vmatprep.subr.mxu0 0.0
  %2984 = vmatpush1.msra.mxu0 0.0
  %2985 = vmatprep.subr.mxu0 0.0
  %2986 = vmatpush1.msra.mxu0 0.0
  %2987 = vmatprep.subr.mxu0 0.0
  %2988 = vmatpush1.msra.mxu0 0.0
  %2989 = vmatprep.subr.mxu0 0.0
  %2990 = vmatpush1.msra.mxu0 0.0
  %2991 = vmatprep.subr.mxu0 0.0
  %2992 = vmatpush1.msra.mxu0 0.0
  %2993 = vmatprep.subr.mxu0 0.0
  %2994 = vmatpush1.msra.mxu0 0.0
  %2995 = vmatprep.subr.mxu0 0.0
  %2996 = vmatpush1.msra.mxu0 %v2960
  %2997 = vmatprep.subr.mxu0 0.0
  %2998 = vmatpush2.msra.mxu0 0.0
  %2999 = vmatprep.subr.mxu0 0.0
  %3000 = vmatpush2.msra.mxu0 0.0
  %3001 = vmatprep.subr.mxu0 0.0
  %3002 = vmatpush2.msra.mxu0 0.0
  %3003 = vmatprep.subr.mxu0 0.0
  %3004 = vmatpush2.msra.mxu0 0.0
  %3005 = vmatprep.subr.mxu0 0.0
  %3006 = vmatpush2.msra.mxu0 0.0
  %3007 = vmatprep.subr.mxu0 0.0
  %3008 = vmatpush2.msra.mxu0 0.0
  %3009 = vmatprep.subr.mxu0 0.0
  %3010 = vmatpush2.msra.mxu0 0.0
  %3011 = vmatprep.subr.mxu0 0.0
  %3012 = vmatpush2.msra.mxu0 0.0
  %3013 = vmatprep.subr.mxu0 0.0
  %3014 = vmatpush2.msra.mxu0 0.0
  %3015 = vmatprep.subr.mxu0 0.0
  %3016 = vmatpush2.msra.mxu0 0.0
  %3017 = vmatprep.subr.mxu0 0.0
  %3018 = vmatpush2.msra.mxu0 0.0
  %3019 = vmatprep.subr.mxu0 0.0
  %3020 = vmatpush2.msra.mxu0 0.0
  %3021 = vmatprep.subr.mxu0 0.0
  %3022 = vmatpush2.msra.mxu0 0.0
  %3023 = vmatprep.subr.mxu0 0.0
  %3024 = vmatpush2.msra.mxu0 0.0
  %3025 = vmatprep.subr.mxu0 0.0
  %3026 = vmatpush2.msra.mxu0 0.0
  %3027 = vmatprep.subr.mxu0 0.0
  %3028 = vmatpush2.msra.mxu0 0.0
  %3029 = vmatprep.mubr.f32.mxu0 0.0
  %3030 = vmatmul.mubr.f32.gmra.mxu0 %v2963
  %v3031 = vpop.f32.mrf.mxu0
  %v3032 = vadd.f32 0.0, %v3031
  %v3033 = vpop.f32.mrf.mxu0
  %3034 = vdwg.mxu0
  %3035 = vrot.lane.b32.xlu0 %v2102, 64
  %v3036 = vpop.permute.xlu0 %3035
  %v3039 = vsel %vm277, %v2802, 0
  %3041 = vmatprep.subr.mxu0 0.0
  %3042 = vmatpush1.msra.mxu0 0.0
  %3043 = vmatprep.subr.mxu0 0.0
  %3044 = vmatpush1.msra.mxu0 0.0
  %3045 = vmatprep.subr.mxu0 0.0
  %3046 = vmatpush1.msra.mxu0 0.0
  %3047 = vmatprep.subr.mxu0 0.0
  %3048 = vmatpush1.msra.mxu0 0.0
  %3049 = vmatprep.subr.mxu0 0.0
  %3050 = vmatpush1.msra.mxu0 0.0
  %3051 = vmatprep.subr.mxu0 0.0
  %3052 = vmatpush1.msra.mxu0 0.0
  %3053 = vmatprep.subr.mxu0 0.0
  %3054 = vmatpush1.msra.mxu0 0.0
  %3055 = vmatprep.subr.mxu0 0.0
  %3056 = vmatpush1.msra.mxu0 0.0
  %3057 = vmatprep.subr.mxu0 0.0
  %3058 = vmatpush1.msra.mxu0 0.0
  %3059 = vmatprep.subr.mxu0 0.0
  %3060 = vmatpush1.msra.mxu0 0.0
  %3061 = vmatprep.subr.mxu0 0.0
  %3062 = vmatpush1.msra.mxu0 0.0
  %3063 = vmatprep.subr.mxu0 0.0
  %3064 = vmatpush1.msra.mxu0 0.0
  %3065 = vmatprep.subr.mxu0 0.0
  %3066 = vmatpush1.msra.mxu0 0.0
  %3067 = vmatprep.subr.mxu0 0.0
  %3068 = vmatpush1.msra.mxu0 0.0
  %3069 = vmatprep.subr.mxu0 0.0
  %3070 = vmatpush1.msra.mxu0 0.0
  %3071 = vmatprep.subr.mxu0 0.0
  %3072 = vmatpush1.msra.mxu0 %v3036
  %3073 = vmatprep.subr.mxu0 0.0
  %3074 = vmatpush2.msra.mxu0 0.0
  %3075 = vmatprep.subr.mxu0 0.0
  %3076 = vmatpush2.msra.mxu0 0.0
  %3077 = vmatprep.subr.mxu0 0.0
  %3078 = vmatpush2.msra.mxu0 0.0
  %3079 = vmatprep.subr.mxu0 0.0
  %3080 = vmatpush2.msra.mxu0 0.0
  %3081 = vmatprep.subr.mxu0 0.0
  %3082 = vmatpush2.msra.mxu0 0.0
  %3083 = vmatprep.subr.mxu0 0.0
  %3084 = vmatpush2.msra.mxu0 0.0
  %3085 = vmatprep.subr.mxu0 0.0
  %3086 = vmatpush2.msra.mxu0 0.0
  %3087 = vmatprep.subr.mxu0 0.0
  %3088 = vmatpush2.msra.mxu0 0.0
  %3089 = vmatprep.subr.mxu0 0.0
  %3090 = vmatpush2.msra.mxu0 0.0
  %3091 = vmatprep.subr.mxu0 0.0
  %3092 = vmatpush2.msra.mxu0 0.0
  %3093 = vmatprep.subr.mxu0 0.0
  %3094 = vmatpush2.msra.mxu0 0.0
  %3095 = vmatprep.subr.mxu0 0.0
  %3096 = vmatpush2.msra.mxu0 0.0
  %3097 = vmatprep.subr.mxu0 0.0
  %3098 = vmatpush2.msra.mxu0 0.0
  %3099 = vmatprep.subr.mxu0 0.0
  %3100 = vmatpush2.msra.mxu0 0.0
  %3101 = vmatprep.subr.mxu0 0.0
  %3102 = vmatpush2.msra.mxu0 0.0
  %3103 = vmatprep.subr.mxu0 0.0
  %3104 = vmatpush2.msra.mxu0 0.0
  %3105 = vmatprep.mubr.f32.mxu0 0.0
  %3106 = vmatmul.mubr.f32.gmra.mxu0 %v3039
  %v3107 = vpop.f32.mrf.mxu0
  %v3108 = vadd.f32 0.0, %v3107
  %v3109 = vpop.f32.mrf.mxu0
  %3110 = vdwg.mxu0
  %3111 = vrot.lane.b32.xlu0 %v2104, 64
  %v3112 = vpop.permute.xlu0 %3111
  %v3115 = vsel %vm277, %v2803, 0
  %3117 = vmatprep.subr.mxu0 0.0
  %3118 = vmatpush1.msra.mxu0 0.0
  %3119 = vmatprep.subr.mxu0 0.0
  %3120 = vmatpush1.msra.mxu0 0.0
  %3121 = vmatprep.subr.mxu0 0.0
  %3122 = vmatpush1.msra.mxu0 0.0
  %3123 = vmatprep.subr.mxu0 0.0
  %3124 = vmatpush1.msra.mxu0 0.0
  %3125 = vmatprep.subr.mxu0 0.0
  %3126 = vmatpush1.msra.mxu0 0.0
  %3127 = vmatprep.subr.mxu0 0.0
  %3128 = vmatpush1.msra.mxu0 0.0
  %3129 = vmatprep.subr.mxu0 0.0
  %3130 = vmatpush1.msra.mxu0 0.0
  %3131 = vmatprep.subr.mxu0 0.0
  %3132 = vmatpush1.msra.mxu0 0.0
  %3133 = vmatprep.subr.mxu0 0.0
  %3134 = vmatpush1.msra.mxu0 0.0
  %3135 = vmatprep.subr.mxu0 0.0
  %3136 = vmatpush1.msra.mxu0 0.0
  %3137 = vmatprep.subr.mxu0 0.0
  %3138 = vmatpush1.msra.mxu0 0.0
  %3139 = vmatprep.subr.mxu0 0.0
  %3140 = vmatpush1.msra.mxu0 0.0
  %3141 = vmatprep.subr.mxu0 0.0
  %3142 = vmatpush1.msra.mxu0 0.0
  %3143 = vmatprep.subr.mxu0 0.0
  %3144 = vmatpush1.msra.mxu0 0.0
  %3145 = vmatprep.subr.mxu0 0.0
  %3146 = vmatpush1.msra.mxu0 0.0
  %3147 = vmatprep.subr.mxu0 0.0
  %3148 = vmatpush1.msra.mxu0 %v3112
  %3149 = vmatprep.subr.mxu0 0.0
  %3150 = vmatpush2.msra.mxu0 0.0
  %3151 = vmatprep.subr.mxu0 0.0
  %3152 = vmatpush2.msra.mxu0 0.0
  %3153 = vmatprep.subr.mxu0 0.0
  %3154 = vmatpush2.msra.mxu0 0.0
  %3155 = vmatprep.subr.mxu0 0.0
  %3156 = vmatpush2.msra.mxu0 0.0
  %3157 = vmatprep.subr.mxu0 0.0
  %3158 = vmatpush2.msra.mxu0 0.0
  %3159 = vmatprep.subr.mxu0 0.0
  %3160 = vmatpush2.msra.mxu0 0.0
  %3161 = vmatprep.subr.mxu0 0.0
  %3162 = vmatpush2.msra.mxu0 0.0
  %3163 = vmatprep.subr.mxu0 0.0
  %3164 = vmatpush2.msra.mxu0 0.0
  %3165 = vmatprep.subr.mxu0 0.0
  %3166 = vmatpush2.msra.mxu0 0.0
  %3167 = vmatprep.subr.mxu0 0.0
  %3168 = vmatpush2.msra.mxu0 0.0
  %3169 = vmatprep.subr.mxu0 0.0
  %3170 = vmatpush2.msra.mxu0 0.0
  %3171 = vmatprep.subr.mxu0 0.0
  %3172 = vmatpush2.msra.mxu0 0.0
  %3173 = vmatprep.subr.mxu0 0.0
  %3174 = vmatpush2.msra.mxu0 0.0
  %3175 = vmatprep.subr.mxu0 0.0
  %3176 = vmatpush2.msra.mxu0 0.0
  %3177 = vmatprep.subr.mxu0 0.0
  %3178 = vmatpush2.msra.mxu0 0.0
  %3179 = vmatprep.subr.mxu0 0.0
  %3180 = vmatpush2.msra.mxu0 0.0
  %3181 = vmatprep.mubr.f32.mxu0 0.0
  %3182 = vmatmul.mubr.f32.gmra.mxu0 %v3115
  %v3183 = vpop.f32.mrf.mxu0
  %v3184 = vadd.f32 0.0, %v3183
  %v3185 = vpop.f32.mrf.mxu0
  %3186 = vdwg.mxu0
  %3187 = vrot.lane.b32.xlu0 %v2106, 64
  %v3188 = vpop.permute.xlu0 %3187
  %v3191 = vsel %vm277, %v2804, 0
  %3193 = vmatprep.subr.mxu0 0.0
  %3194 = vmatpush1.msra.mxu0 0.0
  %3195 = vmatprep.subr.mxu0 0.0
  %3196 = vmatpush1.msra.mxu0 0.0
  %3197 = vmatprep.subr.mxu0 0.0
  %3198 = vmatpush1.msra.mxu0 0.0
  %3199 = vmatprep.subr.mxu0 0.0
  %3200 = vmatpush1.msra.mxu0 0.0
  %3201 = vmatprep.subr.mxu0 0.0
  %3202 = vmatpush1.msra.mxu0 0.0
  %3203 = vmatprep.subr.mxu0 0.0
  %3204 = vmatpush1.msra.mxu0 0.0
  %3205 = vmatprep.subr.mxu0 0.0
  %3206 = vmatpush1.msra.mxu0 0.0
  %3207 = vmatprep.subr.mxu0 0.0
  %3208 = vmatpush1.msra.mxu0 0.0
  %3209 = vmatprep.subr.mxu0 0.0
  %3210 = vmatpush1.msra.mxu0 0.0
  %3211 = vmatprep.subr.mxu0 0.0
  %3212 = vmatpush1.msra.mxu0 0.0
  %3213 = vmatprep.subr.mxu0 0.0
  %3214 = vmatpush1.msra.mxu0 0.0
  %3215 = vmatprep.subr.mxu0 0.0
  %3216 = vmatpush1.msra.mxu0 0.0
  %3217 = vmatprep.subr.mxu0 0.0
  %3218 = vmatpush1.msra.mxu0 0.0
  %3219 = vmatprep.subr.mxu0 0.0
  %3220 = vmatpush1.msra.mxu0 0.0
  %3221 = vmatprep.subr.mxu0 0.0
  %3222 = vmatpush1.msra.mxu0 0.0
  %3223 = vmatprep.subr.mxu0 0.0
  %3224 = vmatpush1.msra.mxu0 %v3188
  %3225 = vmatprep.subr.mxu0 0.0
  %3226 = vmatpush2.msra.mxu0 0.0
  %3227 = vmatprep.subr.mxu0 0.0
  %3228 = vmatpush2.msra.mxu0 0.0
  %3229 = vmatprep.subr.mxu0 0.0
  %3230 = vmatpush2.msra.mxu0 0.0
  %3231 = vmatprep.subr.mxu0 0.0
  %3232 = vmatpush2.msra.mxu0 0.0
  %3233 = vmatprep.subr.mxu0 0.0
  %3234 = vmatpush2.msra.mxu0 0.0
  %3235 = vmatprep.subr.mxu0 0.0
  %3236 = vmatpush2.msra.mxu0 0.0
  %3237 = vmatprep.subr.mxu0 0.0
  %3238 = vmatpush2.msra.mxu0 0.0
  %3239 = vmatprep.subr.mxu0 0.0
  %3240 = vmatpush2.msra.mxu0 0.0
  %3241 = vmatprep.subr.mxu0 0.0
  %3242 = vmatpush2.msra.mxu0 0.0
  %3243 = vmatprep.subr.mxu0 0.0
  %3244 = vmatpush2.msra.mxu0 0.0
  %3245 = vmatprep.subr.mxu0 0.0
  %3246 = vmatpush2.msra.mxu0 0.0
  %3247 = vmatprep.subr.mxu0 0.0
  %3248 = vmatpush2.msra.mxu0 0.0
  %3249 = vmatprep.subr.mxu0 0.0
  %3250 = vmatpush2.msra.mxu0 0.0
  %3251 = vmatprep.subr.mxu0 0.0
  %3252 = vmatpush2.msra.mxu0 0.0
  %3253 = vmatprep.subr.mxu0 0.0
  %3254 = vmatpush2.msra.mxu0 0.0
  %3255 = vmatprep.subr.mxu0 0.0
  %3256 = vmatpush2.msra.mxu0 0.0
  %3257 = vmatprep.mubr.f32.mxu0 0.0
  %3258 = vmatmul.mubr.f32.gmra.mxu0 %v3191
  %v3259 = vpop.f32.mrf.mxu0
  %v3260 = vadd.f32 0.0, %v3259
  %v3261 = vpop.f32.mrf.mxu0
  %3262 = vdwg.mxu0
  %3263 = vrot.lane.b32.xlu0 %v2108, 64
  %v3264 = vpop.permute.xlu0 %3263
  %v3267 = vsel %vm277, %v2805, 0
  %3269 = vmatprep.subr.mxu0 0.0
  %3270 = vmatpush1.msra.mxu0 0.0
  %3271 = vmatprep.subr.mxu0 0.0
  %3272 = vmatpush1.msra.mxu0 0.0
  %3273 = vmatprep.subr.mxu0 0.0
  %3274 = vmatpush1.msra.mxu0 0.0
  %3275 = vmatprep.subr.mxu0 0.0
  %3276 = vmatpush1.msra.mxu0 0.0
  %3277 = vmatprep.subr.mxu0 0.0
  %3278 = vmatpush1.msra.mxu0 0.0
  %3279 = vmatprep.subr.mxu0 0.0
  %3280 = vmatpush1.msra.mxu0 0.0
  %3281 = vmatprep.subr.mxu0 0.0
  %3282 = vmatpush1.msra.mxu0 0.0
  %3283 = vmatprep.subr.mxu0 0.0
  %3284 = vmatpush1.msra.mxu0 0.0
  %3285 = vmatprep.subr.mxu0 0.0
  %3286 = vmatpush1.msra.mxu0 0.0
  %3287 = vmatprep.subr.mxu0 0.0
  %3288 = vmatpush1.msra.mxu0 0.0
  %3289 = vmatprep.subr.mxu0 0.0
  %3290 = vmatpush1.msra.mxu0 0.0
  %3291 = vmatprep.subr.mxu0 0.0
  %3292 = vmatpush1.msra.mxu0 0.0
  %3293 = vmatprep.subr.mxu0 0.0
  %3294 = vmatpush1.msra.mxu0 0.0
  %3295 = vmatprep.subr.mxu0 0.0
  %3296 = vmatpush1.msra.mxu0 0.0
  %3297 = vmatprep.subr.mxu0 0.0
  %3298 = vmatpush1.msra.mxu0 0.0
  %3299 = vmatprep.subr.mxu0 0.0
  %3300 = vmatpush1.msra.mxu0 %v3264
  %3301 = vmatprep.subr.mxu0 0.0
  %3302 = vmatpush2.msra.mxu0 0.0
  %3303 = vmatprep.subr.mxu0 0.0
  %3304 = vmatpush2.msra.mxu0 0.0
  %3305 = vmatprep.subr.mxu0 0.0
  %3306 = vmatpush2.msra.mxu0 0.0
  %3307 = vmatprep.subr.mxu0 0.0
  %3308 = vmatpush2.msra.mxu0 0.0
  %3309 = vmatprep.subr.mxu0 0.0
  %3310 = vmatpush2.msra.mxu0 0.0
  %3311 = vmatprep.subr.mxu0 0.0
  %3312 = vmatpush2.msra.mxu0 0.0
  %3313 = vmatprep.subr.mxu0 0.0
  %3314 = vmatpush2.msra.mxu0 0.0
  %3315 = vmatprep.subr.mxu0 0.0
  %3316 = vmatpush2.msra.mxu0 0.0
  %3317 = vmatprep.subr.mxu0 0.0
  %3318 = vmatpush2.msra.mxu0 0.0
  %3319 = vmatprep.subr.mxu0 0.0
  %3320 = vmatpush2.msra.mxu0 0.0
  %3321 = vmatprep.subr.mxu0 0.0
  %3322 = vmatpush2.msra.mxu0 0.0
  %3323 = vmatprep.subr.mxu0 0.0
  %3324 = vmatpush2.msra.mxu0 0.0
  %3325 = vmatprep.subr.mxu0 0.0
  %3326 = vmatpush2.msra.mxu0 0.0
  %3327 = vmatprep.subr.mxu0 0.0
  %3328 = vmatpush2.msra.mxu0 0.0
  %3329 = vmatprep.subr.mxu0 0.0
  %3330 = vmatpush2.msra.mxu0 0.0
  %3331 = vmatprep.subr.mxu0 0.0
  %3332 = vmatpush2.msra.mxu0 0.0
  %3333 = vmatprep.mubr.f32.mxu0 0.0
  %3334 = vmatmul.mubr.f32.gmra.mxu0 %v3267
  %v3335 = vpop.f32.mrf.mxu0
  %v3336 = vadd.f32 0.0, %v3335
  %v3337 = vpop.f32.mrf.mxu0
  %3338 = vdwg.mxu0
  %3339 = vrot.lane.b32.xlu0 %v2110, 64
  %v3340 = vpop.permute.xlu0 %3339
  %v3343 = vsel %vm277, %v2806, 0
  %3345 = vmatprep.subr.mxu0 0.0
  %3346 = vmatpush1.msra.mxu0 0.0
  %3347 = vmatprep.subr.mxu0 0.0
  %3348 = vmatpush1.msra.mxu0 0.0
  %3349 = vmatprep.subr.mxu0 0.0
  %3350 = vmatpush1.msra.mxu0 0.0
  %3351 = vmatprep.subr.mxu0 0.0
  %3352 = vmatpush1.msra.mxu0 0.0
  %3353 = vmatprep.subr.mxu0 0.0
  %3354 = vmatpush1.msra.mxu0 0.0
  %3355 = vmatprep.subr.mxu0 0.0
  %3356 = vmatpush1.msra.mxu0 0.0
  %3357 = vmatprep.subr.mxu0 0.0
  %3358 = vmatpush1.msra.mxu0 0.0
  %3359 = vmatprep.subr.mxu0 0.0
  %3360 = vmatpush1.msra.mxu0 0.0
  %3361 = vmatprep.subr.mxu0 0.0
  %3362 = vmatpush1.msra.mxu0 0.0
  %3363 = vmatprep.subr.mxu0 0.0
  %3364 = vmatpush1.msra.mxu0 0.0
  %3365 = vmatprep.subr.mxu0 0.0
  %3366 = vmatpush1.msra.mxu0 0.0
  %3367 = vmatprep.subr.mxu0 0.0
  %3368 = vmatpush1.msra.mxu0 0.0
  %3369 = vmatprep.subr.mxu0 0.0
  %3370 = vmatpush1.msra.mxu0 0.0
  %3371 = vmatprep.subr.mxu0 0.0
  %3372 = vmatpush1.msra.mxu0 0.0
  %3373 = vmatprep.subr.mxu0 0.0
  %3374 = vmatpush1.msra.mxu0 0.0
  %3375 = vmatprep.subr.mxu0 0.0
  %3376 = vmatpush1.msra.mxu0 %v3340
  %3377 = vmatprep.subr.mxu0 0.0
  %3378 = vmatpush2.msra.mxu0 0.0
  %3379 = vmatprep.subr.mxu0 0.0
  %3380 = vmatpush2.msra.mxu0 0.0
  %3381 = vmatprep.subr.mxu0 0.0
  %3382 = vmatpush2.msra.mxu0 0.0
  %3383 = vmatprep.subr.mxu0 0.0
  %3384 = vmatpush2.msra.mxu0 0.0
  %3385 = vmatprep.subr.mxu0 0.0
  %3386 = vmatpush2.msra.mxu0 0.0
  %3387 = vmatprep.subr.mxu0 0.0
  %3388 = vmatpush2.msra.mxu0 0.0
  %3389 = vmatprep.subr.mxu0 0.0
  %3390 = vmatpush2.msra.mxu0 0.0
  %3391 = vmatprep.subr.mxu0 0.0
  %3392 = vmatpush2.msra.mxu0 0.0
  %3393 = vmatprep.subr.mxu0 0.0
  %3394 = vmatpush2.msra.mxu0 0.0
  %3395 = vmatprep.subr.mxu0 0.0
  %3396 = vmatpush2.msra.mxu0 0.0
  %3397 = vmatprep.subr.mxu0 0.0
  %3398 = vmatpush2.msra.mxu0 0.0
  %3399 = vmatprep.subr.mxu0 0.0
  %3400 = vmatpush2.msra.mxu0 0.0
  %3401 = vmatprep.subr.mxu0 0.0
  %3402 = vmatpush2.msra.mxu0 0.0
  %3403 = vmatprep.subr.mxu0 0.0
  %3404 = vmatpush2.msra.mxu0 0.0
  %3405 = vmatprep.subr.mxu0 0.0
  %3406 = vmatpush2.msra.mxu0 0.0
  %3407 = vmatprep.subr.mxu0 0.0
  %3408 = vmatpush2.msra.mxu0 0.0
  %3409 = vmatprep.mubr.f32.mxu0 0.0
  %3410 = vmatmul.mubr.f32.gmra.mxu0 %v3343
  %v3411 = vpop.f32.mrf.mxu0
  %v3412 = vadd.f32 0.0, %v3411
  %v3413 = vpop.f32.mrf.mxu0
  %3414 = vdwg.mxu0
  %3417 = vrot.lane.b32.xlu0 %v3032, 8
  %v3418 = vpop.permute.xlu0 %3417
  %3419 = vrot.lane.b32.xlu0 %v3108, 8
  %v3420 = vpop.permute.xlu0 %3419
  %3425 = vrot.lane.b32.xlu0 %v3184, 16
  %v3426 = vpop.permute.xlu0 %3425
  %3427 = vrot.lane.b32.xlu0 %v3260, 16
  %v3428 = vpop.permute.xlu0 %3427
  %3433 = vrot.lane.b32.xlu0 %v3336, 24
  %v3434 = vpop.permute.xlu0 %3433
  %3435 = vrot.lane.b32.xlu0 %v3412, 24
  %v3436 = vpop.permute.xlu0 %3435
  %v3439 = vsel %vm277, %v2880, %v3418
  %v3440 = vsel %vm277, %v2956, %v3420
  %v3441 = vsel %vm1606, %v3439, %v3426
  %v3442 = vsel %vm1606, %v3440, %v3428
  %v3443 = vsel %vm1609, %v3441, %v3434
  %v3444 = vsel %vm1609, %v3442, %v3436
  %s3445 = scalar_lea.vmem %s6, 32
  %v3446 = vld [vmem:[%s3445] sm:$0xff]
  %v3447 = vld [vmem:[%s3445 + $0x8] sm:$0xff]
  %v3448 = vld [vmem:[%s3445 + $0x10] sm:$0xff]
  %v3449 = vld [vmem:[%s3445 + $0x18] sm:$0xff]
  %s3450 = scalar_lea.vmem %s7, 1
  %v3451 = vld [vmem:[%s3450] sm:$0x1]
  %v3453 = vlaneseq
  %v3454 = vshrl.u32 %v3453, 7
  %v3455 = vsub.s32 0, %v3454
  %v3456 = vrot.slane %v3451, %v3455
  %v3459 = vsel %vm69, %v3443, 0
  %v3462 = vsel %vm69, %v3444, 0
  %3464 = vmatprep.subr.mxu0 0.0
  %3465 = vmatpush1.msra.mxu0 0.0
  %3466 = vmatprep.subr.mxu0 0.0
  %3467 = vmatpush1.msra.mxu0 0.0
  %3468 = vmatprep.subr.mxu0 0.0
  %3469 = vmatpush1.msra.mxu0 0.0
  %3470 = vmatprep.subr.mxu0 0.0
  %3471 = vmatpush1.msra.mxu0 0.0
  %3472 = vmatprep.subr.mxu0 0.0
  %3473 = vmatpush1.msra.mxu0 0.0
  %3474 = vmatprep.subr.mxu0 0.0
  %3475 = vmatpush1.msra.mxu0 0.0
  %3476 = vmatprep.subr.mxu0 0.0
  %3477 = vmatpush1.msra.mxu0 0.0
  %3478 = vmatprep.subr.mxu0 0.0
  %3479 = vmatpush1.msra.mxu0 0.0
  %3480 = vmatprep.subr.mxu0 0.0
  %3481 = vmatpush1.msra.mxu0 0.0
  %3482 = vmatprep.subr.mxu0 0.0
  %3483 = vmatpush1.msra.mxu0 0.0
  %3484 = vmatprep.subr.mxu0 0.0
  %3485 = vmatpush1.msra.mxu0 0.0
  %3486 = vmatprep.subr.mxu0 0.0
  %3487 = vmatpush1.msra.mxu0 0.0
  %3488 = vmatprep.subr.mxu0 0.0
  %3489 = vmatpush1.msra.mxu0 %v3449
  %3490 = vmatprep.subr.mxu0 0.0
  %3491 = vmatpush1.msra.mxu0 %v3448
  %3492 = vmatprep.subr.mxu0 0.0
  %3493 = vmatpush1.msra.mxu0 %v3447
  %3494 = vmatprep.subr.mxu0 0.0
  %3495 = vmatpush1.msra.mxu0 %v3446
  %3496 = vmatprep.subr.mxu0 0.0
  %3497 = vmatpush2.msra.mxu0 0.0
  %3498 = vmatprep.subr.mxu0 0.0
  %3499 = vmatpush2.msra.mxu0 0.0
  %3500 = vmatprep.subr.mxu0 0.0
  %3501 = vmatpush2.msra.mxu0 0.0
  %3502 = vmatprep.subr.mxu0 0.0
  %3503 = vmatpush2.msra.mxu0 0.0
  %3504 = vmatprep.subr.mxu0 0.0
  %3505 = vmatpush2.msra.mxu0 0.0
  %3506 = vmatprep.subr.mxu0 0.0
  %3507 = vmatpush2.msra.mxu0 0.0
  %3508 = vmatprep.subr.mxu0 0.0
  %3509 = vmatpush2.msra.mxu0 0.0
  %3510 = vmatprep.subr.mxu0 0.0
  %3511 = vmatpush2.msra.mxu0 0.0
  %3512 = vmatprep.subr.mxu0 0.0
  %3513 = vmatpush2.msra.mxu0 0.0
  %3514 = vmatprep.subr.mxu0 0.0
  %3515 = vmatpush2.msra.mxu0 0.0
  %3516 = vmatprep.subr.mxu0 0.0
  %3517 = vmatpush2.msra.mxu0 0.0
  %3518 = vmatprep.subr.mxu0 0.0
  %3519 = vmatpush2.msra.mxu0 0.0
  %3520 = vmatprep.subr.mxu0 0.0
  %3521 = vmatpush2.msra.mxu0 0.0
  %3522 = vmatprep.subr.mxu0 0.0
  %3523 = vmatpush2.msra.mxu0 0.0
  %3524 = vmatprep.subr.mxu0 0.0
  %3525 = vmatpush2.msra.mxu0 0.0
  %3526 = vmatprep.subr.mxu0 0.0
  %3527 = vmatpush2.msra.mxu0 0.0
  %3528 = vmatprep.mubr.f32.mxu0 0.0
  %3529 = vmatmul.mubr.f32.gmra.mxu0 %v3459
  %v3530 = vpop.f32.mrf.mxu0
  %v3531 = vadd.f32 %v3456, %v3530
  %v3532 = vpop.f32.mrf.mxu0
  %3533 = vmatprep.mubr.f32.mxu0 0.0
  %3534 = vmatmul.mubr.f32.gmra.mxu0 %v3462
  %v3535 = vpop.f32.mrf.mxu0
  %v3536 = vadd.f32 %v3456, %v3535
  %v3537 = vpop.f32.mrf.mxu0
  %3538 = vdwg.mxu0
  %v3539 = vadd.f32 %v2001, %v3531
  %v3540 = vadd.f32 %v2002, %v3536
  %s3541 = scalar_lea.vmem %s8, 1
  %v3542 = vld [vmem:[%s3541] sm:$0x1]
  %s3543 = scalar_lea.vmem %s9, 1
  %v3544 = vld [vmem:[%s3543] sm:$0x1]
  %v3545 = vsel %vm69, %v3539, 0.0
  %3546 = vadd.xlane.f32.xlu0 %v3545
  %v3547 = vpop.xlane.xlu0 %3546
  %v3548 = vsel %vm69, %v3540, 0.0
  %3549 = vadd.xlane.f32.xlu0 %v3548
  %v3550 = vpop.xlane.xlu0 %3549
  %v3551 = vmul.f32 %v3547, %v76
  %v3552 = vmul.f32 %v3550, %v76
  %v3553 = vsub.f32 %v3539, %v3551
  %v3554 = vsub.f32 %v3540, %v3552
  %v3555 = vmul.f32 %v3553, %v3553
  %v3556 = vmul.f32 %v3554, %v3554
  %v3557 = vsel %vm69, %v3555, 0.0
  %3558 = vadd.xlane.f32.xlu0 %v3557
  %v3559 = vpop.xlane.xlu0 %3558
  %v3560 = vsel %vm69, %v3556, 0.0
  %3561 = vadd.xlane.f32.xlu0 %v3560
  %v3562 = vpop.xlane.xlu0 %3561
  %v3563 = vmul.f32 %v3559, %v76
  %v3564 = vmul.f32 %v3562, %v76
  %v3565 = vadd.f32 %v3563, 1e-05
  %v3566 = vadd.f32 %v3564, 1e-05
  %v3567 = vrsqrt.pop %v3565
  %v3568 = vrsqrt.pop %v3566
  %v3569 = vmul.f32 %v3553, %v3567
  %v3570 = vmul.f32 %v3554, %v3568
  %v3572 = vlaneseq
  %v3573 = vshrl.u32 %v3572, 7
  %v3574 = vsub.s32 0, %v3573
  %v3575 = vrot.slane %v3542, %v3574
  %v3577 = vmul.f32 %v3569, %v3575
  %v3578 = vmul.f32 %v3570, %v3575
  %v3580 = vlaneseq
  %v3581 = vshrl.u32 %v3580, 7
  %v3582 = vsub.s32 0, %v3581
  %v3583 = vrot.slane %v3544, %v3582
  %v3585 = vadd.f32 %v3577, %v3583
  %v3586 = vadd.f32 %v3578, %v3583
  %s3587 = scalar_lea.vmem %s10, 32
  %v3588 = vld [vmem:[%s3587] sm:$0xff]
  %v3589 = vld [vmem:[%s3587 + $0x8] sm:$0xff]
  %v3590 = vld [vmem:[%s3587 + $0x10] sm:$0xff]
  %v3591 = vld [vmem:[%s3587 + $0x18] sm:$0xff]
  %s3592 = scalar_lea.vmem %s11, 1
  %v3593 = vld [vmem:[%s3592] sm:$0x1]
  %v3595 = vlaneseq
  %v3596 = vshrl.u32 %v3595, 7
  %v3597 = vsub.s32 0, %v3596
  %v3598 = vrot.slane %v3593, %v3597
  %v3601 = vsel %vm69, %v3585, 0
  %v3604 = vsel %vm69, %v3586, 0
  %3606 = vmatprep.subr.mxu0 0.0
  %3607 = vmatpush1.msra.mxu0 0.0
  %3608 = vmatprep.subr.mxu0 0.0
  %3609 = vmatpush1.msra.mxu0 0.0
  %3610 = vmatprep.subr.mxu0 0.0
  %3611 = vmatpush1.msra.mxu0 0.0
  %3612 = vmatprep.subr.mxu0 0.0
  %3613 = vmatpush1.msra.mxu0 0.0
  %3614 = vmatprep.subr.mxu0 0.0
  %3615 = vmatpush1.msra.mxu0 0.0
  %3616 = vmatprep.subr.mxu0 0.0
  %3617 = vmatpush1.msra.mxu0 0.0
  %3618 = vmatprep.subr.mxu0 0.0
  %3619 = vmatpush1.msra.mxu0 0.0
  %3620 = vmatprep.subr.mxu0 0.0
  %3621 = vmatpush1.msra.mxu0 0.0
  %3622 = vmatprep.subr.mxu0 0.0
  %3623 = vmatpush1.msra.mxu0 0.0
  %3624 = vmatprep.subr.mxu0 0.0
  %3625 = vmatpush1.msra.mxu0 0.0
  %3626 = vmatprep.subr.mxu0 0.0
  %3627 = vmatpush1.msra.mxu0 0.0
  %3628 = vmatprep.subr.mxu0 0.0
  %3629 = vmatpush1.msra.mxu0 0.0
  %3630 = vmatprep.subr.mxu0 0.0
  %3631 = vmatpush1.msra.mxu0 %v3591
  %3632 = vmatprep.subr.mxu0 0.0
  %3633 = vmatpush1.msra.mxu0 %v3590
  %3634 = vmatprep.subr.mxu0 0.0
  %3635 = vmatpush1.msra.mxu0 %v3589
  %3636 = vmatprep.subr.mxu0 0.0
  %3637 = vmatpush1.msra.mxu0 %v3588
  %3638 = vmatprep.subr.mxu0 0.0
  %3639 = vmatpush2.msra.mxu0 0.0
  %3640 = vmatprep.subr.mxu0 0.0
  %3641 = vmatpush2.msra.mxu0 0.0
  %3642 = vmatprep.subr.mxu0 0.0
  %3643 = vmatpush2.msra.mxu0 0.0
  %3644 = vmatprep.subr.mxu0 0.0
  %3645 = vmatpush2.msra.mxu0 0.0
  %3646 = vmatprep.subr.mxu0 0.0
  %3647 = vmatpush2.msra.mxu0 0.0
  %3648 = vmatprep.subr.mxu0 0.0
  %3649 = vmatpush2.msra.mxu0 0.0
  %3650 = vmatprep.subr.mxu0 0.0
  %3651 = vmatpush2.msra.mxu0 0.0
  %3652 = vmatprep.subr.mxu0 0.0
  %3653 = vmatpush2.msra.mxu0 0.0
  %3654 = vmatprep.subr.mxu0 0.0
  %3655 = vmatpush2.msra.mxu0 0.0
  %3656 = vmatprep.subr.mxu0 0.0
  %3657 = vmatpush2.msra.mxu0 0.0
  %3658 = vmatprep.subr.mxu0 0.0
  %3659 = vmatpush2.msra.mxu0 0.0
  %3660 = vmatprep.subr.mxu0 0.0
  %3661 = vmatpush2.msra.mxu0 0.0
  %3662 = vmatprep.subr.mxu0 0.0
  %3663 = vmatpush2.msra.mxu0 0.0
  %3664 = vmatprep.subr.mxu0 0.0
  %3665 = vmatpush2.msra.mxu0 0.0
  %3666 = vmatprep.subr.mxu0 0.0
  %3667 = vmatpush2.msra.mxu0 0.0
  %3668 = vmatprep.subr.mxu0 0.0
  %3669 = vmatpush2.msra.mxu0 0.0
  %3670 = vmatprep.mubr.f32.mxu0 0.0
  %3671 = vmatmul.mubr.f32.gmra.mxu0 %v3601
  %v3672 = vpop.f32.mrf.mxu0
  %v3673 = vadd.f32 %v3598, %v3672
  %v3674 = vpop.f32.mrf.mxu0
  %3675 = vmatprep.mubr.f32.mxu0 0.0
  %3676 = vmatmul.mubr.f32.gmra.mxu0 %v3604
  %v3677 = vpop.f32.mrf.mxu0
  %v3678 = vadd.f32 %v3598, %v3677
  %v3679 = vpop.f32.mrf.mxu0
  %3680 = vdwg.mxu0
  %v3681 = vmul.f32 %v3673, %v3673
  %v3682 = vmul.f32 %v3678, %v3678
  %v3683 = vmul.f32 %v3673, %v3681
  %v3684 = vmul.f32 %v3678, %v3682
  %v3685 = vmul.f32 %v3683, 0.044715
  %v3686 = vmul.f32 %v3684, 0.044715
  %v3687 = vadd.f32 %v3673, %v3685
  %v3688 = vadd.f32 %v3678, %v3686
  %v3689 = vmul.f32 %v3687, 0.7978846
  %v3690 = vmul.f32 %v3688, 0.7978846
  %v3691 = vtanh.pop %v3689
  %v3692 = vtanh.pop %v3690
  %v3693 = vadd.f32 %v3691, 1.0
  %v3694 = vadd.f32 %v3692, 1.0
  %v3695 = vmul.f32 %v3693, 0.5
  %v3696 = vmul.f32 %v3694, 0.5
  %v3697 = vmul.f32 %v3673, %v3695
  %v3698 = vmul.f32 %v3678, %v3696
  %s3699 = scalar_lea.vmem %s12, 64
  %v3700 = vld [vmem:[%s3699] sm:$0xff]
  %v3701 = vld [vmem:[%s3699 + $0x8] sm:$0xff]
  %v3702 = vld [vmem:[%s3699 + $0x10] sm:$0xff]
  %v3703 = vld [vmem:[%s3699 + $0x18] sm:$0xff]
  %v3704 = vld [vmem:[%s3699 + $0x20] sm:$0xff]
  %v3705 = vld [vmem:[%s3699 + $0x28] sm:$0xff]
  %v3706 = vld [vmem:[%s3699 + $0x30] sm:$0xff]
  %v3707 = vld [vmem:[%s3699 + $0x38] sm:$0xff]
  %s3708 = scalar_lea.vmem %s13, 1
  %v3709 = vld [vmem:[%s3708] sm:$0x1]
  %v3711 = vlaneseq
  %v3712 = vshrl.u32 %v3711, 7
  %v3713 = vsub.s32 0, %v3712
  %v3714 = vrot.slane %v3709, %v3713
  %v3717 = vsel %vm1875, %v3697, 0
  %v3720 = vsel %vm1875, %v3698, 0
  %3722 = vmatprep.subr.mxu0 0.0
  %3723 = vmatpush1.msra.mxu0 0.0
  %3724 = vmatprep.subr.mxu0 0.0
  %3725 = vmatpush1.msra.mxu0 0.0
  %3726 = vmatprep.subr.mxu0 0.0
  %3727 = vmatpush1.msra.mxu0 0.0
  %3728 = vmatprep.subr.mxu0 0.0
  %3729 = vmatpush1.msra.mxu0 0.0
  %3730 = vmatprep.subr.mxu0 0.0
  %3731 = vmatpush1.msra.mxu0 0.0
  %3732 = vmatprep.subr.mxu0 0.0
  %3733 = vmatpush1.msra.mxu0 0.0
  %3734 = vmatprep.subr.mxu0 0.0
  %3735 = vmatpush1.msra.mxu0 0.0
  %3736 = vmatprep.subr.mxu0 0.0
  %3737 = vmatpush1.msra.mxu0 0.0
  %3738 = vmatprep.subr.mxu0 0.0
  %3739 = vmatpush1.msra.mxu0 %v3707
  %3740 = vmatprep.subr.mxu0 0.0
  %3741 = vmatpush1.msra.mxu0 %v3706
  %3742 = vmatprep.subr.mxu0 0.0
  %3743 = vmatpush1.msra.mxu0 %v3705
  %3744 = vmatprep.subr.mxu0 0.0
  %3745 = vmatpush1.msra.mxu0 %v3704
  %3746 = vmatprep.subr.mxu0 0.0
  %3747 = vmatpush1.msra.mxu0 %v3703
  %3748 = vmatprep.subr.mxu0 0.0
  %3749 = vmatpush1.msra.mxu0 %v3702
  %3750 = vmatprep.subr.mxu0 0.0
  %3751 = vmatpush1.msra.mxu0 %v3701
  %3752 = vmatprep.subr.mxu0 0.0
  %3753 = vmatpush1.msra.mxu0 %v3700
  %3754 = vmatprep.subr.mxu0 0.0
  %3755 = vmatpush2.msra.mxu0 0.0
  %3756 = vmatprep.subr.mxu0 0.0
  %3757 = vmatpush2.msra.mxu0 0.0
  %3758 = vmatprep.subr.mxu0 0.0
  %3759 = vmatpush2.msra.mxu0 0.0
  %3760 = vmatprep.subr.mxu0 0.0
  %3761 = vmatpush2.msra.mxu0 0.0
  %3762 = vmatprep.subr.mxu0 0.0
  %3763 = vmatpush2.msra.mxu0 0.0
  %3764 = vmatprep.subr.mxu0 0.0
  %3765 = vmatpush2.msra.mxu0 0.0
  %3766 = vmatprep.subr.mxu0 0.0
  %3767 = vmatpush2.msra.mxu0 0.0
  %3768 = vmatprep.subr.mxu0 0.0
  %3769 = vmatpush2.msra.mxu0 0.0
  %3770 = vmatprep.subr.mxu0 0.0
  %3771 = vmatpush2.msra.mxu0 0.0
  %3772 = vmatprep.subr.mxu0 0.0
  %3773 = vmatpush2.msra.mxu0 0.0
  %3774 = vmatprep.subr.mxu0 0.0
  %3775 = vmatpush2.msra.mxu0 0.0
  %3776 = vmatprep.subr.mxu0 0.0
  %3777 = vmatpush2.msra.mxu0 0.0
  %3778 = vmatprep.subr.mxu0 0.0
  %3779 = vmatpush2.msra.mxu0 0.0
  %3780 = vmatprep.subr.mxu0 0.0
  %3781 = vmatpush2.msra.mxu0 0.0
  %3782 = vmatprep.subr.mxu0 0.0
  %3783 = vmatpush2.msra.mxu0 0.0
  %3784 = vmatprep.subr.mxu0 0.0
  %3785 = vmatpush2.msra.mxu0 0.0
  %3786 = vmatprep.mubr.f32.mxu0 0.0
  %3787 = vmatmul.mubr.f32.gmra.mxu0 %v3717
  %v3788 = vpop.f32.mrf.mxu0
  %v3789 = vadd.f32 %v3714, %v3788
  %v3790 = vpop.f32.mrf.mxu0
  %3791 = vmatprep.mubr.f32.mxu0 0.0
  %3792 = vmatmul.mubr.f32.gmra.mxu0 %v3720
  %v3793 = vpop.f32.mrf.mxu0
  %v3794 = vadd.f32 %v3714, %v3793
  %v3795 = vpop.f32.mrf.mxu0
  %3796 = vdwg.mxu0
  %v3797 = vadd.f32 %v3585, %v3789
  %v3798 = vadd.f32 %v3586, %v3794
  %s3799 = scalar_lea.vmem %s14, 1
  %v3800 = vld [vmem:[%s3799] sm:$0x1]
  %s3801 = scalar_lea.vmem %s15, 1
  %v3802 = vld [vmem:[%s3801] sm:$0x1]
  %v3803 = vsel %vm69, %v3797, 0.0
  %3804 = vadd.xlane.f32.xlu0 %v3803
  %v3805 = vpop.xlane.xlu0 %3804
  %v3806 = vsel %vm69, %v3798, 0.0
  %3807 = vadd.xlane.f32.xlu0 %v3806
  %v3808 = vpop.xlane.xlu0 %3807
  %v3809 = vmul.f32 %v3805, %v76
  %v3810 = vmul.f32 %v3808, %v76
  %v3811 = vsub.f32 %v3797, %v3809
  %v3812 = vsub.f32 %v3798, %v3810
  %v3813 = vmul.f32 %v3811, %v3811
  %v3814 = vmul.f32 %v3812, %v3812
  %v3815 = vsel %vm69, %v3813, 0.0
  %3816 = vadd.xlane.f32.xlu0 %v3815
  %v3817 = vpop.xlane.xlu0 %3816
  %v3818 = vsel %vm69, %v3814, 0.0
  %3819 = vadd.xlane.f32.xlu0 %v3818
  %v3820 = vpop.xlane.xlu0 %3819
  %v3821 = vmul.f32 %v3817, %v76
  %v3822 = vmul.f32 %v3820, %v76
  %v3823 = vadd.f32 %v3821, 1e-05
  %v3824 = vadd.f32 %v3822, 1e-05
  %v3825 = vrsqrt.pop %v3823
  %v3826 = vrsqrt.pop %v3824
  %v3827 = vmul.f32 %v3811, %v3825
  %v3828 = vmul.f32 %v3812, %v3826
  %v3830 = vlaneseq
  %v3831 = vshrl.u32 %v3830, 7
  %v3832 = vsub.s32 0, %v3831
  %v3833 = vrot.slane %v3800, %v3832
  %v3835 = vmul.f32 %v3827, %v3833
  %v3836 = vmul.f32 %v3828, %v3833
  %v3838 = vlaneseq
  %v3839 = vshrl.u32 %v3838, 7
  %v3840 = vsub.s32 0, %v3839
  %v3841 = vrot.slane %v3802, %v3840
  %v3843 = vadd.f32 %v3835, %v3841
  %v3844 = vadd.f32 %v3836, %v3841
  %v3845 = vld [vmem:[%s16] sm:$0xff]
  %v3846 = vld [vmem:[%s16 + $0x8] sm:$0xff]
  %v3847 = vld [vmem:[%s16 + $0x10] sm:$0xff]
  %v3848 = vld [vmem:[%s16 + $0x18] sm:$0xff]
  %v3849 = vld [vmem:[%s16 + $0x20] sm:$0xff]
  %v3850 = vld [vmem:[%s16 + $0x28] sm:$0xff]
  %v3851 = vld [vmem:[%s16 + $0x30] sm:$0xff]
  %v3852 = vld [vmem:[%s16 + $0x38] sm:$0xff]
  %v3853 = vld [vmem:[%s17] sm:$0x1]
  %v3854 = vld [vmem:[%s17 + $0x1] sm:$0x1]
  %v3857 = vlaneseq
  %v3858 = vshrl.u32 %v3857, 7
  %v3859 = vsub.s32 0, %v3858
  %v3860 = vrot.slane %v3853, %v3859
  %v3861 = vlaneseq
  %v3862 = vshrl.u32 %v3861, 7
  %v3863 = vsub.s32 0, %v3862
  %v3864 = vrot.slane %v3854, %v3863
  %v3869 = vrot.slane %v3844, 7
  %vm3870 = vcmask 1041409
  %v3871 = vsel %vm3870, %v3869, %v3843
  %v3872 = vsel %vm69, %v3871, 0
  %3874 = vmatprep.subr.mxu0 0.0
  %3875 = vmatpush1.msra.mxu0 0.0
  %3876 = vmatprep.subr.mxu0 0.0
  %3877 = vmatpush1.msra.mxu0 0.0
  %3878 = vmatprep.subr.mxu0 0.0
  %3879 = vmatpush1.msra.mxu0 0.0
  %3880 = vmatprep.subr.mxu0 0.0
  %3881 = vmatpush1.msra.mxu0 0.0
  %3882 = vmatprep.subr.mxu0 0.0
  %3883 = vmatpush1.msra.mxu0 0.0
  %3884 = vmatprep.subr.mxu0 0.0
  %3885 = vmatpush1.msra.mxu0 0.0
  %3886 = vmatprep.subr.mxu0 0.0
  %3887 = vmatpush1.msra.mxu0 0.0
  %3888 = vmatprep.subr.mxu0 0.0
  %3889 = vmatpush1.msra.mxu0 0.0
  %3890 = vmatprep.subr.mxu0 0.0
  %3891 = vmatpush1.msra.mxu0 0.0
  %3892 = vmatprep.subr.mxu0 0.0
  %3893 = vmatpush1.msra.mxu0 0.0
  %3894 = vmatprep.subr.mxu0 0.0
  %3895 = vmatpush1.msra.mxu0 0.0
  %3896 = vmatprep.subr.mxu0 0.0
  %3897 = vmatpush1.msra.mxu0 0.0
  %3898 = vmatprep.subr.mxu0 0.0
  %3899 = vmatpush1.msra.mxu0 %v3848
  %3900 = vmatprep.subr.mxu0 0.0
  %3901 = vmatpush1.msra.mxu0 %v3847
  %3902 = vmatprep.subr.mxu0 0.0
  %3903 = vmatpush1.msra.mxu0 %v3846
  %3904 = vmatprep.subr.mxu0 0.0
  %3905 = vmatpush1.msra.mxu0 %v3845
  %3906 = vmatprep.subr.mxu0 0.0
  %3907 = vmatpush2.msra.mxu0 0.0
  %3908 = vmatprep.subr.mxu0 0.0
  %3909 = vmatpush2.msra.mxu0 0.0
  %3910 = vmatprep.subr.mxu0 0.0
  %3911 = vmatpush2.msra.mxu0 0.0
  %3912 = vmatprep.subr.mxu0 0.0
  %3913 = vmatpush2.msra.mxu0 0.0
  %3914 = vmatprep.subr.mxu0 0.0
  %3915 = vmatpush2.msra.mxu0 0.0
  %3916 = vmatprep.subr.mxu0 0.0
  %3917 = vmatpush2.msra.mxu0 0.0
  %3918 = vmatprep.subr.mxu0 0.0
  %3919 = vmatpush2.msra.mxu0 0.0
  %3920 = vmatprep.subr.mxu0 0.0
  %3921 = vmatpush2.msra.mxu0 0.0
  %3922 = vmatprep.subr.mxu0 0.0
  %3923 = vmatpush2.msra.mxu0 0.0
  %3924 = vmatprep.subr.mxu0 0.0
  %3925 = vmatpush2.msra.mxu0 0.0
  %3926 = vmatprep.subr.mxu0 0.0
  %3927 = vmatpush2.msra.mxu0 0.0
  %3928 = vmatprep.subr.mxu0 0.0
  %3929 = vmatpush2.msra.mxu0 0.0
  %3930 = vmatprep.subr.mxu0 0.0
  %3931 = vmatpush2.msra.mxu0 0.0
  %3932 = vmatprep.subr.mxu0 0.0
  %3933 = vmatpush2.msra.mxu0 0.0
  %3934 = vmatprep.subr.mxu0 0.0
  %3935 = vmatpush2.msra.mxu0 0.0
  %3936 = vmatprep.subr.mxu0 0.0
  %3937 = vmatpush2.msra.mxu0 0.0
  %3938 = vmatprep.mubr.f32.mxu0 0.0
  %3939 = vmatmul.mubr.f32.gmra.mxu0 %v3872
  %v3940 = vpop.f32.mrf.mxu0
  %v3941 = vadd.f32 %v3860, %v3940
  %v3942 = vpop.f32.mrf.mxu0
  %3943 = vdwg.mxu0
  %3944 = vmatprep.subr.mxu0 0.0
  %3945 = vmatpush1.msra.mxu0 0.0
  %3946 = vmatprep.subr.mxu0 0.0
  %3947 = vmatpush1.msra.mxu0 0.0
  %3948 = vmatprep.subr.mxu0 0.0
  %3949 = vmatpush1.msra.mxu0 0.0
  %3950 = vmatprep.subr.mxu0 0.0
  %3951 = vmatpush1.msra.mxu0 0.0
  %3952 = vmatprep.subr.mxu0 0.0
  %3953 = vmatpush1.msra.mxu0 0.0
  %3954 = vmatprep.subr.mxu0 0.0
  %3955 = vmatpush1.msra.mxu0 0.0
  %3956 = vmatprep.subr.mxu0 0.0
  %3957 = vmatpush1.msra.mxu0 0.0
  %3958 = vmatprep.subr.mxu0 0.0
  %3959 = vmatpush1.msra.mxu0 0.0
  %3960 = vmatprep.subr.mxu0 0.0
  %3961 = vmatpush1.msra.mxu0 0.0
  %3962 = vmatprep.subr.mxu0 0.0
  %3963 = vmatpush1.msra.mxu0 0.0
  %3964 = vmatprep.subr.mxu0 0.0
  %3965 = vmatpush1.msra.mxu0 0.0
  %3966 = vmatprep.subr.mxu0 0.0
  %3967 = vmatpush1.msra.mxu0 0.0
  %3968 = vmatprep.subr.mxu0 0.0
  %3969 = vmatpush1.msra.mxu0 %v3852
  %3970 = vmatprep.subr.mxu0 0.0
  %3971 = vmatpush1.msra.mxu0 %v3851
  %3972 = vmatprep.subr.mxu0 0.0
  %3973 = vmatpush1.msra.mxu0 %v3850
  %3974 = vmatprep.subr.mxu0 0.0
  %3975 = vmatpush1.msra.mxu0 %v3849
  %3976 = vmatprep.subr.mxu0 0.0
  %3977 = vmatpush2.msra.mxu0 0.0
  %3978 = vmatprep.subr.mxu0 0.0
  %3979 = vmatpush2.msra.mxu0 0.0
  %3980 = vmatprep.subr.mxu0 0.0
  %3981 = vmatpush2.msra.mxu0 0.0
  %3982 = vmatprep.subr.mxu0 0.0
  %3983 = vmatpush2.msra.mxu0 0.0
  %3984 = vmatprep.subr.mxu0 0.0
  %3985 = vmatpush2.msra.mxu0 0.0
  %3986 = vmatprep.subr.mxu0 0.0
  %3987 = vmatpush2.msra.mxu0 0.0
  %3988 = vmatprep.subr.mxu0 0.0
  %3989 = vmatpush2.msra.mxu0 0.0
  %3990 = vmatprep.subr.mxu0 0.0
  %3991 = vmatpush2.msra.mxu0 0.0
  %3992 = vmatprep.subr.mxu0 0.0
  %3993 = vmatpush2.msra.mxu0 0.0
  %3994 = vmatprep.subr.mxu0 0.0
  %3995 = vmatpush2.msra.mxu0 0.0
  %3996 = vmatprep.subr.mxu0 0.0
  %3997 = vmatpush2.msra.mxu0 0.0
  %3998 = vmatprep.subr.mxu0 0.0
  %3999 = vmatpush2.msra.mxu0 0.0
  %4000 = vmatprep.subr.mxu0 0.0
  %4001 = vmatpush2.msra.mxu0 0.0
  %4002 = vmatprep.subr.mxu0 0.0
  %4003 = vmatpush2.msra.mxu0 0.0
  %4004 = vmatprep.subr.mxu0 0.0
  %4005 = vmatpush2.msra.mxu0 0.0
  %4006 = vmatprep.subr.mxu0 0.0
  %4007 = vmatpush2.msra.mxu0 0.0
  %4008 = vmatprep.mubr.f32.mxu0 0.0
  %4009 = vmatmul.mubr.f32.gmra.mxu0 %v3872
  %v4010 = vpop.f32.mrf.mxu0
  %v4011 = vadd.f32 %v3864, %v4010
  %v4012 = vpop.f32.mrf.mxu0
  %4013 = vdwg.mxu0
  %v4014 = vtanh.pop %v3941
  %v4015 = vtanh.pop %v4011
  %v4016 = vld [vmem:[%s18] sm:$0xff]
  %v4017 = vld [vmem:[%s18 + $0x8] sm:$0xff]
  %v4018 = vld [vmem:[%s18 + $0x10] sm:$0xff]
  %v4019 = vld [vmem:[%s18 + $0x18] sm:$0xff]
  %v4020 = vld [vmem:[%s18 + $0x20] sm:$0xff]
  %v4021 = vld [vmem:[%s18 + $0x28] sm:$0xff]
  %v4022 = vld [vmem:[%s18 + $0x30] sm:$0xff]
  %v4023 = vld [vmem:[%s18 + $0x38] sm:$0xff]
  %v4024 = vld [vmem:[%s19] sm:$0x1]
  %v4025 = vld [vmem:[%s19 + $0x1] sm:$0x1]
  %v4028 = vlaneseq
  %v4029 = vshrl.u32 %v4028, 7
  %v4030 = vsub.s32 0, %v4029
  %v4031 = vrot.slane %v4024, %v4030
  %v4032 = vlaneseq
  %v4033 = vshrl.u32 %v4032, 7
  %v4034 = vsub.s32 0, %v4033
  %v4035 = vrot.slane %v4025, %v4034
  %v4039 = vsel %vm69, %v4014, 0
  %4041 = vmatprep.subr.mxu0 0.0
  %4042 = vmatpush1.msra.mxu0 0.0
  %4043 = vmatprep.subr.mxu0 0.0
  %4044 = vmatpush1.msra.mxu0 0.0
  %4045 = vmatprep.subr.mxu0 0.0
  %4046 = vmatpush1.msra.mxu0 0.0
  %4047 = vmatprep.subr.mxu0 0.0
  %4048 = vmatpush1.msra.mxu0 0.0
  %4049 = vmatprep.subr.mxu0 0.0
  %4050 = vmatpush1.msra.mxu0 0.0
  %4051 = vmatprep.subr.mxu0 0.0
  %4052 = vmatpush1.msra.mxu0 0.0
  %4053 = vmatprep.subr.mxu0 0.0
  %4054 = vmatpush1.msra.mxu0 0.0
  %4055 = vmatprep.subr.mxu0 0.0
  %4056 = vmatpush1.msra.mxu0 0.0
  %4057 = vmatprep.subr.mxu0 0.0
  %4058 = vmatpush1.msra.mxu0 0.0
  %4059 = vmatprep.subr.mxu0 0.0
  %4060 = vmatpush1.msra.mxu0 0.0
  %4061 = vmatprep.subr.mxu0 0.0
  %4062 = vmatpush1.msra.mxu0 0.0
  %4063 = vmatprep.subr.mxu0 0.0
  %4064 = vmatpush1.msra.mxu0 0.0
  %4065 = vmatprep.subr.mxu0 0.0
  %4066 = vmatpush1.msra.mxu0 %v4019
  %4067 = vmatprep.subr.mxu0 0.0
  %4068 = vmatpush1.msra.mxu0 %v4018
  %4069 = vmatprep.subr.mxu0 0.0
  %4070 = vmatpush1.msra.mxu0 %v4017
  %4071 = vmatprep.subr.mxu0 0.0
  %4072 = vmatpush1.msra.mxu0 %v4016
  %4073 = vmatprep.subr.mxu0 0.0
  %4074 = vmatpush2.msra.mxu0 0.0
  %4075 = vmatprep.subr.mxu0 0.0
  %4076 = vmatpush2.msra.mxu0 0.0
  %4077 = vmatprep.subr.mxu0 0.0
  %4078 = vmatpush2.msra.mxu0 0.0
  %4079 = vmatprep.subr.mxu0 0.0
  %4080 = vmatpush2.msra.mxu0 0.0
  %4081 = vmatprep.subr.mxu0 0.0
  %4082 = vmatpush2.msra.mxu0 0.0
  %4083 = vmatprep.subr.mxu0 0.0
  %4084 = vmatpush2.msra.mxu0 0.0
  %4085 = vmatprep.subr.mxu0 0.0
  %4086 = vmatpush2.msra.mxu0 0.0
  %4087 = vmatprep.subr.mxu0 0.0
  %4088 = vmatpush2.msra.mxu0 0.0
  %4089 = vmatprep.subr.mxu0 0.0
  %4090 = vmatpush2.msra.mxu0 0.0
  %4091 = vmatprep.subr.mxu0 0.0
  %4092 = vmatpush2.msra.mxu0 0.0
  %4093 = vmatprep.subr.mxu0 0.0
  %4094 = vmatpush2.msra.mxu0 0.0
  %4095 = vmatprep.subr.mxu0 0.0
  %4096 = vmatpush2.msra.mxu0 0.0
  %4097 = vmatprep.subr.mxu0 0.0
  %4098 = vmatpush2.msra.mxu0 0.0
  %4099 = vmatprep.subr.mxu0 0.0
  %4100 = vmatpush2.msra.mxu0 0.0
  %4101 = vmatprep.subr.mxu0 0.0
  %4102 = vmatpush2.msra.mxu0 0.0
  %4103 = vmatprep.subr.mxu0 0.0
  %4104 = vmatpush2.msra.mxu0 0.0
  %4105 = vmatprep.mubr.f32.mxu0 0.0
  %4106 = vmatmul.mubr.f32.gmra.mxu0 %v4039
  %v4107 = vpop.f32.mrf.mxu0
  %v4108 = vadd.f32 %v4031, %v4107
  %v4109 = vpop.f32.mrf.mxu0
  %4110 = vdwg.mxu0
  %v4112 = vsel %vm69, %v4015, 0
  %4114 = vmatprep.subr.mxu0 0.0
  %4115 = vmatpush1.msra.mxu0 0.0
  %4116 = vmatprep.subr.mxu0 0.0
  %4117 = vmatpush1.msra.mxu0 0.0
  %4118 = vmatprep.subr.mxu0 0.0
  %4119 = vmatpush1.msra.mxu0 0.0
  %4120 = vmatprep.subr.mxu0 0.0
  %4121 = vmatpush1.msra.mxu0 0.0
  %4122 = vmatprep.subr.mxu0 0.0
  %4123 = vmatpush1.msra.mxu0 0.0
  %4124 = vmatprep.subr.mxu0 0.0
  %4125 = vmatpush1.msra.mxu0 0.0
  %4126 = vmatprep.subr.mxu0 0.0
  %4127 = vmatpush1.msra.mxu0 0.0
  %4128 = vmatprep.subr.mxu0 0.0
  %4129 = vmatpush1.msra.mxu0 0.0
  %4130 = vmatprep.subr.mxu0 0.0
  %4131 = vmatpush1.msra.mxu0 0.0
  %4132 = vmatprep.subr.mxu0 0.0
  %4133 = vmatpush1.msra.mxu0 0.0
  %4134 = vmatprep.subr.mxu0 0.0
  %4135 = vmatpush1.msra.mxu0 0.0
  %4136 = vmatprep.subr.mxu0 0.0
  %4137 = vmatpush1.msra.mxu0 0.0
  %4138 = vmatprep.subr.mxu0 0.0
  %4139 = vmatpush1.msra.mxu0 %v4023
  %4140 = vmatprep.subr.mxu0 0.0
  %4141 = vmatpush1.msra.mxu0 %v4022
  %4142 = vmatprep.subr.mxu0 0.0
  %4143 = vmatpush1.msra.mxu0 %v4021
  %4144 = vmatprep.subr.mxu0 0.0
  %4145 = vmatpush1.msra.mxu0 %v4020
  %4146 = vmatprep.subr.mxu0 0.0
  %4147 = vmatpush2.msra.mxu0 0.0
  %4148 = vmatprep.subr.mxu0 0.0
  %4149 = vmatpush2.msra.mxu0 0.0
  %4150 = vmatprep.subr.mxu0 0.0
  %4151 = vmatpush2.msra.mxu0 0.0
  %4152 = vmatprep.subr.mxu0 0.0
  %4153 = vmatpush2.msra.mxu0 0.0
  %4154 = vmatprep.subr.mxu0 0.0
  %4155 = vmatpush2.msra.mxu0 0.0
  %4156 = vmatprep.subr.mxu0 0.0
  %4157 = vmatpush2.msra.mxu0 0.0
  %4158 = vmatprep.subr.mxu0 0.0
  %4159 = vmatpush2.msra.mxu0 0.0
  %4160 = vmatprep.subr.mxu0 0.0
  %4161 = vmatpush2.msra.mxu0 0.0
  %4162 = vmatprep.subr.mxu0 0.0
  %4163 = vmatpush2.msra.mxu0 0.0
  %4164 = vmatprep.subr.mxu0 0.0
  %4165 = vmatpush2.msra.mxu0 0.0
  %4166 = vmatprep.subr.mxu0 0.0
  %4167 = vmatpush2.msra.mxu0 0.0
  %4168 = vmatprep.subr.mxu0 0.0
  %4169 = vmatpush2.msra.mxu0 0.0
  %4170 = vmatprep.subr.mxu0 0.0
  %4171 = vmatpush2.msra.mxu0 0.0
  %4172 = vmatprep.subr.mxu0 0.0
  %4173 = vmatpush2.msra.mxu0 0.0
  %4174 = vmatprep.subr.mxu0 0.0
  %4175 = vmatpush2.msra.mxu0 0.0
  %4176 = vmatprep.subr.mxu0 0.0
  %4177 = vmatpush2.msra.mxu0 0.0
  %4178 = vmatprep.mubr.f32.mxu0 0.0
  %4179 = vmatmul.mubr.f32.gmra.mxu0 %v4112
  %v4180 = vpop.f32.mrf.mxu0
  %v4181 = vadd.f32 %v4035, %v4180
  %v4182 = vpop.f32.mrf.mxu0
  %4183 = vdwg.mxu0
  %vm4184 = vcmask 17408
  %4185 = vst.msk [vmem:[%s20] sm:$0x3] %vm4184, %v4108
  %4186 = vst.msk [vmem:[%s20 + $0x2] sm:$0x3] %vm4184, %v4181
  // Predicated region
  $region82: #{roberta_merged_forward.1} parent=0 // pred_check
    _
  $region83: #{roberta_merged_forward.1} parent=0 // pred_check_branch
    %4188 = sbr.rel (0) target = $region85
  $region84: #{roberta_merged_forward.1} parent=0 // pred_region
    _
  $region85: #{roberta_merged_forward.1} parent=0 // pred_fallthru
    _
  // Predicated region
  $region86: #{roberta_merged_forward.1} parent=0 // pred_check
    _
  $region87: #{roberta_merged_forward.1} parent=0 // pred_check_branch
    %4190 = sbr.rel (0) target = $region89
  $region88: #{roberta_merged_forward.1} parent=0 // pred_region
    _
  $region89: #{roberta_merged_forward.1} parent=0 // pred_fallthru
    _

</llo_original>
